<compile_context>
chip_gen: v7x
topology: tpu7x:2x2x1
jax: 0.10.0
libtpu: 0.0.40
codegen_flags: <defaults>
</compile_context>

<pallas_src>
import math
from functools import partial

import jax
import jax.numpy as jnp
import numpy as np
from jax import lax
from jax.experimental import pallas as pl
from jax.experimental.pallas import tpu as pltpu

DILATIONS = (1, 2, 4)
KERNEL_SIZE = 7


# ----------------------------------------------------------------------------- kernel
def _dilated_cnn_kernel(
    x_ref,                                   # (Bb, T, C)           bf16
    wp_ref, bp_ref,                          # proj (BN1 folded)    (C,S) bf16 / (1,S) f32
    cw_ref, cb_ref,                          # convs (BN folded)    (nd,K,S,S) bf16 / (nd,1,S) f32
    wf_ref,                                  # 1x1 fusion           (nd,S,S) bf16 (bias -> b1)
    w1_ref, b1_ref,                          # classifier (1/T folded) (S,H) bf16 / (1,H) f32
    w2_ref, b2_ref,                          # classifier           (H,NCp) bf16 / (1,NCp) f32
    out_ref,                                 # (Bb, NCp) f32        (grid dim squeezed)
    hp_ref,                                  # VMEM scratch (Bb, T + 2*max_pad, S) bf16
    *, t_valid, dilations, kernel_size,
):
    Bb, T, C = x_ref.shape
    S = wp_ref.shape[1]
    K = kernel_size
    max_pad = (K - 1) * max(dilations) // 2

    # ---- input projection + folded BatchNorm1d: one (Bb*T, C) @ (C, S) matmul ----
    xf = x_ref[...].reshape(Bb * T, C)
    hf = jnp.dot(xf, wp_ref[...], preferred_element_type=jnp.float32) + bp_ref[...]
    if t_valid < T:  # zero padded time rows so they behave like conv zero-padding
        tmask = (lax.broadcasted_iota(jnp.int32, (T, 1), 0) < t_valid).astype(jnp.float32)
        hf = (hf.reshape(Bb, T, S) * tmask).reshape(Bb * T, S)
    h_bf = hf.astype(jnp.bfloat16).reshape(Bb, T, S)

    # ---- single max-padded activation buffer in VMEM scratch (written once/step) ----
    zpad = jnp.zeros((Bb, max_pad, S), jnp.bfloat16)
    hp_ref[:, :max_pad, :] = zpad
    hp_ref[:, max_pad + T:, :] = zpad
    hp_ref[:, max_pad:max_pad + T, :] = h_bf

    # ---- dilated blocks: per-tap matmul accumulation straight from the padded buffer,
    #      fusion 1x1 conv accumulated per dilation (no concats, no im2col stack) ----
    fused = jnp.zeros((Bb * T, S), jnp.float32)
    for di, d in enumerate(dilations):
        base = max_pad - (K - 1) * d // 2
        conv = jnp.zeros((Bb * T, S), jnp.float32)
        for k in range(K):
            off = base + k * d                                        # static offset
            tap = hp_ref[:, off:off + T, :].reshape(Bb * T, S)        # bf16 slab
            conv = conv + jnp.dot(tap, cw_ref[di, k],
                                  preferred_element_type=jnp.float32)
        out_di = jnp.maximum(conv + cb_ref[di], 0.0) + hf             # ReLU(BN-folded) + residual
        fused = fused + jnp.dot(out_di.astype(jnp.bfloat16), wf_ref[di],
                                preferred_element_type=jnp.float32)

    # ---- AdaptiveAvgPool1d(1) -> Linear -> ReLU -> Linear (1/T, fusion bias folded) ----
    fused = fused.reshape(Bb, T, S)
    if t_valid < T:
        fused = fused * tmask
    pooled = jnp.sum(fused, axis=1)                                   # (Bb, S)
    hid = jnp.maximum(
        jnp.dot(pooled.astype(jnp.bfloat16), w1_ref[...],
                preferred_element_type=jnp.float32) + b1_ref[...], 0.0)
    logits = jnp.dot(hid.astype(jnp.bfloat16), w2_ref[...],
                     preferred_element_type=jnp.float32) + b2_ref[...]
    out_ref[...] = logits


# ----------------------------------------------------------------------------- wrapper
def _device_kind():
    try:
        return jax.devices()[0].device_kind.lower()
    except Exception:
        return ""


def _pick_block_b(B, T, C, S, n_dil=len(DILATIONS), K=KERNEL_SIZE):
    """VMEM- and generation-aware rows-per-step.
    v7x (2 TCs, 64 MiB VMEM): smaller per-step budget, prefer an even grid.
    v5e/v6e (1 TC): take the largest block that fits; nb == 1 is fine."""
    kind = _device_kind()
    is_v7 = "v7" in kind
    budget = (24 << 20) if is_v7 else (64 << 20)
    max_pad = (K - 1) * max(DILATIONS) // 2
    # per-batch-row bytes: double-buffered bf16 input block + bf16 padded scratch
    # + ~8 live f32 (T, S) temporaries (hf / conv / branch / fused)
    per_row = 2 * T * C * 2 + (T + 2 * max_pad) * S * 2 + 8 * T * S * 4
    bb_cap = max(1, budget // max(per_row, 1))
    divisors = [d for d in range(B, 0, -1) if B % d == 0]
    if is_v7:
        for pred in (lambda nb: nb % 2 == 0, lambda nb: nb >= 2, lambda nb: True):
            for bb in divisors:
                if bb <= bb_cap and pred(B // bb):
                    return bb
    else:
        for bb in divisors:
            if bb <= bb_cap:
                return bb
    return 1


def _prep_kernel_params(kp, t_valid, n_classes):
    """bf16 matmul operands, fold 1/T into w1, pad classifier output columns to a
    full 128-lane store (sliced back off in the wrapper)."""
    NCp = -(-n_classes // 128) * 128
    w2 = jnp.pad(kp["w2"], ((0, 0), (0, NCp - n_classes)))
    b2 = jnp.pad(kp["b2"], ((0, 0), (0, NCp - n_classes)))
    plist = [
        kp["wp"].astype(jnp.bfloat16),
        kp["bp"].astype(jnp.float32),
        kp["cw"].astype(jnp.bfloat16),
        kp["cb"].astype(jnp.float32),
        kp["wf"].astype(jnp.bfloat16),
        (kp["w1"] / float(t_valid)).astype(jnp.bfloat16),
        kp["b1"].astype(jnp.float32),
        w2.astype(jnp.bfloat16),
        b2.astype(jnp.float32),
    ]
    return plist, NCp


@partial(jax.jit, static_argnames=("block_b",))
def dilated_cnn_forward(x, kparams, block_b=None):
    """x: (B, n_channels, T) float32  ->  logits (B, n_classes)."""
    B, C, T = x.shape
    S = kparams["wp"].shape[1]
    NC = kparams["w2"].shape[1]
    max_pad = (KERNEL_SIZE - 1) * max(DILATIONS) // 2

    # channel-last + bf16 halves the HBM->VMEM activation DMA
    x_btc = jnp.transpose(x, (0, 2, 1)).astype(jnp.bfloat16)

    # keep (Bb, T, .) -> (Bb*T, .) reshapes sublane-aligned (bf16 packs 16 rows)
    T_pad = -(-T // 16) * 16
    if T_pad != T:
        x_btc = jnp.pad(x_btc, ((0, 0), (0, T_pad - T), (0, 0)))

    if block_b is None:
        block_b = _pick_block_b(B, T_pad, C, S)
    assert B % block_b == 0
    nb = B // block_b

    plist, NCp = _prep_kernel_params(kparams, T, NC)

    is_v7 = "v7" in _device_kind()
    vmem_limit = (48 << 20) if is_v7 else (100 << 20)

    def const_spec(p):
        return pl.BlockSpec(p.shape, lambda b, _n=p.ndim: (0,) * _n)

    in_specs = [pl.BlockSpec((block_b, T_pad, C), lambda b: (b, 0, 0))]
    in_specs += [const_spec(p) for p in plist]

    kernel = partial(_dilated_cnn_kernel, t_valid=T,
                     dilations=DILATIONS, kernel_size=KERNEL_SIZE)

    out = pl.pallas_call(
        kernel,
        out_shape=jax.ShapeDtypeStruct((nb, block_b, NCp), jnp.float32),
        grid_spec=pltpu.PrefetchScalarGridSpec(
            num_scalar_prefetch=0,
            grid=(nb,),
            in_specs=in_specs,
            out_specs=pl.BlockSpec((pl.Squeezed(), block_b, NCp),
                                   lambda b: (b, 0, 0)),
            scratch_shapes=[
                pltpu.VMEM((block_b, T_pad + 2 * max_pad, S), jnp.bfloat16)],
        ),
        compiler_params=pltpu.CompilerParams(
            dimension_semantics=("parallel",),
            vmem_limit_bytes=vmem_limit,
        ),
    )(x_btc, *plist)
    return out.reshape(B, NCp)[:, :NC]


# ----------------------------------------------------------------------------- params
def _fold_bn(gamma, beta, mean, var, eps=1e-5):
    scale = gamma / jnp.sqrt(var + eps)
    shift = beta - mean * scale
    return scale, shift


def init_params(key, n_channels, n_sources, hidden_size, n_classes,
                kernel_size=KERNEL_SIZE, dilations=DILATIONS):
    s, nd, K = n_sources, len(dilations), kernel_size
    ks = jax.random.split(key, 16)

    def norm(k, shape, scale):
        return scale * jax.random.normal(k, shape, jnp.float32)

    def uni(k, shape, lo, hi):
        return jax.random.uniform(k, shape, jnp.float32, lo, hi)

    p = {}
    # proj: Linear(n_channels, n_sources) stored as (Cin, S)
    p["w_proj"] = norm(ks[0], (n_channels, s), 1.0 / math.sqrt(n_channels))
    p["b_proj"] = norm(ks[1], (1, s), 0.02)
    # eval-mode BatchNorm1d with NON-trivial running stats (exercises the fold)
    p["bn1"] = dict(gamma=uni(ks[2], (s,), 0.6, 1.4), beta=norm(ks[3], (s,), 0.1),
                    mean=norm(ks[4], (s,), 0.2), var=uni(ks[5], (s,), 0.6, 1.4))
    # dilated blocks: Conv1d(S, S, K) weights stored as (n_dil, K, Cin=S, Cout=S)
    p["conv_w"] = norm(ks[6], (nd, K, s, s), 1.0 / math.sqrt(K * s))
    p["conv_b"] = norm(ks[7], (nd, 1, s), 0.02)
    p["cbn"] = dict(gamma=uni(ks[8], (nd, s), 0.6, 1.4), beta=norm(ks[9], (nd, s), 0.1),
                    mean=norm(ks[10], (nd, s), 0.2), var=uni(ks[11], (nd, s), 0.6, 1.4))
    # fusion Conv1d(nd*S, S, 1) stored as per-dilation slabs (nd, S, S)
    p["w_fuse"] = norm(ks[12], (nd, s, s), 1.0 / math.sqrt(nd * s))
    p["b_fuse"] = norm(ks[13], (1, s), 0.02)
    # classifier
    p["w1"] = norm(ks[14], (s, hidden_size), 1.0 / math.sqrt(s))
    p["b1"] = jnp.zeros((1, hidden_size), jnp.float32)
    p["w2"] = norm(ks[15], (hidden_size, n_classes), 1.0 / math.sqrt(hidden_size))
    p["b2"] = jnp.zeros((1, n_classes), jnp.float32)
    return p


def fold_params(p):
    """Fold eval-mode BatchNorms into the adjacent linear/conv weights and fold the
    fusion-conv bias (only consumed through the linear average pool) into b1."""
    kp = {}
    sc1, sh1 = _fold_bn(**p["bn1"])                              # (S,)
    kp["wp"] = p["w_proj"] * sc1[None, :]                        # (C, S)
    kp["bp"] = p["b_proj"] * sc1[None, :] + sh1[None, :]         # (1, S)
    csc, csh = _fold_bn(**p["cbn"])                              # (nd, S)
    kp["cw"] = p["conv_w"] * csc[:, None, None, :]               # (nd, K, S, S)
    kp["cb"] = p["conv_b"] * csc[:, None, :] + csh[:, None, :]   # (nd, 1, S)
    kp["wf"] = p["w_fuse"]                                       # (nd, S, S)
    kp["w1"] = p["w1"]
    kp["b1"] = p["b1"] + p["b_fuse"] @ p["w1"]                   # fusion bias folded
    kp["w2"], kp["b2"] = p["w2"], p["b2"]
    return kp


# ----------------------------------------------------------------------------- reference
def reference_forward(x, p, dilations=DILATIONS, K=KERNEL_SIZE, eps=1e-5):
    """Pure-JAX reference using the RAW (unfolded) BN parameters."""
    def bn(v, st):
        return (v - st["mean"]) / jnp.sqrt(st["var"] + eps) * st["gamma"] + st["beta"]

    B, C, T = x.shape
    S = p["w_proj"].shape[1]
    h = jnp.einsum("bct,cs->bts", x, p["w_proj"]) + p["b_proj"]
    h = bn(h, p["bn1"])
    fused = jnp.zeros((B, T, S), jnp.float32)
    for di, d in enumerate(dilations):
        pad = (K - 1) * d // 2
        hp = jnp.pad(h, ((0, 0), (pad, pad), (0, 0)))
        acc = jnp.zeros((B, T, S), jnp.float32)
        for k in range(K):
            acc = acc + jnp.einsum("bts,so->bto", hp[:, k * d:k * d + T, :],
                                   p["conv_w"][di, k])
        conv = acc + p["conv_b"][di]
        cbn_di = {k_: v[di] for k_, v in p["cbn"].items()}
        o = jnp.maximum(bn(conv, cbn_di), 0.0) + h
        fused = fused + jnp.einsum("bts,so->bto", o, p["w_fuse"][di])
    fused = fused + p["b_fuse"]
    pooled = fused.mean(axis=1)                        # AdaptiveAvgPool1d(1) + Flatten
    hid = jnp.maximum(pooled @ p["w1"] + p["b1"], 0.0)
    return hid @ p["w2"] + p["b2"]


# ----------------------------------------------------------------------------- main
if __name__ == "__main__":
    B, C, T = 4, 16, 32          # batch, n_channels, time (small test config)
    S, H, NC = 8, 16, 5          # n_sources, hidden_size, n_classes

    key = jax.random.PRNGKey(0)
    kx, kparam = jax.random.split(key)
    x = jax.random.normal(kx, (B, C, T), jnp.float32)
    params = init_params(kparam, n_channels=C, n_sources=S, hidden_size=H, n_classes=NC)
    kparams = fold_params(params)

    out = dilated_cnn_forward(x, kparams)
    out = jax.block_until_ready(out)
    assert out.shape == (B, NC)

    ref = reference_forward(x, params)
    # bf16 matmul operands (f32 accumulation / elementwise) -> loosened tolerance
    np.testing.assert_allclose(np.asarray(out), np.asarray(ref), rtol=5e-2, atol=5e-2)

    print("KERNEL_OK")
</pallas_src>

<mosaic_0001>
module attributes {stable_mosaic.version = 11 : i64} {
  func.func @_dilated_cnn_kernel(%arg0: i32, %arg1: memref<4x32x16xbf16, #tpu.memory_space<vmem>>, %arg2: memref<16x8xbf16, #tpu.memory_space<vmem>>, %arg3: memref<1x8xf32, #tpu.memory_space<vmem>>, %arg4: memref<3x7x8x8xbf16, #tpu.memory_space<vmem>>, %arg5: memref<3x1x8xf32, #tpu.memory_space<vmem>>, %arg6: memref<3x8x8xbf16, #tpu.memory_space<vmem>>, %arg7: memref<8x16xbf16, #tpu.memory_space<vmem>>, %arg8: memref<1x16xf32, #tpu.memory_space<vmem>>, %arg9: memref<16x128xbf16, #tpu.memory_space<vmem>>, %arg10: memref<1x128xf32, #tpu.memory_space<vmem>>, %arg11: memref<1x4x128xf32, #tpu.memory_space<vmem>>, %arg12: memref<4x56x8xbf16, #tpu.memory_space<vmem>>) attributes {dimension_semantics = [#tpu.dimension_semantics<parallel>], iteration_bounds = array<i64: 1>, scalar_prefetch = 0 : i64, scratch_operands = 1 : i64, tpu.core_type = #tpu.core_type<tc>, window_params = [{transform_indices = @transform_0, window_bounds = array<i64: 4, 32, 16>}, {pipeline_mode = #tpu.pipeline_mode<synchronous>, transform_indices = @transform_1, window_bounds = array<i64: 16, 8>}, {pipeline_mode = #tpu.pipeline_mode<synchronous>, transform_indices = @transform_2, window_bounds = array<i64: 1, 8>}, {pipeline_mode = #tpu.pipeline_mode<synchronous>, transform_indices = @transform_3, window_bounds = array<i64: 3, 7, 8, 8>}, {pipeline_mode = #tpu.pipeline_mode<synchronous>, transform_indices = @transform_4, window_bounds = array<i64: 3, 1, 8>}, {pipeline_mode = #tpu.pipeline_mode<synchronous>, transform_indices = @transform_5, window_bounds = array<i64: 3, 8, 8>}, {pipeline_mode = #tpu.pipeline_mode<synchronous>, transform_indices = @transform_6, window_bounds = array<i64: 8, 16>}, {pipeline_mode = #tpu.pipeline_mode<synchronous>, transform_indices = @transform_7, window_bounds = array<i64: 1, 16>}, {pipeline_mode = #tpu.pipeline_mode<synchronous>, transform_indices = @transform_8, window_bounds = array<i64: 16, 128>}, {pipeline_mode = #tpu.pipeline_mode<synchronous>, transform_indices = @transform_9, window_bounds = array<i64: 1, 128>}, {transform_indices = @transform_10, window_bounds = array<i64: 1, 4, 128>}]} {
    %c0 = arith.constant 0 : index
    %c0_0 = arith.constant 0 : index
    %c0_1 = arith.constant 0 : index
    %0 = vector.load %arg1[%c0, %c0_0, %c0_1] : memref<4x32x16xbf16, #tpu.memory_space<vmem>>, vector<4x32x16xbf16>
    %1 = vector.shape_cast %0 : vector<4x32x16xbf16> to vector<128x16xbf16>
    %c0_2 = arith.constant 0 : index
    %c0_3 = arith.constant 0 : index
    %2 = vector.load %arg2[%c0_2, %c0_3] : memref<16x8xbf16, #tpu.memory_space<vmem>>, vector<16x8xbf16>
    %cst = arith.constant dense<0.000000e+00> : vector<128x8xf32>
    %3 = tpu.matmul %1, %2, %cst {dimension_numbers = #tpu.dot_dimension_numbers<[1], [0], [0], [1], [0, 0, 1, 1], [], []>} : vector<128x16xbf16>, vector<16x8xbf16>, vector<128x8xf32> -> vector<128x8xf32>
    %c0_4 = arith.constant 0 : index
    %c0_5 = arith.constant 0 : index
    %4 = vector.load %arg3[%c0_4, %c0_5] : memref<1x8xf32, #tpu.memory_space<vmem>>, vector<1x8xf32>
    %5 = vector.broadcast %4 : vector<1x8xf32> to vector<128x8xf32>
    %6 = arith.addf %3, %5 : vector<128x8xf32>
    %7 = arith.truncf %6 : vector<128x8xf32> to vector<128x8xbf16>
    %8 = vector.shape_cast %7 : vector<128x8xbf16> to vector<4x32x8xbf16>
    %cst_6 = arith.constant 0.000000e+00 : bf16
    %9 = vector.broadcast %cst_6 : bf16 to vector<4x12x8xbf16>
    %c0_7 = arith.constant 0 : index
    %c0_8 = arith.constant 0 : index
    %c0_9 = arith.constant 0 : index
    %10 = vector.load %arg12[%c0_7, %c0_8, %c0_9] : memref<4x56x8xbf16, #tpu.memory_space<vmem>>, vector<4x12x8xbf16>
    tpu.vector_store %arg12[%c0_7, %c0_8, %c0_9], %9 {strides = array<i32>} : memref<4x56x8xbf16, #tpu.memory_space<vmem>>, vector<4x12x8xbf16>,
    %c0_10 = arith.constant 0 : index
    %c44 = arith.constant 44 : index
    %c0_11 = arith.constant 0 : index
    %11 = vector.load %arg12[%c0_10, %c44, %c0_11] : memref<4x56x8xbf16, #tpu.memory_space<vmem>>, vector<4x12x8xbf16>
    tpu.vector_store %arg12[%c0_10, %c44, %c0_11], %9 {strides = array<i32>} : memref<4x56x8xbf16, #tpu.memory_space<vmem>>, vector<4x12x8xbf16>,
    %c0_12 = arith.constant 0 : index
    %c12 = arith.constant 12 : index
    %c0_13 = arith.constant 0 : index
    %12 = vector.load %arg12[%c0_12, %c12, %c0_13] : memref<4x56x8xbf16, #tpu.memory_space<vmem>>, vector<4x32x8xbf16>
    tpu.vector_store %arg12[%c0_12, %c12, %c0_13], %8 {strides = array<i32>} : memref<4x56x8xbf16, #tpu.memory_space<vmem>>, vector<4x32x8xbf16>,
    %cst_14 = arith.constant 0.000000e+00 : f32
    %13 = vector.broadcast %cst_14 : f32 to vector<128x8xf32>
    %cst_15 = arith.constant 0.000000e+00 : f32
    %14 = vector.broadcast %cst_15 : f32 to vector<128x8xf32>
    %c0_16 = arith.constant 0 : index
    %c9 = arith.constant 9 : index
    %c0_17 = arith.constant 0 : index
    %15 = vector.load %arg12[%c0_16, %c9, %c0_17] : memref<4x56x8xbf16, #tpu.memory_space<vmem>>, vector<4x32x8xbf16>
    %16 = vector.shape_cast %15 : vector<4x32x8xbf16> to vector<128x8xbf16>
    %c0_18 = arith.constant 0 : index
    %c0_19 = arith.constant 0 : index
    %c0_20 = arith.constant 0 : index
    %c0_21 = arith.constant 0 : index
    %17 = vector.load %arg4[%c0_18, %c0_19, %c0_20, %c0_21] : memref<3x7x8x8xbf16, #tpu.memory_space<vmem>>, vector<1x1x8x8xbf16>
    %18 = vector.shape_cast %17 : vector<1x1x8x8xbf16> to vector<8x8xbf16>
    %cst_22 = arith.constant dense<0.000000e+00> : vector<128x8xf32>
    %19 = tpu.matmul %16, %18, %cst_22 {dimension_numbers = #tpu.dot_dimension_numbers<[1], [0], [0], [1], [0, 0, 1, 1], [], []>} : vector<128x8xbf16>, vector<8x8xbf16>, vector<128x8xf32> -> vector<128x8xf32>
    %20 = arith.addf %14, %19 : vector<128x8xf32>
    %c0_23 = arith.constant 0 : index
    %c10 = arith.constant 10 : index
    %c0_24 = arith.constant 0 : index
    %21 = vector.load %arg12[%c0_23, %c10, %c0_24] : memref<4x56x8xbf16, #tpu.memory_space<vmem>>, vector<4x32x8xbf16>
    %22 = vector.shape_cast %21 : vector<4x32x8xbf16> to vector<128x8xbf16>
    %c0_25 = arith.constant 0 : index
    %c1 = arith.constant 1 : index
    %c0_26 = arith.constant 0 : index
    %c0_27 = arith.constant 0 : index
    %23 = vector.load %arg4[%c0_25, %c1, %c0_26, %c0_27] : memref<3x7x8x8xbf16, #tpu.memory_space<vmem>>, vector<1x1x8x8xbf16>
    %24 = vector.shape_cast %23 : vector<1x1x8x8xbf16> to vector<8x8xbf16>
    %cst_28 = arith.constant dense<0.000000e+00> : vector<128x8xf32>
    %25 = tpu.matmul %22, %24, %cst_28 {dimension_numbers = #tpu.dot_dimension_numbers<[1], [0], [0], [1], [0, 0, 1, 1], [], []>} : vector<128x8xbf16>, vector<8x8xbf16>, vector<128x8xf32> -> vector<128x8xf32>
    %26 = arith.addf %20, %25 : vector<128x8xf32>
    %c0_29 = arith.constant 0 : index
    %c11 = arith.constant 11 : index
    %c0_30 = arith.constant 0 : index
    %27 = vector.load %arg12[%c0_29, %c11, %c0_30] : memref<4x56x8xbf16, #tpu.memory_space<vmem>>, vector<4x32x8xbf16>
    %28 = vector.shape_cast %27 : vector<4x32x8xbf16> to vector<128x8xbf16>
    %c0_31 = arith.constant 0 : index
    %c2 = arith.constant 2 : index
    %c0_32 = arith.constant 0 : index
    %c0_33 = arith.constant 0 : index
    %29 = vector.load %arg4[%c0_31, %c2, %c0_32, %c0_33] : memref<3x7x8x8xbf16, #tpu.memory_space<vmem>>, vector<1x1x8x8xbf16>
    %30 = vector.shape_cast %29 : vector<1x1x8x8xbf16> to vector<8x8xbf16>
    %cst_34 = arith.constant dense<0.000000e+00> : vector<128x8xf32>
    %31 = tpu.matmul %28, %30, %cst_34 {dimension_numbers = #tpu.dot_dimension_numbers<[1], [0], [0], [1], [0, 0, 1, 1], [], []>} : vector<128x8xbf16>, vector<8x8xbf16>, vector<128x8xf32> -> vector<128x8xf32>
    %32 = arith.addf %26, %31 : vector<128x8xf32>
    %c0_35 = arith.constant 0 : index
    %c12_36 = arith.constant 12 : index
    %c0_37 = arith.constant 0 : index
    %33 = vector.load %arg12[%c0_35, %c12_36, %c0_37] : memref<4x56x8xbf16, #tpu.memory_space<vmem>>, vector<4x32x8xbf16>
    %34 = vector.shape_cast %33 : vector<4x32x8xbf16> to vector<128x8xbf16>
    %c0_38 = arith.constant 0 : index
    %c3 = arith.constant 3 : index
    %c0_39 = arith.constant 0 : index
    %c0_40 = arith.constant 0 : index
    %35 = vector.load %arg4[%c0_38, %c3, %c0_39, %c0_40] : memref<3x7x8x8xbf16, #tpu.memory_space<vmem>>, vector<1x1x8x8xbf16>
    %36 = vector.shape_cast %35 : vector<1x1x8x8xbf16> to vector<8x8xbf16>
    %cst_41 = arith.constant dense<0.000000e+00> : vector<128x8xf32>
    %37 = tpu.matmul %34, %36, %cst_41 {dimension_numbers = #tpu.dot_dimension_numbers<[1], [0], [0], [1], [0, 0, 1, 1], [], []>} : vector<128x8xbf16>, vector<8x8xbf16>, vector<128x8xf32> -> vector<128x8xf32>
    %38 = arith.addf %32, %37 : vector<128x8xf32>
    %c0_42 = arith.constant 0 : index
    %c13 = arith.constant 13 : index
    %c0_43 = arith.constant 0 : index
    %39 = vector.load %arg12[%c0_42, %c13, %c0_43] : memref<4x56x8xbf16, #tpu.memory_space<vmem>>, vector<4x32x8xbf16>
    %40 = vector.shape_cast %39 : vector<4x32x8xbf16> to vector<128x8xbf16>
    %c0_44 = arith.constant 0 : index
    %c4 = arith.constant 4 : index
    %c0_45 = arith.constant 0 : index
    %c0_46 = arith.constant 0 : index
    %41 = vector.load %arg4[%c0_44, %c4, %c0_45, %c0_46] : memref<3x7x8x8xbf16, #tpu.memory_space<vmem>>, vector<1x1x8x8xbf16>
    %42 = vector.shape_cast %41 : vector<1x1x8x8xbf16> to vector<8x8xbf16>
    %cst_47 = arith.constant dense<0.000000e+00> : vector<128x8xf32>
    %43 = tpu.matmul %40, %42, %cst_47 {dimension_numbers = #tpu.dot_dimension_numbers<[1], [0], [0], [1], [0, 0, 1, 1], [], []>} : vector<128x8xbf16>, vector<8x8xbf16>, vector<128x8xf32> -> vector<128x8xf32>
    %44 = arith.addf %38, %43 : vector<128x8xf32>
    %c0_48 = arith.constant 0 : index
    %c14 = arith.constant 14 : index
    %c0_49 = arith.constant 0 : index
    %45 = vector.load %arg12[%c0_48, %c14, %c0_49] : memref<4x56x8xbf16, #tpu.memory_space<vmem>>, vector<4x32x8xbf16>
    %46 = vector.shape_cast %45 : vector<4x32x8xbf16> to vector<128x8xbf16>
    %c0_50 = arith.constant 0 : index
    %c5 = arith.constant 5 : index
    %c0_51 = arith.constant 0 : index
    %c0_52 = arith.constant 0 : index
    %47 = vector.load %arg4[%c0_50, %c5, %c0_51, %c0_52] : memref<3x7x8x8xbf16, #tpu.memory_space<vmem>>, vector<1x1x8x8xbf16>
    %48 = vector.shape_cast %47 : vector<1x1x8x8xbf16> to vector<8x8xbf16>
    %cst_53 = arith.constant dense<0.000000e+00> : vector<128x8xf32>
    %49 = tpu.matmul %46, %48, %cst_53 {dimension_numbers = #tpu.dot_dimension_numbers<[1], [0], [0], [1], [0, 0, 1, 1], [], []>} : vector<128x8xbf16>, vector<8x8xbf16>, vector<128x8xf32> -> vector<128x8xf32>
    %50 = arith.addf %44, %49 : vector<128x8xf32>
    %c0_54 = arith.constant 0 : index
    %c15 = arith.constant 15 : index
    %c0_55 = arith.constant 0 : index
    %51 = vector.load %arg12[%c0_54, %c15, %c0_55] : memref<4x56x8xbf16, #tpu.memory_space<vmem>>, vector<4x32x8xbf16>
    %52 = vector.shape_cast %51 : vector<4x32x8xbf16> to vector<128x8xbf16>
    %c0_56 = arith.constant 0 : index
    %c6 = arith.constant 6 : index
    %c0_57 = arith.constant 0 : index
    %c0_58 = arith.constant 0 : index
    %53 = vector.load %arg4[%c0_56, %c6, %c0_57, %c0_58] : memref<3x7x8x8xbf16, #tpu.memory_space<vmem>>, vector<1x1x8x8xbf16>
    %54 = vector.shape_cast %53 : vector<1x1x8x8xbf16> to vector<8x8xbf16>
    %cst_59 = arith.constant dense<0.000000e+00> : vector<128x8xf32>
    %55 = tpu.matmul %52, %54, %cst_59 {dimension_numbers = #tpu.dot_dimension_numbers<[1], [0], [0], [1], [0, 0, 1, 1], [], []>} : vector<128x8xbf16>, vector<8x8xbf16>, vector<128x8xf32> -> vector<128x8xf32>
    %56 = arith.addf %50, %55 : vector<128x8xf32>
    %c0_60 = arith.constant 0 : index
    %c0_61 = arith.constant 0 : index
    %c0_62 = arith.constant 0 : index
    %57 = vector.load %arg5[%c0_60, %c0_61, %c0_62] : memref<3x1x8xf32, #tpu.memory_space<vmem>>, vector<1x1x8xf32>
    %58 = vector.shape_cast %57 : vector<1x1x8xf32> to vector<1x8xf32>
    %59 = vector.broadcast %58 : vector<1x8xf32> to vector<128x8xf32>
    %60 = arith.addf %56, %59 : vector<128x8xf32>
    %cst_63 = arith.constant 0.000000e+00 : f32
    %61 = vector.broadcast %cst_63 : f32 to vector<128x8xf32>
    %62 = arith.maximumf %60, %61 : vector<128x8xf32>
    %63 = arith.addf %62, %6 : vector<128x8xf32>
    %64 = arith.truncf %63 : vector<128x8xf32> to vector<128x8xbf16>
    %c0_64 = arith.constant 0 : index
    %c0_65 = arith.constant 0 : index
    %c0_66 = arith.constant 0 : index
    %65 = vector.load %arg6[%c0_64, %c0_65, %c0_66] : memref<3x8x8xbf16, #tpu.memory_space<vmem>>, vector<1x8x8xbf16>
    %66 = vector.shape_cast %65 : vector<1x8x8xbf16> to vector<8x8xbf16>
    %cst_67 = arith.constant dense<0.000000e+00> : vector<128x8xf32>
    %67 = tpu.matmul %64, %66, %cst_67 {dimension_numbers = #tpu.dot_dimension_numbers<[1], [0], [0], [1], [0, 0, 1, 1], [], []>} : vector<128x8xbf16>, vector<8x8xbf16>, vector<128x8xf32> -> vector<128x8xf32>
    %68 = arith.addf %13, %67 : vector<128x8xf32>
    %cst_68 = arith.constant 0.000000e+00 : f32
    %69 = vector.broadcast %cst_68 : f32 to vector<128x8xf32>
    %c0_69 = arith.constant 0 : index
    %c6_70 = arith.constant 6 : index
    %c0_71 = arith.constant 0 : index
    %70 = vector.load %arg12[%c0_69, %c6_70, %c0_71] : memref<4x56x8xbf16, #tpu.memory_space<vmem>>, vector<4x32x8xbf16>
    %71 = vector.shape_cast %70 : vector<4x32x8xbf16> to vector<128x8xbf16>
    %c1_72 = arith.constant 1 : index
    %c0_73 = arith.constant 0 : index
    %c0_74 = arith.constant 0 : index
    %c0_75 = arith.constant 0 : index
    %72 = vector.load %arg4[%c1_72, %c0_73, %c0_74, %c0_75] : memref<3x7x8x8xbf16, #tpu.memory_space<vmem>>, vector<1x1x8x8xbf16>
    %73 = vector.shape_cast %72 : vector<1x1x8x8xbf16> to vector<8x8xbf16>
    %cst_76 = arith.constant dense<0.000000e+00> : vector<128x8xf32>
    %74 = tpu.matmul %71, %73, %cst_76 {dimension_numbers = #tpu.dot_dimension_numbers<[1], [0], [0], [1], [0, 0, 1, 1], [], []>} : vector<128x8xbf16>, vector<8x8xbf16>, vector<128x8xf32> -> vector<128x8xf32>
    %75 = arith.addf %69, %74 : vector<128x8xf32>
    %c0_77 = arith.constant 0 : index
    %c8 = arith.constant 8 : index
    %c0_78 = arith.constant 0 : index
    %76 = vector.load %arg12[%c0_77, %c8, %c0_78] : memref<4x56x8xbf16, #tpu.memory_space<vmem>>, vector<4x32x8xbf16>
    %77 = vector.shape_cast %76 : vector<4x32x8xbf16> to vector<128x8xbf16>
    %c1_79 = arith.constant 1 : index
    %c1_80 = arith.constant 1 : index
    %c0_81 = arith.constant 0 : index
    %c0_82 = arith.constant 0 : index
    %78 = vector.load %arg4[%c1_79, %c1_80, %c0_81, %c0_82] : memref<3x7x8x8xbf16, #tpu.memory_space<vmem>>, vector<1x1x8x8xbf16>
    %79 = vector.shape_cast %78 : vector<1x1x8x8xbf16> to vector<8x8xbf16>
    %cst_83 = arith.constant dense<0.000000e+00> : vector<128x8xf32>
    %80 = tpu.matmul %77, %79, %cst_83 {dimension_numbers = #tpu.dot_dimension_numbers<[1], [0], [0], [1], [0, 0, 1, 1], [], []>} : vector<128x8xbf16>, vector<8x8xbf16>, vector<128x8xf32> -> vector<128x8xf32>
    %81 = arith.addf %75, %80 : vector<128x8xf32>
    %c0_84 = arith.constant 0 : index
    %c10_85 = arith.constant 10 : index
    %c0_86 = arith.constant 0 : index
    %82 = vector.load %arg12[%c0_84, %c10_85, %c0_86] : memref<4x56x8xbf16, #tpu.memory_space<vmem>>, vector<4x32x8xbf16>
    %83 = vector.shape_cast %82 : vector<4x32x8xbf16> to vector<128x8xbf16>
    %c1_87 = arith.constant 1 : index
    %c2_88 = arith.constant 2 : index
    %c0_89 = arith.constant 0 : index
    %c0_90 = arith.constant 0 : index
    %84 = vector.load %arg4[%c1_87, %c2_88, %c0_89, %c0_90] : memref<3x7x8x8xbf16, #tpu.memory_space<vmem>>, vector<1x1x8x8xbf16>
    %85 = vector.shape_cast %84 : vector<1x1x8x8xbf16> to vector<8x8xbf16>
    %cst_91 = arith.constant dense<0.000000e+00> : vector<128x8xf32>
    %86 = tpu.matmul %83, %85, %cst_91 {dimension_numbers = #tpu.dot_dimension_numbers<[1], [0], [0], [1], [0, 0, 1, 1], [], []>} : vector<128x8xbf16>, vector<8x8xbf16>, vector<128x8xf32> -> vector<128x8xf32>
    %87 = arith.addf %81, %86 : vector<128x8xf32>
    %c0_92 = arith.constant 0 : index
    %c12_93 = arith.constant 12 : index
    %c0_94 = arith.constant 0 : index
    %88 = vector.load %arg12[%c0_92, %c12_93, %c0_94] : memref<4x56x8xbf16, #tpu.memory_space<vmem>>, vector<4x32x8xbf16>
    %89 = vector.shape_cast %88 : vector<4x32x8xbf16> to vector<128x8xbf16>
    %c1_95 = arith.constant 1 : index
    %c3_96 = arith.constant 3 : index
    %c0_97 = arith.constant 0 : index
    %c0_98 = arith.constant 0 : index
    %90 = vector.load %arg4[%c1_95, %c3_96, %c0_97, %c0_98] : memref<3x7x8x8xbf16, #tpu.memory_space<vmem>>, vector<1x1x8x8xbf16>
    %91 = vector.shape_cast %90 : vector<1x1x8x8xbf16> to vector<8x8xbf16>
    %cst_99 = arith.constant dense<0.000000e+00> : vector<128x8xf32>
    %92 = tpu.matmul %89, %91, %cst_99 {dimension_numbers = #tpu.dot_dimension_numbers<[1], [0], [0], [1], [0, 0, 1, 1], [], []>} : vector<128x8xbf16>, vector<8x8xbf16>, vector<128x8xf32> -> vector<128x8xf32>
    %93 = arith.addf %87, %92 : vector<128x8xf32>
    %c0_100 = arith.constant 0 : index
    %c14_101 = arith.constant 14 : index
    %c0_102 = arith.constant 0 : index
    %94 = vector.load %arg12[%c0_100, %c14_101, %c0_102] : memref<4x56x8xbf16, #tpu.memory_space<vmem>>, vector<4x32x8xbf16>
    %95 = vector.shape_cast %94 : vector<4x32x8xbf16> to vector<128x8xbf16>
    %c1_103 = arith.constant 1 : index
    %c4_104 = arith.constant 4 : index
    %c0_105 = arith.constant 0 : index
    %c0_106 = arith.constant 0 : index
    %96 = vector.load %arg4[%c1_103, %c4_104, %c0_105, %c0_106] : memref<3x7x8x8xbf16, #tpu.memory_space<vmem>>, vector<1x1x8x8xbf16>
    %97 = vector.shape_cast %96 : vector<1x1x8x8xbf16> to vector<8x8xbf16>
    %cst_107 = arith.constant dense<0.000000e+00> : vector<128x8xf32>
    %98 = tpu.matmul %95, %97, %cst_107 {dimension_numbers = #tpu.dot_dimension_numbers<[1], [0], [0], [1], [0, 0, 1, 1], [], []>} : vector<128x8xbf16>, vector<8x8xbf16>, vector<128x8xf32> -> vector<128x8xf32>
    %99 = arith.addf %93, %98 : vector<128x8xf32>
    %c0_108 = arith.constant 0 : index
    %c16 = arith.constant 16 : index
    %c0_109 = arith.constant 0 : index
    %100 = vector.load %arg12[%c0_108, %c16, %c0_109] : memref<4x56x8xbf16, #tpu.memory_space<vmem>>, vector<4x32x8xbf16>
    %101 = vector.shape_cast %100 : vector<4x32x8xbf16> to vector<128x8xbf16>
    %c1_110 = arith.constant 1 : index
    %c5_111 = arith.constant 5 : index
    %c0_112 = arith.constant 0 : index
    %c0_113 = arith.constant 0 : index
    %102 = vector.load %arg4[%c1_110, %c5_111, %c0_112, %c0_113] : memref<3x7x8x8xbf16, #tpu.memory_space<vmem>>, vector<1x1x8x8xbf16>
    %103 = vector.shape_cast %102 : vector<1x1x8x8xbf16> to vector<8x8xbf16>
    %cst_114 = arith.constant dense<0.000000e+00> : vector<128x8xf32>
    %104 = tpu.matmul %101, %103, %cst_114 {dimension_numbers = #tpu.dot_dimension_numbers<[1], [0], [0], [1], [0, 0, 1, 1], [], []>} : vector<128x8xbf16>, vector<8x8xbf16>, vector<128x8xf32> -> vector<128x8xf32>
    %105 = arith.addf %99, %104 : vector<128x8xf32>
    %c0_115 = arith.constant 0 : index
    %c18 = arith.constant 18 : index
    %c0_116 = arith.constant 0 : index
    %106 = vector.load %arg12[%c0_115, %c18, %c0_116] : memref<4x56x8xbf16, #tpu.memory_space<vmem>>, vector<4x32x8xbf16>
    %107 = vector.shape_cast %106 : vector<4x32x8xbf16> to vector<128x8xbf16>
    %c1_117 = arith.constant 1 : index
    %c6_118 = arith.constant 6 : index
    %c0_119 = arith.constant 0 : index
    %c0_120 = arith.constant 0 : index
    %108 = vector.load %arg4[%c1_117, %c6_118, %c0_119, %c0_120] : memref<3x7x8x8xbf16, #tpu.memory_space<vmem>>, vector<1x1x8x8xbf16>
    %109 = vector.shape_cast %108 : vector<1x1x8x8xbf16> to vector<8x8xbf16>
    %cst_121 = arith.constant dense<0.000000e+00> : vector<128x8xf32>
    %110 = tpu.matmul %107, %109, %cst_121 {dimension_numbers = #tpu.dot_dimension_numbers<[1], [0], [0], [1], [0, 0, 1, 1], [], []>} : vector<128x8xbf16>, vector<8x8xbf16>, vector<128x8xf32> -> vector<128x8xf32>
    %111 = arith.addf %105, %110 : vector<128x8xf32>
    %c1_122 = arith.constant 1 : index
    %c0_123 = arith.constant 0 : index
    %c0_124 = arith.constant 0 : index
    %112 = vector.load %arg5[%c1_122, %c0_123, %c0_124] : memref<3x1x8xf32, #tpu.memory_space<vmem>>, vector<1x1x8xf32>
    %113 = vector.shape_cast %112 : vector<1x1x8xf32> to vector<1x8xf32>
    %114 = vector.broadcast %113 : vector<1x8xf32> to vector<128x8xf32>
    %115 = arith.addf %111, %114 : vector<128x8xf32>
    %cst_125 = arith.constant 0.000000e+00 : f32
    %116 = vector.broadcast %cst_125 : f32 to vector<128x8xf32>
    %117 = arith.maximumf %115, %116 : vector<128x8xf32>
    %118 = arith.addf %117, %6 : vector<128x8xf32>
    %119 = arith.truncf %118 : vector<128x8xf32> to vector<128x8xbf16>
    %c1_126 = arith.constant 1 : index
    %c0_127 = arith.constant 0 : index
    %c0_128 = arith.constant 0 : index
    %120 = vector.load %arg6[%c1_126, %c0_127, %c0_128] : memref<3x8x8xbf16, #tpu.memory_space<vmem>>, vector<1x8x8xbf16>
    %121 = vector.shape_cast %120 : vector<1x8x8xbf16> to vector<8x8xbf16>
    %cst_129 = arith.constant dense<0.000000e+00> : vector<128x8xf32>
    %122 = tpu.matmul %119, %121, %cst_129 {dimension_numbers = #tpu.dot_dimension_numbers<[1], [0], [0], [1], [0, 0, 1, 1], [], []>} : vector<128x8xbf16>, vector<8x8xbf16>, vector<128x8xf32> -> vector<128x8xf32>
    %123 = arith.addf %68, %122 : vector<128x8xf32>
    %cst_130 = arith.constant 0.000000e+00 : f32
    %124 = vector.broadcast %cst_130 : f32 to vector<128x8xf32>
    %c0_131 = arith.constant 0 : index
    %c0_132 = arith.constant 0 : index
    %c0_133 = arith.constant 0 : index
    %125 = vector.load %arg12[%c0_131, %c0_132, %c0_133] : memref<4x56x8xbf16, #tpu.memory_space<vmem>>, vector<4x32x8xbf16>
    %126 = vector.shape_cast %125 : vector<4x32x8xbf16> to vector<128x8xbf16>
    %c2_134 = arith.constant 2 : index
    %c0_135 = arith.constant 0 : index
    %c0_136 = arith.constant 0 : index
    %c0_137 = arith.constant 0 : index
    %127 = vector.load %arg4[%c2_134, %c0_135, %c0_136, %c0_137] : memref<3x7x8x8xbf16, #tpu.memory_space<vmem>>, vector<1x1x8x8xbf16>
    %128 = vector.shape_cast %127 : vector<1x1x8x8xbf16> to vector<8x8xbf16>
    %cst_138 = arith.constant dense<0.000000e+00> : vector<128x8xf32>
    %129 = tpu.matmul %126, %128, %cst_138 {dimension_numbers = #tpu.dot_dimension_numbers<[1], [0], [0], [1], [0, 0, 1, 1], [], []>} : vector<128x8xbf16>, vector<8x8xbf16>, vector<128x8xf32> -> vector<128x8xf32>
    %130 = arith.addf %124, %129 : vector<128x8xf32>
    %c0_139 = arith.constant 0 : index
    %c4_140 = arith.constant 4 : index
    %c0_141 = arith.constant 0 : index
    %131 = vector.load %arg12[%c0_139, %c4_140, %c0_141] : memref<4x56x8xbf16, #tpu.memory_space<vmem>>, vector<4x32x8xbf16>
    %132 = vector.shape_cast %131 : vector<4x32x8xbf16> to vector<128x8xbf16>
    %c2_142 = arith.constant 2 : index
    %c1_143 = arith.constant 1 : index
    %c0_144 = arith.constant 0 : index
    %c0_145 = arith.constant 0 : index
    %133 = vector.load %arg4[%c2_142, %c1_143, %c0_144, %c0_145] : memref<3x7x8x8xbf16, #tpu.memory_space<vmem>>, vector<1x1x8x8xbf16>
    %134 = vector.shape_cast %133 : vector<1x1x8x8xbf16> to vector<8x8xbf16>
    %cst_146 = arith.constant dense<0.000000e+00> : vector<128x8xf32>
    %135 = tpu.matmul %132, %134, %cst_146 {dimension_numbers = #tpu.dot_dimension_numbers<[1], [0], [0], [1], [0, 0, 1, 1], [], []>} : vector<128x8xbf16>, vector<8x8xbf16>, vector<128x8xf32> -> vector<128x8xf32>
    %136 = arith.addf %130, %135 : vector<128x8xf32>
    %c0_147 = arith.constant 0 : index
    %c8_148 = arith.constant 8 : index
    %c0_149 = arith.constant 0 : index
    %137 = vector.load %arg12[%c0_147, %c8_148, %c0_149] : memref<4x56x8xbf16, #tpu.memory_space<vmem>>, vector<4x32x8xbf16>
    %138 = vector.shape_cast %137 : vector<4x32x8xbf16> to vector<128x8xbf16>
    %c2_150 = arith.constant 2 : index
    %c2_151 = arith.constant 2 : index
    %c0_152 = arith.constant 0 : index
    %c0_153 = arith.constant 0 : index
    %139 = vector.load %arg4[%c2_150, %c2_151, %c0_152, %c0_153] : memref<3x7x8x8xbf16, #tpu.memory_space<vmem>>, vector<1x1x8x8xbf16>
    %140 = vector.shape_cast %139 : vector<1x1x8x8xbf16> to vector<8x8xbf16>
    %cst_154 = arith.constant dense<0.000000e+00> : vector<128x8xf32>
    %141 = tpu.matmul %138, %140, %cst_154 {dimension_numbers = #tpu.dot_dimension_numbers<[1], [0], [0], [1], [0, 0, 1, 1], [], []>} : vector<128x8xbf16>, vector<8x8xbf16>, vector<128x8xf32> -> vector<128x8xf32>
    %142 = arith.addf %136, %141 : vector<128x8xf32>
    %c0_155 = arith.constant 0 : index
    %c12_156 = arith.constant 12 : index
    %c0_157 = arith.constant 0 : index
    %143 = vector.load %arg12[%c0_155, %c12_156, %c0_157] : memref<4x56x8xbf16, #tpu.memory_space<vmem>>, vector<4x32x8xbf16>
    %144 = vector.shape_cast %143 : vector<4x32x8xbf16> to vector<128x8xbf16>
    %c2_158 = arith.constant 2 : index
    %c3_159 = arith.constant 3 : index
    %c0_160 = arith.constant 0 : index
    %c0_161 = arith.constant 0 : index
    %145 = vector.load %arg4[%c2_158, %c3_159, %c0_160, %c0_161] : memref<3x7x8x8xbf16, #tpu.memory_space<vmem>>, vector<1x1x8x8xbf16>
    %146 = vector.shape_cast %145 : vector<1x1x8x8xbf16> to vector<8x8xbf16>
    %cst_162 = arith.constant dense<0.000000e+00> : vector<128x8xf32>
    %147 = tpu.matmul %144, %146, %cst_162 {dimension_numbers = #tpu.dot_dimension_numbers<[1], [0], [0], [1], [0, 0, 1, 1], [], []>} : vector<128x8xbf16>, vector<8x8xbf16>, vector<128x8xf32> -> vector<128x8xf32>
    %148 = arith.addf %142, %147 : vector<128x8xf32>
    %c0_163 = arith.constant 0 : index
    %c16_164 = arith.constant 16 : index
    %c0_165 = arith.constant 0 : index
    %149 = vector.load %arg12[%c0_163, %c16_164, %c0_165] : memref<4x56x8xbf16, #tpu.memory_space<vmem>>, vector<4x32x8xbf16>
    %150 = vector.shape_cast %149 : vector<4x32x8xbf16> to vector<128x8xbf16>
    %c2_166 = arith.constant 2 : index
    %c4_167 = arith.constant 4 : index
    %c0_168 = arith.constant 0 : index
    %c0_169 = arith.constant 0 : index
    %151 = vector.load %arg4[%c2_166, %c4_167, %c0_168, %c0_169] : memref<3x7x8x8xbf16, #tpu.memory_space<vmem>>, vector<1x1x8x8xbf16>
    %152 = vector.shape_cast %151 : vector<1x1x8x8xbf16> to vector<8x8xbf16>
    %cst_170 = arith.constant dense<0.000000e+00> : vector<128x8xf32>
    %153 = tpu.matmul %150, %152, %cst_170 {dimension_numbers = #tpu.dot_dimension_numbers<[1], [0], [0], [1], [0, 0, 1, 1], [], []>} : vector<128x8xbf16>, vector<8x8xbf16>, vector<128x8xf32> -> vector<128x8xf32>
    %154 = arith.addf %148, %153 : vector<128x8xf32>
    %c0_171 = arith.constant 0 : index
    %c20 = arith.constant 20 : index
    %c0_172 = arith.constant 0 : index
    %155 = vector.load %arg12[%c0_171, %c20, %c0_172] : memref<4x56x8xbf16, #tpu.memory_space<vmem>>, vector<4x32x8xbf16>
    %156 = vector.shape_cast %155 : vector<4x32x8xbf16> to vector<128x8xbf16>
    %c2_173 = arith.constant 2 : index
    %c5_174 = arith.constant 5 : index
    %c0_175 = arith.constant 0 : index
    %c0_176 = arith.constant 0 : index
    %157 = vector.load %arg4[%c2_173, %c5_174, %c0_175, %c0_176] : memref<3x7x8x8xbf16, #tpu.memory_space<vmem>>, vector<1x1x8x8xbf16>
    %158 = vector.shape_cast %157 : vector<1x1x8x8xbf16> to vector<8x8xbf16>
    %cst_177 = arith.constant dense<0.000000e+00> : vector<128x8xf32>
    %159 = tpu.matmul %156, %158, %cst_177 {dimension_numbers = #tpu.dot_dimension_numbers<[1], [0], [0], [1], [0, 0, 1, 1], [], []>} : vector<128x8xbf16>, vector<8x8xbf16>, vector<128x8xf32> -> vector<128x8xf32>
    %160 = arith.addf %154, %159 : vector<128x8xf32>
    %c0_178 = arith.constant 0 : index
    %c24 = arith.constant 24 : index
    %c0_179 = arith.constant 0 : index
    %161 = vector.load %arg12[%c0_178, %c24, %c0_179] : memref<4x56x8xbf16, #tpu.memory_space<vmem>>, vector<4x32x8xbf16>
    %162 = vector.shape_cast %161 : vector<4x32x8xbf16> to vector<128x8xbf16>
    %c2_180 = arith.constant 2 : index
    %c6_181 = arith.constant 6 : index
    %c0_182 = arith.constant 0 : index
    %c0_183 = arith.constant 0 : index
    %163 = vector.load %arg4[%c2_180, %c6_181, %c0_182, %c0_183] : memref<3x7x8x8xbf16, #tpu.memory_space<vmem>>, vector<1x1x8x8xbf16>
    %164 = vector.shape_cast %163 : vector<1x1x8x8xbf16> to vector<8x8xbf16>
    %cst_184 = arith.constant dense<0.000000e+00> : vector<128x8xf32>
    %165 = tpu.matmul %162, %164, %cst_184 {dimension_numbers = #tpu.dot_dimension_numbers<[1], [0], [0], [1], [0, 0, 1, 1], [], []>} : vector<128x8xbf16>, vector<8x8xbf16>, vector<128x8xf32> -> vector<128x8xf32>
    %166 = arith.addf %160, %165 : vector<128x8xf32>
    %c2_185 = arith.constant 2 : index
    %c0_186 = arith.constant 0 : index
    %c0_187 = arith.constant 0 : index
    %167 = vector.load %arg5[%c2_185, %c0_186, %c0_187] : memref<3x1x8xf32, #tpu.memory_space<vmem>>, vector<1x1x8xf32>
    %168 = vector.shape_cast %167 : vector<1x1x8xf32> to vector<1x8xf32>
    %169 = vector.broadcast %168 : vector<1x8xf32> to vector<128x8xf32>
    %170 = arith.addf %166, %169 : vector<128x8xf32>
    %cst_188 = arith.constant 0.000000e+00 : f32
    %171 = vector.broadcast %cst_188 : f32 to vector<128x8xf32>
    %172 = arith.maximumf %170, %171 : vector<128x8xf32>
    %173 = arith.addf %172, %6 : vector<128x8xf32>
    %174 = arith.truncf %173 : vector<128x8xf32> to vector<128x8xbf16>
    %c2_189 = arith.constant 2 : index
    %c0_190 = arith.constant 0 : index
    %c0_191 = arith.constant 0 : index
    %175 = vector.load %arg6[%c2_189, %c0_190, %c0_191] : memref<3x8x8xbf16, #tpu.memory_space<vmem>>, vector<1x8x8xbf16>
    %176 = vector.shape_cast %175 : vector<1x8x8xbf16> to vector<8x8xbf16>
    %cst_192 = arith.constant dense<0.000000e+00> : vector<128x8xf32>
    %177 = tpu.matmul %174, %176, %cst_192 {dimension_numbers = #tpu.dot_dimension_numbers<[1], [0], [0], [1], [0, 0, 1, 1], [], []>} : vector<128x8xbf16>, vector<8x8xbf16>, vector<128x8xf32> -> vector<128x8xf32>
    %178 = arith.addf %123, %177 : vector<128x8xf32>
    %179 = vector.shape_cast %178 : vector<128x8xf32> to vector<4x32x8xf32>
    %cst_193 = arith.constant dense<0.000000e+00> : vector<4x8xf32>
    %180 = vector.multi_reduction <add>, %179, %cst_193 [1] : vector<4x32x8xf32> to vector<4x8xf32>
    %181 = arith.truncf %180 : vector<4x8xf32> to vector<4x8xbf16>
    %c0_194 = arith.constant 0 : index
    %c0_195 = arith.constant 0 : index
    %182 = vector.load %arg7[%c0_194, %c0_195] : memref<8x16xbf16, #tpu.memory_space<vmem>>, vector<8x16xbf16>
    %cst_196 = arith.constant dense<0.000000e+00> : vector<4x16xf32>
    %183 = tpu.matmul %181, %182, %cst_196 {dimension_numbers = #tpu.dot_dimension_numbers<[1], [0], [0], [1], [0, 0, 1, 1], [], []>} : vector<4x8xbf16>, vector<8x16xbf16>, vector<4x16xf32> -> vector<4x16xf32>
    %c0_197 = arith.constant 0 : index
    %c0_198 = arith.constant 0 : index
    %184 = vector.load %arg8[%c0_197, %c0_198] : memref<1x16xf32, #tpu.memory_space<vmem>>, vector<1x16xf32>
    %185 = vector.broadcast %184 : vector<1x16xf32> to vector<4x16xf32>
    %186 = arith.addf %183, %185 : vector<4x16xf32>
    %cst_199 = arith.constant 0.000000e+00 : f32
    %187 = vector.broadcast %cst_199 : f32 to vector<4x16xf32>
    %188 = arith.maximumf %186, %187 : vector<4x16xf32>
    %189 = arith.truncf %188 : vector<4x16xf32> to vector<4x16xbf16>
    %c0_200 = arith.constant 0 : index
    %c0_201 = arith.constant 0 : index
    %190 = vector.load %arg9[%c0_200, %c0_201] : memref<16x128xbf16, #tpu.memory_space<vmem>>, vector<16x128xbf16>
    %cst_202 = arith.constant dense<0.000000e+00> : vector<4x128xf32>
    %191 = tpu.matmul %189, %190, %cst_202 {dimension_numbers = #tpu.dot_dimension_numbers<[1], [0], [0], [1], [0, 0, 1, 1], [], []>} : vector<4x16xbf16>, vector<16x128xbf16>, vector<4x128xf32> -> vector<4x128xf32>
    %c0_203 = arith.constant 0 : index
    %c0_204 = arith.constant 0 : index
    %192 = vector.load %arg10[%c0_203, %c0_204] : memref<1x128xf32, #tpu.memory_space<vmem>>, vector<1x128xf32>
    %193 = vector.broadcast %192 : vector<1x128xf32> to vector<4x128xf32>
    %194 = arith.addf %191, %193 : vector<4x128xf32>
    %c0_205 = arith.constant 0 : index
    %c0_206 = arith.constant 0 : index
    %c0_207 = arith.constant 0 : index
    %195 = vector.load %arg11[%c0_205, %c0_206, %c0_207] : memref<1x4x128xf32, #tpu.memory_space<vmem>>, vector<1x4x128xf32>
    %196 = vector.shape_cast %195 : vector<1x4x128xf32> to vector<4x128xf32>
    %197 = vector.shape_cast %194 : vector<4x128xf32> to vector<1x4x128xf32>
    tpu.vector_store %arg11[%c0_205, %c0_206, %c0_207], %197 {strides = array<i32>} : memref<1x4x128xf32, #tpu.memory_space<vmem>>, vector<1x4x128xf32>,
    return
  }
  func.func @transform_0(%arg0: i32) -> (i32, i32, i32) {
    %c0_i32 = arith.constant 0 : i32
    %c0_i32_0 = arith.constant 0 : i32
    %c0_i32_1 = arith.constant 0 : i32
    return %arg0, %c0_i32, %c0_i32_0 : i32, i32, i32
  }
  func.func @transform_1(%arg0: i32) -> (i32, i32) {
    %c0_i32 = arith.constant 0 : i32
    %c0_i32_0 = arith.constant 0 : i32
    %c0_i32_1 = arith.constant 0 : i32
    return %c0_i32, %c0_i32_0 : i32, i32
  }
  func.func @transform_2(%arg0: i32) -> (i32, i32) {
    %c0_i32 = arith.constant 0 : i32
    %c0_i32_0 = arith.constant 0 : i32
    %c0_i32_1 = arith.constant 0 : i32
    return %c0_i32, %c0_i32_0 : i32, i32
  }
  func.func @transform_3(%arg0: i32) -> (i32, i32, i32, i32) {
    %c0_i32 = arith.constant 0 : i32
    %c0_i32_0 = arith.constant 0 : i32
    %c0_i32_1 = arith.constant 0 : i32
    %c0_i32_2 = arith.constant 0 : i32
    %c0_i32_3 = arith.constant 0 : i32
    return %c0_i32, %c0_i32_0, %c0_i32_1, %c0_i32_2 : i32, i32, i32, i32
  }
  func.func @transform_4(%arg0: i32) -> (i32, i32, i32) {
    %c0_i32 = arith.constant 0 : i32
    %c0_i32_0 = arith.constant 0 : i32
    %c0_i32_1 = arith.constant 0 : i32
    %c0_i32_2 = arith.constant 0 : i32
    return %c0_i32, %c0_i32_0, %c0_i32_1 : i32, i32, i32
  }
  func.func @transform_5(%arg0: i32) -> (i32, i32, i32) {
    %c0_i32 = arith.constant 0 : i32
    %c0_i32_0 = arith.constant 0 : i32
    %c0_i32_1 = arith.constant 0 : i32
    %c0_i32_2 = arith.constant 0 : i32
    return %c0_i32, %c0_i32_0, %c0_i32_1 : i32, i32, i32
  }
  func.func @transform_6(%arg0: i32) -> (i32, i32) {
    %c0_i32 = arith.constant 0 : i32
    %c0_i32_0 = arith.constant 0 : i32
    %c0_i32_1 = arith.constant 0 : i32
    return %c0_i32, %c0_i32_0 : i32, i32
  }
  func.func @transform_7(%arg0: i32) -> (i32, i32) {
    %c0_i32 = arith.constant 0 : i32
    %c0_i32_0 = arith.constant 0 : i32
    %c0_i32_1 = arith.constant 0 : i32
    return %c0_i32, %c0_i32_0 : i32, i32
  }
  func.func @transform_8(%arg0: i32) -> (i32, i32) {
    %c0_i32 = arith.constant 0 : i32
    %c0_i32_0 = arith.constant 0 : i32
    %c0_i32_1 = arith.constant 0 : i32
    return %c0_i32, %c0_i32_0 : i32, i32
  }
  func.func @transform_9(%arg0: i32) -> (i32, i32) {
    %c0_i32 = arith.constant 0 : i32
    %c0_i32_0 = arith.constant 0 : i32
    %c0_i32_1 = arith.constant 0 : i32
    return %c0_i32, %c0_i32_0 : i32, i32
  }
  func.func @transform_10(%arg0: i32) -> (i32, i32, i32) {
    %c0_i32 = arith.constant 0 : i32
    %c0_i32_0 = arith.constant 0 : i32
    %c0_i32_1 = arith.constant 0 : i32
    return %arg0, %c0_i32, %c0_i32_0 : i32, i32, i32
  }
}

</mosaic_0001>

<llo_original>
// kernel: dilated_cnn_forward.1
$region0: #{dilated_cnn_forward.1}
  #allocation0 [shape = 'u32[]', space=smem, size = 0x4, offset = 0x4, fixed_abs, tag = 'smem constant byte address 0x4 - core index']
  #allocation1 [shape = 'u32[144,128]{1,0:T(1,128)}', space=vmem, size = 0x12000, scoped, tag = 'internal scratch']
  #allocation2 [shape = 'bf16[4,56,8]{2,1,0:T(8,128)(2,1)}', space=vmem, size = 0xe000, scoped, tag = 'scratch operand']
  %s0 = inlined_call_operand.hbm [shape: bf16[4,32,16], index: 0, kind: input, shape index: {}]
  %s1 = inlined_call_operand.hbm [shape: bf16[16,8], index: 1, kind: input, shape index: {}]
  %s2 = inlined_call_operand.hbm [shape: f32[1,8], index: 2, kind: input, shape index: {}]
  %s3 = inlined_call_operand.hbm [shape: bf16[3,7,8,8], index: 3, kind: input, shape index: {}]
  %s4 = inlined_call_operand.hbm [shape: f32[3,1,8], index: 4, kind: input, shape index: {}]
  %s5 = inlined_call_operand.hbm [shape: bf16[3,8,8], index: 5, kind: input, shape index: {}]
  %s6 = inlined_call_operand.hbm [shape: bf16[8,16], index: 6, kind: input, shape index: {}]
  %s7 = inlined_call_operand.hbm [shape: f32[1,16], index: 7, kind: input, shape index: {}]
  %s8 = inlined_call_operand.hbm [shape: bf16[16,128], index: 8, kind: input, shape index: {}]
  %s9 = inlined_call_operand.hbm [shape: f32[1,128], index: 9, kind: input, shape index: {}]
  %s10 = inlined_call_operand.hbm [shape: f32[1,4,128], index: 10, kind: output, shape index: {}]
  %s11 = sld [smem:[#allocation0]]
  $region90: #{dilated_cnn_forward.1} parent=0
    _
  %s13 = ssub.s32 1, %s11
  %s14 = scalar_select 0, %s13, %s11
  $region1: #{dilated_cnn_forward.1} parent=0
    #allocation3 [shape = 'u8[32768]{0}', space=vmem, size = 0x8000, scoped, tag = 'input window, operand 0, single buffered']
    #allocation4 [shape = 's32[1]{0}', space=sflag, size = 0x4, scoped, tag = 'scoped memory for dilated_cnn_forward.1']
    #allocation5 [shape = 's32[1]{0}', space=sflag, size = 0x4, scoped, tag = 'scoped memory for dilated_cnn_forward.1']
    #allocation6 [shape = 'u8[4096]{0}', space=vmem, size = 0x1000, scoped, tag = 'input window, operand 1, single buffered']
    #allocation7 [shape = 's32[1]{0}', space=sflag, size = 0x4, scoped, tag = 'scoped memory for dilated_cnn_forward.1']
    #allocation8 [shape = 'u8[512]{0}', space=vmem, size = 0x400, scoped, tag = 'input window, operand 2, single buffered']
    #allocation9 [shape = 'u8[43008]{0}', space=vmem, size = 0xa800, scoped, tag = 'input window, operand 3, single buffered']
    #allocation10 [shape = 's32[1]{0}', space=sflag, size = 0x4, scoped, tag = 'scoped memory for dilated_cnn_forward.1']
    #allocation11 [shape = 'u8[1536]{0}', space=vmem, size = 0x800, scoped, tag = 'input window, operand 4, single buffered']
    #allocation12 [shape = 'u8[6144]{0}', space=vmem, size = 0x1800, scoped, tag = 'input window, operand 5, single buffered']
    #allocation13 [shape = 's32[1]{0}', space=sflag, size = 0x4, scoped, tag = 'scoped memory for dilated_cnn_forward.1']
    #allocation14 [shape = 'u8[2048]{0}', space=vmem, size = 0x800, scoped, tag = 'input window, operand 6, single buffered']
    #allocation15 [shape = 'u8[512]{0}', space=vmem, size = 0x400, scoped, tag = 'input window, operand 7, single buffered']
    #allocation16 [shape = 's32[1]{0}', space=sflag, size = 0x4, scoped, tag = 'scoped memory for dilated_cnn_forward.1']
    #allocation17 [shape = 'u8[4096]{0}', space=vmem, size = 0x1000, scoped, tag = 'input window, operand 8, single buffered']
    #allocation18 [shape = 'u8[512]{0}', space=vmem, size = 0x400, scoped, tag = 'input window, operand 9, single buffered']
    #allocation19 [shape = 's32[1]{0}', space=sflag, size = 0x4, scoped, tag = 'scoped memory for dilated_cnn_forward.1']
    #allocation20 [shape = 'u8[2048]{0}', space=vmem, size = 0x800, scoped, tag = 'output window, operand 0, single buffered']
    %15 = vsyncpa [#allocation4], 0
    %16 = vsyncpa [#allocation7], 0
    %17 = vsyncpa [#allocation10], 0
    %18 = vsyncpa [#allocation13], 0
    %19 = vsyncpa [#allocation16], 0
    %20 = vsyncpa [#allocation19], 0
    %21 = vsyncpa [#allocation5], 0
    // Predicated region
    $region2: #{dilated_cnn_forward.1} parent=1 // pred_check
      _
    $region3: #{dilated_cnn_forward.1} parent=1 // pred_check_branch
      %23 = sbr.rel (0) target = $region5
    $region4: #{dilated_cnn_forward.1} parent=1 // pred_region
      %s25 = ssub.s32 1024, 1024
      %26 = vsyncadd [#allocation4], %s25
      %s27 = sshll.u32 [#allocation3], 4
      %s28 = int_to_ptr.vmem [resolvable:$true] %s27
      %33 = dma.hbm_to_vmem [thread:$0]  %s0, 1024, %s28, [#allocation4], 64, 64, 4
    $region5: #{dilated_cnn_forward.1} parent=1 // pred_fallthru
      _
    // Predicated region
    $region6: #{dilated_cnn_forward.1} parent=1 // pred_check
      _
    $region7: #{dilated_cnn_forward.1} parent=1 // pred_check_branch
      %35 = sbr.rel (0) target = $region9
    $region8: #{dilated_cnn_forward.1} parent=1 // pred_region
      %s37 = ssub.s32 128, 128
      %38 = vsyncadd [#allocation7], %s37
      %s39 = sshll.u32 [#allocation6], 4
      %s40 = int_to_ptr.vmem [resolvable:$true] %s39
      %45 = dma.hbm_to_vmem [thread:$0]  %s1, 128, %s40, [#allocation7], 64, 64, 4
    $region9: #{dilated_cnn_forward.1} parent=1 // pred_fallthru
      _
    // Predicated region
    $region10: #{dilated_cnn_forward.1} parent=1 // pred_check
      _
    $region11: #{dilated_cnn_forward.1} parent=1 // pred_check_branch
      %47 = sbr.rel (0) target = $region13
    $region12: #{dilated_cnn_forward.1} parent=1 // pred_region
      %s49 = ssub.s32 16, 16
      %50 = vsyncadd [#allocation7], %s49
      %s52 = sshll.u32 [#allocation8], 4
      %s53 = int_to_ptr.vmem [resolvable:$true] %s52
      %55 = dma.hbm_to_vmem [thread:$0]  %s2, 16, %s53, [#allocation7]
    $region13: #{dilated_cnn_forward.1} parent=1 // pred_fallthru
      _
    // Predicated region
    $region14: #{dilated_cnn_forward.1} parent=1 // pred_check
      _
    $region15: #{dilated_cnn_forward.1} parent=1 // pred_check_branch
      %57 = sbr.rel (0) target = $region17
    $region16: #{dilated_cnn_forward.1} parent=1 // pred_region
      %s59 = ssub.s32 1344, 1344
      %60 = vsyncadd [#allocation10], %s59
      %s61 = sshll.u32 [#allocation9], 4
      %s62 = int_to_ptr.vmem [resolvable:$true] %s61
      %67 = dma.hbm_to_vmem [thread:$0]  %s3, 1344, %s62, [#allocation10], 64, 64, 4
    $region17: #{dilated_cnn_forward.1} parent=1 // pred_fallthru
      _
    // Predicated region
    $region18: #{dilated_cnn_forward.1} parent=1 // pred_check
      _
    $region19: #{dilated_cnn_forward.1} parent=1 // pred_check_branch
      %69 = sbr.rel (0) target = $region21
    $region20: #{dilated_cnn_forward.1} parent=1 // pred_region
      %s71 = ssub.s32 48, 48
      %72 = vsyncadd [#allocation10], %s71
      %s73 = sshll.u32 [#allocation11], 4
      %s74 = int_to_ptr.vmem [resolvable:$true] %s73
      %79 = dma.hbm_to_vmem [thread:$0]  %s4, 48, %s74, [#allocation10], 16, 16, 1
    $region21: #{dilated_cnn_forward.1} parent=1 // pred_fallthru
      _
    // Predicated region
    $region22: #{dilated_cnn_forward.1} parent=1 // pred_check
      _
    $region23: #{dilated_cnn_forward.1} parent=1 // pred_check_branch
      %81 = sbr.rel (0) target = $region25
    $region24: #{dilated_cnn_forward.1} parent=1 // pred_region
      %s83 = ssub.s32 192, 192
      %84 = vsyncadd [#allocation13], %s83
      %s85 = sshll.u32 [#allocation12], 4
      %s86 = int_to_ptr.vmem [resolvable:$true] %s85
      %91 = dma.hbm_to_vmem [thread:$0]  %s5, 192, %s86, [#allocation13], 64, 64, 4
    $region25: #{dilated_cnn_forward.1} parent=1 // pred_fallthru
      _
    // Predicated region
    $region26: #{dilated_cnn_forward.1} parent=1 // pred_check
      _
    $region27: #{dilated_cnn_forward.1} parent=1 // pred_check_branch
      %93 = sbr.rel (0) target = $region29
    $region28: #{dilated_cnn_forward.1} parent=1 // pred_region
      %s95 = ssub.s32 64, 64
      %96 = vsyncadd [#allocation13], %s95
      %s98 = sshll.u32 [#allocation14], 4
      %s99 = int_to_ptr.vmem [resolvable:$true] %s98
      %101 = dma.hbm_to_vmem [thread:$0]  %s6, 64, %s99, [#allocation13]
    $region29: #{dilated_cnn_forward.1} parent=1 // pred_fallthru
      _
    // Predicated region
    $region30: #{dilated_cnn_forward.1} parent=1 // pred_check
      _
    $region31: #{dilated_cnn_forward.1} parent=1 // pred_check_branch
      %103 = sbr.rel (0) target = $region33
    $region32: #{dilated_cnn_forward.1} parent=1 // pred_region
      %s105 = ssub.s32 16, 16
      %106 = vsyncadd [#allocation16], %s105
      %s108 = sshll.u32 [#allocation15], 4
      %s109 = int_to_ptr.vmem [resolvable:$true] %s108
      %111 = dma.hbm_to_vmem [thread:$0]  %s7, 16, %s109, [#allocation16]
    $region33: #{dilated_cnn_forward.1} parent=1 // pred_fallthru
      _
    // Predicated region
    $region34: #{dilated_cnn_forward.1} parent=1 // pred_check
      _
    $region35: #{dilated_cnn_forward.1} parent=1 // pred_check_branch
      %113 = sbr.rel (0) target = $region37
    $region36: #{dilated_cnn_forward.1} parent=1 // pred_region
      %s115 = ssub.s32 128, 128
      %116 = vsyncadd [#allocation16], %s115
      %s117 = sshll.u32 [#allocation17], 4
      %s118 = int_to_ptr.vmem [resolvable:$true] %s117
      %123 = dma.hbm_to_vmem [thread:$0]  %s8, 128, %s118, [#allocation16], 64, 64, 4
    $region37: #{dilated_cnn_forward.1} parent=1 // pred_fallthru
      _
    // Predicated region
    $region38: #{dilated_cnn_forward.1} parent=1 // pred_check
      _
    $region39: #{dilated_cnn_forward.1} parent=1 // pred_check_branch
      %125 = sbr.rel (0) target = $region41
    $region40: #{dilated_cnn_forward.1} parent=1 // pred_region
      %s127 = ssub.s32 16, 16
      %128 = vsyncadd [#allocation19], %s127
      %s130 = sshll.u32 [#allocation18], 4
      %s131 = int_to_ptr.vmem [resolvable:$true] %s130
      %133 = dma.hbm_to_vmem [thread:$0]  %s9, 16, %s131, [#allocation19]
    $region41: #{dilated_cnn_forward.1} parent=1 // pred_fallthru
      _
    // Predicated region
    $region42: #{dilated_cnn_forward.1} parent=1 // pred_check
      _
    $region43: #{dilated_cnn_forward.1} parent=1 // pred_check_branch
      %135 = sbr.rel (0) target = $region45
    $region44: #{dilated_cnn_forward.1} parent=1 // pred_region
      %136 = dma.done [#allocation4], 1024
    $region45: #{dilated_cnn_forward.1} parent=1 // pred_fallthru
      _
    // Predicated region
    $region46: #{dilated_cnn_forward.1} parent=1 // pred_check
      _
    $region47: #{dilated_cnn_forward.1} parent=1 // pred_check_branch
      %138 = sbr.rel (0) target = $region49
    $region48: #{dilated_cnn_forward.1} parent=1 // pred_region
      %139 = dma.done [#allocation7], 128
    $region49: #{dilated_cnn_forward.1} parent=1 // pred_fallthru
      _
    // Predicated region
    $region50: #{dilated_cnn_forward.1} parent=1 // pred_check
      _
    $region51: #{dilated_cnn_forward.1} parent=1 // pred_check_branch
      %141 = sbr.rel (0) target = $region53
    $region52: #{dilated_cnn_forward.1} parent=1 // pred_region
      %142 = dma.done [#allocation7], 16
    $region53: #{dilated_cnn_forward.1} parent=1 // pred_fallthru
      _
    // Predicated region
    $region54: #{dilated_cnn_forward.1} parent=1 // pred_check
      _
    $region55: #{dilated_cnn_forward.1} parent=1 // pred_check_branch
      %144 = sbr.rel (0) target = $region57
    $region56: #{dilated_cnn_forward.1} parent=1 // pred_region
      %145 = dma.done [#allocation10], 1344
    $region57: #{dilated_cnn_forward.1} parent=1 // pred_fallthru
      _
    // Predicated region
    $region58: #{dilated_cnn_forward.1} parent=1 // pred_check
      _
    $region59: #{dilated_cnn_forward.1} parent=1 // pred_check_branch
      %147 = sbr.rel (0) target = $region61
    $region60: #{dilated_cnn_forward.1} parent=1 // pred_region
      %148 = dma.done [#allocation10], 48
    $region61: #{dilated_cnn_forward.1} parent=1 // pred_fallthru
      _
    // Predicated region
    $region62: #{dilated_cnn_forward.1} parent=1 // pred_check
      _
    $region63: #{dilated_cnn_forward.1} parent=1 // pred_check_branch
      %150 = sbr.rel (0) target = $region65
    $region64: #{dilated_cnn_forward.1} parent=1 // pred_region
      %151 = dma.done [#allocation13], 192
    $region65: #{dilated_cnn_forward.1} parent=1 // pred_fallthru
      _
    // Predicated region
    $region66: #{dilated_cnn_forward.1} parent=1 // pred_check
      _
    $region67: #{dilated_cnn_forward.1} parent=1 // pred_check_branch
      %153 = sbr.rel (0) target = $region69
    $region68: #{dilated_cnn_forward.1} parent=1 // pred_region
      %154 = dma.done [#allocation13], 64
    $region69: #{dilated_cnn_forward.1} parent=1 // pred_fallthru
      _
    // Predicated region
    $region70: #{dilated_cnn_forward.1} parent=1 // pred_check
      _
    $region71: #{dilated_cnn_forward.1} parent=1 // pred_check_branch
      %156 = sbr.rel (0) target = $region73
    $region72: #{dilated_cnn_forward.1} parent=1 // pred_region
      %157 = dma.done [#allocation16], 16
    $region73: #{dilated_cnn_forward.1} parent=1 // pred_fallthru
      _
    // Predicated region
    $region74: #{dilated_cnn_forward.1} parent=1 // pred_check
      _
    $region75: #{dilated_cnn_forward.1} parent=1 // pred_check_branch
      %159 = sbr.rel (0) target = $region77
    $region76: #{dilated_cnn_forward.1} parent=1 // pred_region
      %160 = dma.done [#allocation16], 128
    $region77: #{dilated_cnn_forward.1} parent=1 // pred_fallthru
      _
    // Predicated region
    $region78: #{dilated_cnn_forward.1} parent=1 // pred_check
      _
    $region79: #{dilated_cnn_forward.1} parent=1 // pred_check_branch
      %162 = sbr.rel (0) target = $region81
    $region80: #{dilated_cnn_forward.1} parent=1 // pred_region
      %163 = dma.done [#allocation19], 16
    $region81: #{dilated_cnn_forward.1} parent=1 // pred_fallthru
      _
    %v165 = vld [vmem:[#allocation3] sm:$0xf]
    %v166 = vld [vmem:[#allocation3 + $0x4] sm:$0xf]
    %v167 = vld [vmem:[#allocation3 + $0x8] sm:$0xf]
    %v168 = vld [vmem:[#allocation3 + $0xc] sm:$0xf]
    %v169 = vld [vmem:[#allocation3 + $0x10] sm:$0xf]
    %v170 = vld [vmem:[#allocation3 + $0x14] sm:$0xf]
    %v171 = vld [vmem:[#allocation3 + $0x18] sm:$0xf]
    %v172 = vld [vmem:[#allocation3 + $0x1c] sm:$0xf]
    %v173 = vld [vmem:[#allocation3 + $0x20] sm:$0xf]
    %v174 = vld [vmem:[#allocation3 + $0x24] sm:$0xf]
    %v175 = vld [vmem:[#allocation3 + $0x28] sm:$0xf]
    %v176 = vld [vmem:[#allocation3 + $0x2c] sm:$0xf]
    %v177 = vld [vmem:[#allocation3 + $0x30] sm:$0xf]
    %v178 = vld [vmem:[#allocation3 + $0x34] sm:$0xf]
    %v179 = vld [vmem:[#allocation3 + $0x38] sm:$0xf]
    %v180 = vld [vmem:[#allocation3 + $0x3c] sm:$0xf]
    %v181 = vld [vmem:[#allocation6] sm:$0xf]
    %v182 = vld [vmem:[#allocation6 + $0x4] sm:$0xf]
    %v183 = vld [vmem:[#allocation8] sm:$0x1]
    %v185 = vlaneseq
    %v186 = vshrl.u32 %v185, 7
    %v187 = vsub.s32 0, %v186
    %v188 = vrot.slane %v183, %v187
    %v206 = vunpack.c.l.b16 %v165
    %v207 = vunpack.c.l.b16 %v166
    %v208 = vunpack.c.l.b16 %v167
    %v209 = vunpack.c.l.b16 %v168
    %v210 = vunpack.c.l.b16 %v169
    %v211 = vunpack.c.l.b16 %v170
    %v212 = vunpack.c.l.b16 %v171
    %v213 = vunpack.c.l.b16 %v172
    %v214 = vunpack.c.l.b16 %v173
    %v215 = vunpack.c.l.b16 %v174
    %v216 = vunpack.c.l.b16 %v175
    %v217 = vunpack.c.l.b16 %v176
    %v218 = vunpack.c.l.b16 %v177
    %v219 = vunpack.c.l.b16 %v178
    %v220 = vunpack.c.l.b16 %v179
    %v221 = vunpack.c.l.b16 %v180
    %v222 = vpack.c.b16 %v207, %v206
    %v223 = vpack.c.b16 %v209, %v208
    %v224 = vpack.c.b16 %v211, %v210
    %v225 = vpack.c.b16 %v213, %v212
    %v226 = vpack.c.b16 %v215, %v214
    %v227 = vpack.c.b16 %v217, %v216
    %v228 = vpack.c.b16 %v219, %v218
    %v229 = vpack.c.b16 %v221, %v220
    %v232 = vunpack.c.l.b16 %v181
    %v233 = vunpack.c.l.b16 %v182
    %v234 = vpack.c.b16 %v233, %v232
    %vm236 = vcmask 130048
    %v238 = vsel %vm236, %v222, 0
    %v241 = vsel %vm236, %v223, 0
    %v244 = vsel %vm236, %v224, 0
    %v247 = vsel %vm236, %v225, 0
    %v250 = vsel %vm236, %v226, 0
    %v253 = vsel %vm236, %v227, 0
    %v256 = vsel %vm236, %v228, 0
    %v259 = vsel %vm236, %v229, 0
    %261 = vmatprep.subr.bf16.mxu0 0
    %262 = vmatpush1.bf16.msra.mxu0 %v234
    %263 = vmatprep.subr.bf16.mxu0 0
    %264 = vmatpush1.bf16.msra.mxu0 0
    %265 = vmatprep.subr.bf16.mxu0 0
    %266 = vmatpush1.bf16.msra.mxu0 0
    %267 = vmatprep.subr.bf16.mxu0 0
    %268 = vmatpush1.bf16.msra.mxu0 0
    %269 = vmatprep.subr.bf16.mxu0 0
    %270 = vmatpush1.bf16.msra.mxu0 0
    %271 = vmatprep.subr.bf16.mxu0 0
    %272 = vmatpush1.bf16.msra.mxu0 0
    %273 = vmatprep.subr.bf16.mxu0 0
    %274 = vmatpush1.bf16.msra.mxu0 0
    %275 = vmatprep.subr.bf16.mxu0 0
    %276 = vmatpush1.bf16.msra.mxu0 0
    %277 = vmatprep.subr.bf16.mxu0 0
    %278 = vmatpush1.bf16.msra.mxu0 0
    %279 = vmatprep.subr.bf16.mxu0 0
    %280 = vmatpush1.bf16.msra.mxu0 0
    %281 = vmatprep.subr.bf16.mxu0 0
    %282 = vmatpush1.bf16.msra.mxu0 0
    %283 = vmatprep.subr.bf16.mxu0 0
    %284 = vmatpush1.bf16.msra.mxu0 0
    %285 = vmatprep.subr.bf16.mxu0 0
    %286 = vmatpush1.bf16.msra.mxu0 0
    %287 = vmatprep.subr.bf16.mxu0 0
    %288 = vmatpush1.bf16.msra.mxu0 0
    %289 = vmatprep.subr.bf16.mxu0 0
    %290 = vmatpush1.bf16.msra.mxu0 0
    %291 = vmatprep.subr.bf16.mxu0 0
    %292 = vmatpush1.bf16.msra.mxu0 0
    %293 = vmatprep.mubr.bf16.mxu0 0
    %294 = vmatmul.mubr.bf16.gmra.mrb[0].mxu0 %v238
    %v295 = vpop.f32.mrb[0].mxu0
    %v296 = vadd.f32 %v188, %v295
    %v297 = vpop.f32.mrb[0].mxu0
    %v298 = vpop.f32.mrb[0].mxu0
    %v299 = vadd.f32 %v188, %v298
    %v300 = vpop.f32.mrb[0].mxu0
    %301 = vmatprep.mubr.bf16.mxu0 0
    %302 = vmatmul.mubr.bf16.gmra.mrb[0].mxu0 %v241
    %v303 = vpop.f32.mrb[0].mxu0
    %v304 = vadd.f32 %v188, %v303
    %v305 = vpop.f32.mrb[0].mxu0
    %v306 = vpop.f32.mrb[0].mxu0
    %v307 = vadd.f32 %v188, %v306
    %v308 = vpop.f32.mrb[0].mxu0
    %309 = vmatprep.mubr.bf16.mxu0 0
    %310 = vmatmul.mubr.bf16.gmra.mrb[0].mxu0 %v244
    %v311 = vpop.f32.mrb[0].mxu0
    %v312 = vadd.f32 %v188, %v311
    %v313 = vpop.f32.mrb[0].mxu0
    %v314 = vpop.f32.mrb[0].mxu0
    %v315 = vadd.f32 %v188, %v314
    %v316 = vpop.f32.mrb[0].mxu0
    %317 = vmatprep.mubr.bf16.mxu0 0
    %318 = vmatmul.mubr.bf16.gmra.mrb[0].mxu0 %v247
    %v319 = vpop.f32.mrb[0].mxu0
    %v320 = vadd.f32 %v188, %v319
    %v321 = vpop.f32.mrb[0].mxu0
    %v322 = vpop.f32.mrb[0].mxu0
    %v323 = vadd.f32 %v188, %v322
    %v324 = vpop.f32.mrb[0].mxu0
    %325 = vmatprep.mubr.bf16.mxu0 0
    %326 = vmatmul.mubr.bf16.gmra.mrb[0].mxu0 %v250
    %v327 = vpop.f32.mrb[0].mxu0
    %v328 = vadd.f32 %v188, %v327
    %v329 = vpop.f32.mrb[0].mxu0
    %v330 = vpop.f32.mrb[0].mxu0
    %v331 = vadd.f32 %v188, %v330
    %v332 = vpop.f32.mrb[0].mxu0
    %333 = vmatprep.mubr.bf16.mxu0 0
    %334 = vmatmul.mubr.bf16.gmra.mrb[0].mxu0 %v253
    %v335 = vpop.f32.mrb[0].mxu0
    %v336 = vadd.f32 %v188, %v335
    %v337 = vpop.f32.mrb[0].mxu0
    %v338 = vpop.f32.mrb[0].mxu0
    %v339 = vadd.f32 %v188, %v338
    %v340 = vpop.f32.mrb[0].mxu0
    %341 = vmatprep.mubr.bf16.mxu0 0
    %342 = vmatmul.mubr.bf16.gmra.mrb[0].mxu0 %v256
    %v343 = vpop.f32.mrb[0].mxu0
    %v344 = vadd.f32 %v188, %v343
    %v345 = vpop.f32.mrb[0].mxu0
    %v346 = vpop.f32.mrb[0].mxu0
    %v347 = vadd.f32 %v188, %v346
    %v348 = vpop.f32.mrb[0].mxu0
    %349 = vmatprep.mubr.bf16.mxu0 0
    %350 = vmatmul.mubr.bf16.gmra.mrb[0].mxu0 %v259
    %v351 = vpop.f32.mrb[0].mxu0
    %v352 = vadd.f32 %v188, %v351
    %v353 = vpop.f32.mrb[0].mxu0
    %v354 = vpop.f32.mrb[0].mxu0
    %v355 = vadd.f32 %v188, %v354
    %v356 = vpop.f32.mrb[0].mxu0
    %357 = vdwg.mxu0
    %v358 = vpack.c.bf16 %v299, %v296
    %v359 = vpack.c.bf16 %v307, %v304
    %v360 = vpack.c.bf16 %v315, %v312
    %v361 = vpack.c.bf16 %v323, %v320
    %v362 = vpack.c.bf16 %v331, %v328
    %v363 = vpack.c.bf16 %v339, %v336
    %v364 = vpack.c.bf16 %v347, %v344
    %v365 = vpack.c.bf16 %v355, %v352
    %vm366 = vcmask 60416
    %367 = vst.msk [vmem:[#allocation2] sm:$0xf] %vm366, 0
    %vm368 = vcmask 58368
    %369 = vst.msk [vmem:[#allocation2 + $0x4] sm:$0x3] %vm368, 0
    %370 = vst.msk [vmem:[#allocation2 + $0x1c] sm:$0xf] %vm366, 0
    %371 = vst.msk [vmem:[#allocation2 + $0x20] sm:$0x3] %vm368, 0
    %372 = vst.msk [vmem:[#allocation2 + $0x38] sm:$0xf] %vm366, 0
    %373 = vst.msk [vmem:[#allocation2 + $0x3c] sm:$0x3] %vm368, 0
    %374 = vst.msk [vmem:[#allocation2 + $0x54] sm:$0xf] %vm366, 0
    %375 = vst.msk [vmem:[#allocation2 + $0x58] sm:$0x3] %vm368, 0
    %vm376 = vcmask 60418
    %377 = vst.msk [vmem:[#allocation2 + $0x14] sm:$0xc] %vm376, 0
    %378 = vst.msk [vmem:[#allocation2 + $0x18] sm:$0xf] %vm366, 0
    %379 = vst.msk [vmem:[#allocation2 + $0x30] sm:$0xc] %vm376, 0
    %380 = vst.msk [vmem:[#allocation2 + $0x34] sm:$0xf] %vm366, 0
    %381 = vst.msk [vmem:[#allocation2 + $0x4c] sm:$0xc] %vm376, 0
    %382 = vst.msk [vmem:[#allocation2 + $0x50] sm:$0xf] %vm366, 0
    %383 = vst.msk [vmem:[#allocation2 + $0x68] sm:$0xc] %vm376, 0
    %384 = vst.msk [vmem:[#allocation2 + $0x6c] sm:$0xf] %vm366, 0
    %v393 = vunpack.c.l.b16 %v358
    %v394 = vunpack.c.h.b16 %v358
    %v395 = vunpack.c.l.b16 %v359
    %v396 = vunpack.c.h.b16 %v359
    %v397 = vunpack.c.l.b16 %v360
    %v398 = vunpack.c.h.b16 %v360
    %v399 = vunpack.c.l.b16 %v361
    %v400 = vunpack.c.h.b16 %v361
    %v401 = vunpack.c.l.b16 %v362
    %v402 = vunpack.c.h.b16 %v362
    %v403 = vunpack.c.l.b16 %v363
    %v404 = vunpack.c.h.b16 %v363
    %v405 = vunpack.c.l.b16 %v364
    %v406 = vunpack.c.h.b16 %v364
    %v407 = vunpack.c.l.b16 %v365
    %v408 = vunpack.c.h.b16 %v365
    %v409 = vpack.c.b16 %v393, %v393
    %v410 = vpack.c.b16 %v394, %v394
    %v411 = vpack.c.b16 %v395, %v395
    %v412 = vpack.c.b16 %v396, %v396
    %v413 = vpack.c.b16 %v397, %v397
    %v414 = vpack.c.b16 %v398, %v398
    %v415 = vpack.c.b16 %v399, %v399
    %v416 = vpack.c.b16 %v400, %v400
    %v417 = vpack.c.b16 %v401, %v401
    %v418 = vpack.c.b16 %v402, %v402
    %v419 = vpack.c.b16 %v403, %v403
    %v420 = vpack.c.b16 %v404, %v404
    %v421 = vpack.c.b16 %v405, %v405
    %v422 = vpack.c.b16 %v406, %v406
    %v423 = vpack.c.b16 %v407, %v407
    %v424 = vpack.c.b16 %v408, %v408
    %vm425 = vcmask 1041408
    %vm426 = vcmask 1045508
    %vm427 = vmor %vm425, %vm426
    %v428 = vrot.slane %v409, 6
    %v429 = vrot.slane %v428, 4
    %v430 = vrot.slane %v410, 6
    %v431 = vsel %vm427, %v429, %v430
    %v432 = vrot.slane %v430, 4
    %v433 = vrot.slane %v411, 6
    %v434 = vsel %vm427, %v432, %v433
    %v435 = vrot.slane %v433, 4
    %v436 = vrot.slane %v412, 6
    %v437 = vsel %vm427, %v435, %v436
    %v438 = vrot.slane %v436, 4
    %v439 = vrot.slane %v413, 6
    %v440 = vrot.slane %v439, 4
    %v441 = vrot.slane %v414, 6
    %v442 = vsel %vm427, %v440, %v441
    %v443 = vrot.slane %v441, 4
    %v444 = vrot.slane %v415, 6
    %v445 = vsel %vm427, %v443, %v444
    %v446 = vrot.slane %v444, 4
    %v447 = vrot.slane %v416, 6
    %v448 = vsel %vm427, %v446, %v447
    %v449 = vrot.slane %v447, 4
    %v450 = vrot.slane %v417, 6
    %v451 = vrot.slane %v450, 4
    %v452 = vrot.slane %v418, 6
    %v453 = vsel %vm427, %v451, %v452
    %v454 = vrot.slane %v452, 4
    %v455 = vrot.slane %v419, 6
    %v456 = vsel %vm427, %v454, %v455
    %v457 = vrot.slane %v455, 4
    %v458 = vrot.slane %v420, 6
    %v459 = vsel %vm427, %v457, %v458
    %v460 = vrot.slane %v458, 4
    %v461 = vrot.slane %v421, 6
    %v462 = vrot.slane %v461, 4
    %v463 = vrot.slane %v422, 6
    %v464 = vsel %vm427, %v462, %v463
    %v465 = vrot.slane %v463, 4
    %v466 = vrot.slane %v423, 6
    %v467 = vsel %vm427, %v465, %v466
    %v468 = vrot.slane %v466, 4
    %v469 = vrot.slane %v424, 6
    %v470 = vsel %vm427, %v468, %v469
    %v471 = vrot.slane %v469, 4
    %492 = vst.msk [vmem:[#allocation2 + $0x4] sm:$0xc] %vm376, %v428
    %493 = vst.msk [vmem:[#allocation2 + $0x8] sm:$0xf] %vm366, %v431
    %494 = vst.msk [vmem:[#allocation2 + $0xc] sm:$0xf] %vm366, %v434
    %495 = vst.msk [vmem:[#allocation2 + $0x10] sm:$0xf] %vm366, %v437
    %496 = vst.msk [vmem:[#allocation2 + $0x14] sm:$0x3] %vm368, %v438
    %497 = vst.msk [vmem:[#allocation2 + $0x20] sm:$0xc] %vm376, %v439
    %498 = vst.msk [vmem:[#allocation2 + $0x24] sm:$0xf] %vm366, %v442
    %499 = vst.msk [vmem:[#allocation2 + $0x28] sm:$0xf] %vm366, %v445
    %500 = vst.msk [vmem:[#allocation2 + $0x2c] sm:$0xf] %vm366, %v448
    %501 = vst.msk [vmem:[#allocation2 + $0x30] sm:$0x3] %vm368, %v449
    %502 = vst.msk [vmem:[#allocation2 + $0x3c] sm:$0xc] %vm376, %v450
    %503 = vst.msk [vmem:[#allocation2 + $0x40] sm:$0xf] %vm366, %v453
    %504 = vst.msk [vmem:[#allocation2 + $0x44] sm:$0xf] %vm366, %v456
    %505 = vst.msk [vmem:[#allocation2 + $0x48] sm:$0xf] %vm366, %v459
    %506 = vst.msk [vmem:[#allocation2 + $0x4c] sm:$0x3] %vm368, %v460
    %507 = vst.msk [vmem:[#allocation2 + $0x58] sm:$0xc] %vm376, %v461
    %508 = vst.msk [vmem:[#allocation2 + $0x5c] sm:$0xf] %vm366, %v464
    %509 = vst.msk [vmem:[#allocation2 + $0x60] sm:$0xf] %vm366, %v467
    %510 = vst.msk [vmem:[#allocation2 + $0x64] sm:$0xf] %vm366, %v470
    %511 = vst.msk [vmem:[#allocation2 + $0x68] sm:$0x3] %vm368, %v471
    %v512 = vld [vmem:[#allocation2 + $0x4] sm:$0xf]
    %v513 = vld [vmem:[#allocation2 + $0x8] sm:$0xf]
    %v514 = vld [vmem:[#allocation2 + $0xc] sm:$0xf]
    %v515 = vld [vmem:[#allocation2 + $0x10] sm:$0xf]
    %v516 = vld [vmem:[#allocation2 + $0x14] sm:$0x1]
    %v517 = vld [vmem:[#allocation2 + $0x20] sm:$0xf]
    %v518 = vld [vmem:[#allocation2 + $0x24] sm:$0xf]
    %v519 = vld [vmem:[#allocation2 + $0x28] sm:$0xf]
    %v520 = vld [vmem:[#allocation2 + $0x2c] sm:$0xf]
    %v521 = vld [vmem:[#allocation2 + $0x30] sm:$0x1]
    %v522 = vld [vmem:[#allocation2 + $0x3c] sm:$0xf]
    %v523 = vld [vmem:[#allocation2 + $0x40] sm:$0xf]
    %v524 = vld [vmem:[#allocation2 + $0x44] sm:$0xf]
    %v525 = vld [vmem:[#allocation2 + $0x48] sm:$0xf]
    %v526 = vld [vmem:[#allocation2 + $0x4c] sm:$0x1]
    %v527 = vld [vmem:[#allocation2 + $0x58] sm:$0xf]
    %v528 = vld [vmem:[#allocation2 + $0x5c] sm:$0xf]
    %v529 = vld [vmem:[#allocation2 + $0x60] sm:$0xf]
    %v530 = vld [vmem:[#allocation2 + $0x64] sm:$0xf]
    %v531 = vld [vmem:[#allocation2 + $0x68] sm:$0x1]
    %vm532 = vsmask.f32 3328
    %vm533 = vsmask.f32 7440
    %vm534 = vmor %vm532, %vm533
    %v536 = vshrl.u32 %v512, 16
    %v538 = vrot.slane %v536, 4
    %v539 = vshll.u32 %v512, 16
    %v541 = vrot.slane %v539, 5
    %v542 = vor.u32 %v538, %v541
    %v543 = vrot.slane %v542, 4
    %v545 = vshll.u32 %v513, 16
    %v547 = vrot.slane %v545, 5
    %v548 = vsel %vm534, %v543, %v547
    %v549 = vshrl.u32 %v513, 16
    %v551 = vrot.slane %v549, 4
    %v552 = vor.u32 %v551, %v547
    %v553 = vrot.slane %v552, 4
    %v555 = vshll.u32 %v514, 16
    %v557 = vrot.slane %v555, 5
    %v558 = vsel %vm534, %v553, %v557
    %v559 = vshrl.u32 %v514, 16
    %v561 = vrot.slane %v559, 4
    %v562 = vor.u32 %v561, %v557
    %v563 = vrot.slane %v562, 4
    %v565 = vshll.u32 %v515, 16
    %v567 = vrot.slane %v565, 5
    %v568 = vsel %vm534, %v563, %v567
    %v569 = vshrl.u32 %v515, 16
    %v571 = vrot.slane %v569, 4
    %v572 = vor.u32 %v571, %v567
    %v573 = vrot.slane %v572, 4
    %v575 = vshll.u32 %v516, 16
    %v577 = vrot.slane %v575, 5
    %v578 = vsel %vm534, %v573, %v577
    %v580 = vshrl.u32 %v517, 16
    %v582 = vrot.slane %v580, 4
    %v583 = vshll.u32 %v517, 16
    %v585 = vrot.slane %v583, 5
    %v586 = vor.u32 %v582, %v585
    %v587 = vrot.slane %v586, 4
    %v589 = vshll.u32 %v518, 16
    %v591 = vrot.slane %v589, 5
    %v592 = vsel %vm534, %v587, %v591
    %v593 = vshrl.u32 %v518, 16
    %v595 = vrot.slane %v593, 4
    %v596 = vor.u32 %v595, %v591
    %v597 = vrot.slane %v596, 4
    %v599 = vshll.u32 %v519, 16
    %v601 = vrot.slane %v599, 5
    %v602 = vsel %vm534, %v597, %v601
    %v603 = vshrl.u32 %v519, 16
    %v605 = vrot.slane %v603, 4
    %v606 = vor.u32 %v605, %v601
    %v607 = vrot.slane %v606, 4
    %v609 = vshll.u32 %v520, 16
    %v611 = vrot.slane %v609, 5
    %v612 = vsel %vm534, %v607, %v611
    %v613 = vshrl.u32 %v520, 16
    %v615 = vrot.slane %v613, 4
    %v616 = vor.u32 %v615, %v611
    %v617 = vrot.slane %v616, 4
    %v619 = vshll.u32 %v521, 16
    %v621 = vrot.slane %v619, 5
    %v622 = vsel %vm534, %v617, %v621
    %v624 = vshrl.u32 %v522, 16
    %v626 = vrot.slane %v624, 4
    %v627 = vshll.u32 %v522, 16
    %v629 = vrot.slane %v627, 5
    %v630 = vor.u32 %v626, %v629
    %v631 = vrot.slane %v630, 4
    %v633 = vshll.u32 %v523, 16
    %v635 = vrot.slane %v633, 5
    %v636 = vsel %vm534, %v631, %v635
    %v637 = vshrl.u32 %v523, 16
    %v639 = vrot.slane %v637, 4
    %v640 = vor.u32 %v639, %v635
    %v641 = vrot.slane %v640, 4
    %v643 = vshll.u32 %v524, 16
    %v645 = vrot.slane %v643, 5
    %v646 = vsel %vm534, %v641, %v645
    %v647 = vshrl.u32 %v524, 16
    %v649 = vrot.slane %v647, 4
    %v650 = vor.u32 %v649, %v645
    %v651 = vrot.slane %v650, 4
    %v653 = vshll.u32 %v525, 16
    %v655 = vrot.slane %v653, 5
    %v656 = vsel %vm534, %v651, %v655
    %v657 = vshrl.u32 %v525, 16
    %v659 = vrot.slane %v657, 4
    %v660 = vor.u32 %v659, %v655
    %v661 = vrot.slane %v660, 4
    %v663 = vshll.u32 %v526, 16
    %v665 = vrot.slane %v663, 5
    %v666 = vsel %vm534, %v661, %v665
    %v668 = vshrl.u32 %v527, 16
    %v670 = vrot.slane %v668, 4
    %v671 = vshll.u32 %v527, 16
    %v673 = vrot.slane %v671, 5
    %v674 = vor.u32 %v670, %v673
    %v675 = vrot.slane %v674, 4
    %v677 = vshll.u32 %v528, 16
    %v679 = vrot.slane %v677, 5
    %v680 = vsel %vm534, %v675, %v679
    %v681 = vshrl.u32 %v528, 16
    %v683 = vrot.slane %v681, 4
    %v684 = vor.u32 %v683, %v679
    %v685 = vrot.slane %v684, 4
    %v687 = vshll.u32 %v529, 16
    %v689 = vrot.slane %v687, 5
    %v690 = vsel %vm534, %v685, %v689
    %v691 = vshrl.u32 %v529, 16
    %v693 = vrot.slane %v691, 4
    %v694 = vor.u32 %v693, %v689
    %v695 = vrot.slane %v694, 4
    %v697 = vshll.u32 %v530, 16
    %v699 = vrot.slane %v697, 5
    %v700 = vsel %vm534, %v695, %v699
    %v701 = vshrl.u32 %v530, 16
    %v703 = vrot.slane %v701, 4
    %v704 = vor.u32 %v703, %v699
    %v705 = vrot.slane %v704, 4
    %v707 = vshll.u32 %v531, 16
    %v709 = vrot.slane %v707, 5
    %v710 = vsel %vm534, %v705, %v709
    %v711 = vld [vmem:[#allocation9] sm:$0xf]
    %v712 = vld [vmem:[#allocation2 + $0x4] sm:$0xe]
    %v713 = vld [vmem:[#allocation2 + $0x20] sm:$0xe]
    %v714 = vld [vmem:[#allocation2 + $0x3c] sm:$0xe]
    %v715 = vld [vmem:[#allocation2 + $0x58] sm:$0xe]
    %vm736 = vcmask 1042432
    %vm737 = vcmask 1046532
    %vm738 = vmor %vm736, %vm737
    %v739 = vrot.slane %v712, 5
    %v740 = vrot.slane %v739, 4
    %v741 = vrot.slane %v513, 5
    %v742 = vsel %vm738, %v740, %v741
    %v743 = vrot.slane %v741, 4
    %v744 = vrot.slane %v514, 5
    %v745 = vsel %vm738, %v743, %v744
    %v746 = vrot.slane %v744, 4
    %v747 = vrot.slane %v515, 5
    %v748 = vsel %vm738, %v746, %v747
    %v749 = vrot.slane %v747, 4
    %v750 = vrot.slane %v516, 5
    %v751 = vsel %vm738, %v749, %v750
    %v752 = vrot.slane %v713, 5
    %v753 = vrot.slane %v752, 4
    %v754 = vrot.slane %v518, 5
    %v755 = vsel %vm738, %v753, %v754
    %v756 = vrot.slane %v754, 4
    %v757 = vrot.slane %v519, 5
    %v758 = vsel %vm738, %v756, %v757
    %v759 = vrot.slane %v757, 4
    %v760 = vrot.slane %v520, 5
    %v761 = vsel %vm738, %v759, %v760
    %v762 = vrot.slane %v760, 4
    %v763 = vrot.slane %v521, 5
    %v764 = vsel %vm738, %v762, %v763
    %v765 = vrot.slane %v714, 5
    %v766 = vrot.slane %v765, 4
    %v767 = vrot.slane %v523, 5
    %v768 = vsel %vm738, %v766, %v767
    %v769 = vrot.slane %v767, 4
    %v770 = vrot.slane %v524, 5
    %v771 = vsel %vm738, %v769, %v770
    %v772 = vrot.slane %v770, 4
    %v773 = vrot.slane %v525, 5
    %v774 = vsel %vm738, %v772, %v773
    %v775 = vrot.slane %v773, 4
    %v776 = vrot.slane %v526, 5
    %v777 = vsel %vm738, %v775, %v776
    %v778 = vrot.slane %v715, 5
    %v779 = vrot.slane %v778, 4
    %v780 = vrot.slane %v528, 5
    %v781 = vsel %vm738, %v779, %v780
    %v782 = vrot.slane %v780, 4
    %v783 = vrot.slane %v529, 5
    %v784 = vsel %vm738, %v782, %v783
    %v785 = vrot.slane %v783, 4
    %v786 = vrot.slane %v530, 5
    %v787 = vsel %vm738, %v785, %v786
    %v788 = vrot.slane %v786, 4
    %v789 = vrot.slane %v531, 5
    %v790 = vsel %vm738, %v788, %v789
    %s791 = scalar_lea.vmem [#allocation9], 4
    %v792 = vld [vmem:[%s791] sm:$0xf]
    %v793 = vunpack.c.l.b16 %v742
    %v794 = vunpack.c.l.b16 %v745
    %v795 = vunpack.c.l.b16 %v748
    %v796 = vunpack.c.l.b16 %v751
    %v797 = vunpack.c.l.b16 %v755
    %v798 = vunpack.c.l.b16 %v758
    %v799 = vunpack.c.l.b16 %v761
    %v800 = vunpack.c.l.b16 %v764
    %v801 = vunpack.c.l.b16 %v768
    %v802 = vunpack.c.l.b16 %v771
    %v803 = vunpack.c.l.b16 %v774
    %v804 = vunpack.c.l.b16 %v777
    %v805 = vunpack.c.l.b16 %v781
    %v806 = vunpack.c.l.b16 %v784
    %v807 = vunpack.c.l.b16 %v787
    %v808 = vunpack.c.l.b16 %v790
    %v809 = vpack.c.b16 %v794, %v793
    %v810 = vpack.c.b16 %v796, %v795
    %v811 = vpack.c.b16 %v798, %v797
    %v812 = vpack.c.b16 %v800, %v799
    %v813 = vpack.c.b16 %v802, %v801
    %v814 = vpack.c.b16 %v804, %v803
    %v815 = vpack.c.b16 %v806, %v805
    %v816 = vpack.c.b16 %v808, %v807
    %vm817 = vcmask 64512
    %v819 = vsel %vm817, %v809, 0
    %v822 = vsel %vm817, %v810, 0
    %v825 = vsel %vm817, %v811, 0
    %v828 = vsel %vm817, %v812, 0
    %v831 = vsel %vm817, %v813, 0
    %v834 = vsel %vm817, %v814, 0
    %v837 = vsel %vm817, %v815, 0
    %v840 = vsel %vm817, %v816, 0
    %vm842 = vcmask 1043456
    %v844 = vsel %vm842, %v792, 0
    %846 = vmatprep.subr.bf16.mxu0 0
    %847 = vmatpush1.bf16.msra.mxu0 %v844
    %848 = vmatprep.subr.bf16.mxu0 0
    %849 = vmatpush1.bf16.msra.mxu0 0
    %850 = vmatprep.subr.bf16.mxu0 0
    %851 = vmatpush1.bf16.msra.mxu0 0
    %852 = vmatprep.subr.bf16.mxu0 0
    %853 = vmatpush1.bf16.msra.mxu0 0
    %854 = vmatprep.subr.bf16.mxu0 0
    %855 = vmatpush1.bf16.msra.mxu0 0
    %856 = vmatprep.subr.bf16.mxu0 0
    %857 = vmatpush1.bf16.msra.mxu0 0
    %858 = vmatprep.subr.bf16.mxu0 0
    %859 = vmatpush1.bf16.msra.mxu0 0
    %860 = vmatprep.subr.bf16.mxu0 0
    %861 = vmatpush1.bf16.msra.mxu0 0
    %862 = vmatprep.subr.bf16.mxu0 0
    %863 = vmatpush1.bf16.msra.mxu0 0
    %864 = vmatprep.subr.bf16.mxu0 0
    %865 = vmatpush1.bf16.msra.mxu0 0
    %866 = vmatprep.subr.bf16.mxu0 0
    %867 = vmatpush1.bf16.msra.mxu0 0
    %868 = vmatprep.subr.bf16.mxu0 0
    %869 = vmatpush1.bf16.msra.mxu0 0
    %870 = vmatprep.subr.bf16.mxu0 0
    %871 = vmatpush1.bf16.msra.mxu0 0
    %872 = vmatprep.subr.bf16.mxu0 0
    %873 = vmatpush1.bf16.msra.mxu0 0
    %874 = vmatprep.subr.bf16.mxu0 0
    %875 = vmatpush1.bf16.msra.mxu0 0
    %876 = vmatprep.subr.bf16.mxu0 0
    %877 = vmatpush1.bf16.msra.mxu0 0
    %878 = vmatprep.mubr.bf16.mxu0 0
    %879 = vmatmul.mubr.bf16.gmra.mrb[0].mxu0 %v819
    %v880 = vpop.f32.mrb[0].mxu0
    %v881 = vadd.f32 0.0, %v880
    %v882 = vpop.f32.mrb[0].mxu0
    %v883 = vpop.f32.mrb[0].mxu0
    %v884 = vadd.f32 0.0, %v883
    %v885 = vpop.f32.mrb[0].mxu0
    %886 = vmatprep.mubr.bf16.mxu0 0
    %887 = vmatmul.mubr.bf16.gmra.mrb[0].mxu0 %v822
    %v888 = vpop.f32.mrb[0].mxu0
    %v889 = vadd.f32 0.0, %v888
    %v890 = vpop.f32.mrb[0].mxu0
    %v891 = vpop.f32.mrb[0].mxu0
    %v892 = vadd.f32 0.0, %v891
    %v893 = vpop.f32.mrb[0].mxu0
    %894 = vmatprep.mubr.bf16.mxu0 0
    %895 = vmatmul.mubr.bf16.gmra.mrb[0].mxu0 %v825
    %v896 = vpop.f32.mrb[0].mxu0
    %v897 = vadd.f32 0.0, %v896
    %v898 = vpop.f32.mrb[0].mxu0
    %v899 = vpop.f32.mrb[0].mxu0
    %v900 = vadd.f32 0.0, %v899
    %v901 = vpop.f32.mrb[0].mxu0
    %902 = vmatprep.mubr.bf16.mxu0 0
    %903 = vmatmul.mubr.bf16.gmra.mrb[0].mxu0 %v828
    %v904 = vpop.f32.mrb[0].mxu0
    %v905 = vadd.f32 0.0, %v904
    %v906 = vpop.f32.mrb[0].mxu0
    %v907 = vpop.f32.mrb[0].mxu0
    %v908 = vadd.f32 0.0, %v907
    %v909 = vpop.f32.mrb[0].mxu0
    %910 = vmatprep.mubr.bf16.mxu0 0
    %911 = vmatmul.mubr.bf16.gmra.mrb[0].mxu0 %v831
    %v912 = vpop.f32.mrb[0].mxu0
    %v913 = vadd.f32 0.0, %v912
    %v914 = vpop.f32.mrb[0].mxu0
    %v915 = vpop.f32.mrb[0].mxu0
    %v916 = vadd.f32 0.0, %v915
    %v917 = vpop.f32.mrb[0].mxu0
    %918 = vmatprep.mubr.bf16.mxu0 0
    %919 = vmatmul.mubr.bf16.gmra.mrb[0].mxu0 %v834
    %v920 = vpop.f32.mrb[0].mxu0
    %v921 = vadd.f32 0.0, %v920
    %v922 = vpop.f32.mrb[0].mxu0
    %v923 = vpop.f32.mrb[0].mxu0
    %v924 = vadd.f32 0.0, %v923
    %v925 = vpop.f32.mrb[0].mxu0
    %926 = vmatprep.mubr.bf16.mxu0 0
    %927 = vmatmul.mubr.bf16.gmra.mrb[0].mxu0 %v837
    %v928 = vpop.f32.mrb[0].mxu0
    %v929 = vadd.f32 0.0, %v928
    %v930 = vpop.f32.mrb[0].mxu0
    %v931 = vpop.f32.mrb[0].mxu0
    %v932 = vadd.f32 0.0, %v931
    %v933 = vpop.f32.mrb[0].mxu0
    %934 = vmatprep.mubr.bf16.mxu0 0
    %935 = vmatmul.mubr.bf16.gmra.mrb[0].mxu0 %v840
    %v936 = vpop.f32.mrb[0].mxu0
    %v937 = vadd.f32 0.0, %v936
    %v938 = vpop.f32.mrb[0].mxu0
    %v939 = vpop.f32.mrb[0].mxu0
    %v940 = vadd.f32 0.0, %v939
    %v941 = vpop.f32.mrb[0].mxu0
    %942 = vdwg.mxu0
    %v943 = vunpack.c.l.b16 %v548
    %v944 = vunpack.c.l.b16 %v558
    %v945 = vunpack.c.l.b16 %v568
    %v946 = vunpack.c.l.b16 %v578
    %v947 = vunpack.c.l.b16 %v592
    %v948 = vunpack.c.l.b16 %v602
    %v949 = vunpack.c.l.b16 %v612
    %v950 = vunpack.c.l.b16 %v622
    %v951 = vunpack.c.l.b16 %v636
    %v952 = vunpack.c.l.b16 %v646
    %v953 = vunpack.c.l.b16 %v656
    %v954 = vunpack.c.l.b16 %v666
    %v955 = vunpack.c.l.b16 %v680
    %v956 = vunpack.c.l.b16 %v690
    %v957 = vunpack.c.l.b16 %v700
    %v958 = vunpack.c.l.b16 %v710
    %v959 = vpack.c.b16 %v944, %v943
    %v960 = vpack.c.b16 %v946, %v945
    %v961 = vpack.c.b16 %v948, %v947
    %v962 = vpack.c.b16 %v950, %v949
    %v963 = vpack.c.b16 %v952, %v951
    %v964 = vpack.c.b16 %v954, %v953
    %v965 = vpack.c.b16 %v956, %v955
    %v966 = vpack.c.b16 %v958, %v957
    %v968 = vsel %vm817, %v959, 0
    %v971 = vsel %vm817, %v960, 0
    %v974 = vsel %vm817, %v961, 0
    %v977 = vsel %vm817, %v962, 0
    %v980 = vsel %vm817, %v963, 0
    %v983 = vsel %vm817, %v964, 0
    %v986 = vsel %vm817, %v965, 0
    %v989 = vsel %vm817, %v966, 0
    %v992 = vsel %vm842, %v711, 0
    %994 = vmatprep.subr.bf16.mxu0 0
    %995 = vmatpush1.bf16.msra.mxu0 %v992
    %996 = vmatprep.subr.bf16.mxu0 0
    %997 = vmatpush1.bf16.msra.mxu0 0
    %998 = vmatprep.subr.bf16.mxu0 0
    %999 = vmatpush1.bf16.msra.mxu0 0
    %1000 = vmatprep.subr.bf16.mxu0 0
    %1001 = vmatpush1.bf16.msra.mxu0 0
    %1002 = vmatprep.subr.bf16.mxu0 0
    %1003 = vmatpush1.bf16.msra.mxu0 0
    %1004 = vmatprep.subr.bf16.mxu0 0
    %1005 = vmatpush1.bf16.msra.mxu0 0
    %1006 = vmatprep.subr.bf16.mxu0 0
    %1007 = vmatpush1.bf16.msra.mxu0 0
    %1008 = vmatprep.subr.bf16.mxu0 0
    %1009 = vmatpush1.bf16.msra.mxu0 0
    %1010 = vmatprep.subr.bf16.mxu0 0
    %1011 = vmatpush1.bf16.msra.mxu0 0
    %1012 = vmatprep.subr.bf16.mxu0 0
    %1013 = vmatpush1.bf16.msra.mxu0 0
    %1014 = vmatprep.subr.bf16.mxu0 0
    %1015 = vmatpush1.bf16.msra.mxu0 0
    %1016 = vmatprep.subr.bf16.mxu0 0
    %1017 = vmatpush1.bf16.msra.mxu0 0
    %1018 = vmatprep.subr.bf16.mxu0 0
    %1019 = vmatpush1.bf16.msra.mxu0 0
    %1020 = vmatprep.subr.bf16.mxu0 0
    %1021 = vmatpush1.bf16.msra.mxu0 0
    %1022 = vmatprep.subr.bf16.mxu0 0
    %1023 = vmatpush1.bf16.msra.mxu0 0
    %1024 = vmatprep.subr.bf16.mxu0 0
    %1025 = vmatpush1.bf16.msra.mxu0 0
    %1026 = vmatprep.mubr.bf16.mxu0 0
    %1027 = vmatmul.mubr.bf16.gmra.mrb[0].mxu0 %v968
    %v1028 = vpop.f32.mrb[0].mxu0
    %v1029 = vadd.f32 %v881, %v1028
    %v1030 = vpop.f32.mrb[0].mxu0
    %v1031 = vpop.f32.mrb[0].mxu0
    %v1032 = vadd.f32 %v884, %v1031
    %v1033 = vpop.f32.mrb[0].mxu0
    %1034 = vmatprep.mubr.bf16.mxu0 0
    %1035 = vmatmul.mubr.bf16.gmra.mrb[0].mxu0 %v971
    %v1036 = vpop.f32.mrb[0].mxu0
    %v1037 = vadd.f32 %v889, %v1036
    %v1038 = vpop.f32.mrb[0].mxu0
    %v1039 = vpop.f32.mrb[0].mxu0
    %v1040 = vadd.f32 %v892, %v1039
    %v1041 = vpop.f32.mrb[0].mxu0
    %1042 = vmatprep.mubr.bf16.mxu0 0
    %1043 = vmatmul.mubr.bf16.gmra.mrb[0].mxu0 %v974
    %v1044 = vpop.f32.mrb[0].mxu0
    %v1045 = vadd.f32 %v897, %v1044
    %v1046 = vpop.f32.mrb[0].mxu0
    %v1047 = vpop.f32.mrb[0].mxu0
    %v1048 = vadd.f32 %v900, %v1047
    %v1049 = vpop.f32.mrb[0].mxu0
    %1050 = vmatprep.mubr.bf16.mxu0 0
    %1051 = vmatmul.mubr.bf16.gmra.mrb[0].mxu0 %v977
    %v1052 = vpop.f32.mrb[0].mxu0
    %v1053 = vadd.f32 %v905, %v1052
    %v1054 = vpop.f32.mrb[0].mxu0
    %v1055 = vpop.f32.mrb[0].mxu0
    %v1056 = vadd.f32 %v908, %v1055
    %v1057 = vpop.f32.mrb[0].mxu0
    %1058 = vmatprep.mubr.bf16.mxu0 0
    %1059 = vmatmul.mubr.bf16.gmra.mrb[0].mxu0 %v980
    %v1060 = vpop.f32.mrb[0].mxu0
    %v1061 = vadd.f32 %v913, %v1060
    %v1062 = vpop.f32.mrb[0].mxu0
    %v1063 = vpop.f32.mrb[0].mxu0
    %v1064 = vadd.f32 %v916, %v1063
    %v1065 = vpop.f32.mrb[0].mxu0
    %1066 = vmatprep.mubr.bf16.mxu0 0
    %1067 = vmatmul.mubr.bf16.gmra.mrb[0].mxu0 %v983
    %v1068 = vpop.f32.mrb[0].mxu0
    %v1069 = vadd.f32 %v921, %v1068
    %v1070 = vpop.f32.mrb[0].mxu0
    %v1071 = vpop.f32.mrb[0].mxu0
    %v1072 = vadd.f32 %v924, %v1071
    %v1073 = vpop.f32.mrb[0].mxu0
    %1074 = vmatprep.mubr.bf16.mxu0 0
    %1075 = vmatmul.mubr.bf16.gmra.mrb[0].mxu0 %v986
    %v1076 = vpop.f32.mrb[0].mxu0
    %v1077 = vadd.f32 %v929, %v1076
    %v1078 = vpop.f32.mrb[0].mxu0
    %v1079 = vpop.f32.mrb[0].mxu0
    %v1080 = vadd.f32 %v932, %v1079
    %v1081 = vpop.f32.mrb[0].mxu0
    %1082 = vmatprep.mubr.bf16.mxu0 0
    %1083 = vmatmul.mubr.bf16.gmra.mrb[0].mxu0 %v989
    %v1084 = vpop.f32.mrb[0].mxu0
    %v1085 = vadd.f32 %v937, %v1084
    %v1086 = vpop.f32.mrb[0].mxu0
    %v1087 = vpop.f32.mrb[0].mxu0
    %v1088 = vadd.f32 %v940, %v1087
    %v1089 = vpop.f32.mrb[0].mxu0
    %1090 = vdwg.mxu0
    %v1091 = vld [vmem:[#allocation2 + $0x14] sm:$0x3]
    %v1092 = vld [vmem:[#allocation2 + $0x30] sm:$0x3]
    %v1093 = vld [vmem:[#allocation2 + $0x4c] sm:$0x3]
    %v1094 = vld [vmem:[#allocation2 + $0x68] sm:$0x3]
    %vm1095 = vsmask.f32 2304
    %vm1096 = vsmask.f32 6416
    %vm1097 = vmor %vm1095, %vm1096
    %v1099 = vshrl.u32 %v712, 16
    %v1101 = vrot.slane %v1099, 5
    %v1102 = vshll.u32 %v712, 16
    %v1104 = vrot.slane %v1102, 6
    %v1105 = vor.u32 %v1101, %v1104
    %v1106 = vrot.slane %v1105, 4
    %v1107 = vrot.slane %v549, 5
    %v1108 = vrot.slane %v545, 6
    %v1109 = vor.u32 %v1107, %v1108
    %v1110 = vsel %vm1097, %v1106, %v1109
    %v1111 = vrot.slane %v1109, 4
    %v1112 = vrot.slane %v559, 5
    %v1113 = vrot.slane %v555, 6
    %v1114 = vor.u32 %v1112, %v1113
    %v1115 = vsel %vm1097, %v1111, %v1114
    %v1116 = vrot.slane %v1114, 4
    %v1117 = vrot.slane %v569, 5
    %v1118 = vrot.slane %v565, 6
    %v1119 = vor.u32 %v1117, %v1118
    %v1120 = vsel %vm1097, %v1116, %v1119
    %v1121 = vrot.slane %v1119, 4
    %v1123 = vshrl.u32 %v1091, 16
    %v1125 = vrot.slane %v1123, 5
    %v1126 = vshll.u32 %v1091, 16
    %v1128 = vrot.slane %v1126, 6
    %v1129 = vor.u32 %v1125, %v1128
    %v1130 = vsel %vm1097, %v1121, %v1129
    %v1132 = vshrl.u32 %v713, 16
    %v1134 = vrot.slane %v1132, 5
    %v1135 = vshll.u32 %v713, 16
    %v1137 = vrot.slane %v1135, 6
    %v1138 = vor.u32 %v1134, %v1137
    %v1139 = vrot.slane %v1138, 4
    %v1140 = vrot.slane %v593, 5
    %v1141 = vrot.slane %v589, 6
    %v1142 = vor.u32 %v1140, %v1141
    %v1143 = vsel %vm1097, %v1139, %v1142
    %v1144 = vrot.slane %v1142, 4
    %v1145 = vrot.slane %v603, 5
    %v1146 = vrot.slane %v599, 6
    %v1147 = vor.u32 %v1145, %v1146
    %v1148 = vsel %vm1097, %v1144, %v1147
    %v1149 = vrot.slane %v1147, 4
    %v1150 = vrot.slane %v613, 5
    %v1151 = vrot.slane %v609, 6
    %v1152 = vor.u32 %v1150, %v1151
    %v1153 = vsel %vm1097, %v1149, %v1152
    %v1154 = vrot.slane %v1152, 4
    %v1156 = vshrl.u32 %v1092, 16
    %v1158 = vrot.slane %v1156, 5
    %v1159 = vshll.u32 %v1092, 16
    %v1161 = vrot.slane %v1159, 6
    %v1162 = vor.u32 %v1158, %v1161
    %v1163 = vsel %vm1097, %v1154, %v1162
    %v1165 = vshrl.u32 %v714, 16
    %v1167 = vrot.slane %v1165, 5
    %v1168 = vshll.u32 %v714, 16
    %v1170 = vrot.slane %v1168, 6
    %v1171 = vor.u32 %v1167, %v1170
    %v1172 = vrot.slane %v1171, 4
    %v1173 = vrot.slane %v637, 5
    %v1174 = vrot.slane %v633, 6
    %v1175 = vor.u32 %v1173, %v1174
    %v1176 = vsel %vm1097, %v1172, %v1175
    %v1177 = vrot.slane %v1175, 4
    %v1178 = vrot.slane %v647, 5
    %v1179 = vrot.slane %v643, 6
    %v1180 = vor.u32 %v1178, %v1179
    %v1181 = vsel %vm1097, %v1177, %v1180
    %v1182 = vrot.slane %v1180, 4
    %v1183 = vrot.slane %v657, 5
    %v1184 = vrot.slane %v653, 6
    %v1185 = vor.u32 %v1183, %v1184
    %v1186 = vsel %vm1097, %v1182, %v1185
    %v1187 = vrot.slane %v1185, 4
    %v1189 = vshrl.u32 %v1093, 16
    %v1191 = vrot.slane %v1189, 5
    %v1192 = vshll.u32 %v1093, 16
    %v1194 = vrot.slane %v1192, 6
    %v1195 = vor.u32 %v1191, %v1194
    %v1196 = vsel %vm1097, %v1187, %v1195
    %v1198 = vshrl.u32 %v715, 16
    %v1200 = vrot.slane %v1198, 5
    %v1201 = vshll.u32 %v715, 16
    %v1203 = vrot.slane %v1201, 6
    %v1204 = vor.u32 %v1200, %v1203
    %v1205 = vrot.slane %v1204, 4
    %v1206 = vrot.slane %v681, 5
    %v1207 = vrot.slane %v677, 6
    %v1208 = vor.u32 %v1206, %v1207
    %v1209 = vsel %vm1097, %v1205, %v1208
    %v1210 = vrot.slane %v1208, 4
    %v1211 = vrot.slane %v691, 5
    %v1212 = vrot.slane %v687, 6
    %v1213 = vor.u32 %v1211, %v1212
    %v1214 = vsel %vm1097, %v1210, %v1213
    %v1215 = vrot.slane %v1213, 4
    %v1216 = vrot.slane %v701, 5
    %v1217 = vrot.slane %v697, 6
    %v1218 = vor.u32 %v1216, %v1217
    %v1219 = vsel %vm1097, %v1215, %v1218
    %v1220 = vrot.slane %v1218, 4
    %v1222 = vshrl.u32 %v1094, 16
    %v1224 = vrot.slane %v1222, 5
    %v1225 = vshll.u32 %v1094, 16
    %v1227 = vrot.slane %v1225, 6
    %v1228 = vor.u32 %v1224, %v1227
    %v1229 = vsel %vm1097, %v1220, %v1228
    %s1230 = scalar_lea.vmem [#allocation9], 8
    %v1231 = vld [vmem:[%s1230] sm:$0xf]
    %v1232 = vunpack.c.l.b16 %v1110
    %v1233 = vunpack.c.l.b16 %v1115
    %v1234 = vunpack.c.l.b16 %v1120
    %v1235 = vunpack.c.l.b16 %v1130
    %v1236 = vunpack.c.l.b16 %v1143
    %v1237 = vunpack.c.l.b16 %v1148
    %v1238 = vunpack.c.l.b16 %v1153
    %v1239 = vunpack.c.l.b16 %v1163
    %v1240 = vunpack.c.l.b16 %v1176
    %v1241 = vunpack.c.l.b16 %v1181
    %v1242 = vunpack.c.l.b16 %v1186
    %v1243 = vunpack.c.l.b16 %v1196
    %v1244 = vunpack.c.l.b16 %v1209
    %v1245 = vunpack.c.l.b16 %v1214
    %v1246 = vunpack.c.l.b16 %v1219
    %v1247 = vunpack.c.l.b16 %v1229
    %v1248 = vpack.c.b16 %v1233, %v1232
    %v1249 = vpack.c.b16 %v1235, %v1234
    %v1250 = vpack.c.b16 %v1237, %v1236
    %v1251 = vpack.c.b16 %v1239, %v1238
    %v1252 = vpack.c.b16 %v1241, %v1240
    %v1253 = vpack.c.b16 %v1243, %v1242
    %v1254 = vpack.c.b16 %v1245, %v1244
    %v1255 = vpack.c.b16 %v1247, %v1246
    %v1257 = vsel %vm817, %v1248, 0
    %v1260 = vsel %vm817, %v1249, 0
    %v1263 = vsel %vm817, %v1250, 0
    %v1266 = vsel %vm817, %v1251, 0
    %v1269 = vsel %vm817, %v1252, 0
    %v1272 = vsel %vm817, %v1253, 0
    %v1275 = vsel %vm817, %v1254, 0
    %v1278 = vsel %vm817, %v1255, 0
    %v1281 = vsel %vm842, %v1231, 0
    %1283 = vmatprep.subr.bf16.mxu0 0
    %1284 = vmatpush1.bf16.msra.mxu0 %v1281
    %1285 = vmatprep.subr.bf16.mxu0 0
    %1286 = vmatpush1.bf16.msra.mxu0 0
    %1287 = vmatprep.subr.bf16.mxu0 0
    %1288 = vmatpush1.bf16.msra.mxu0 0
    %1289 = vmatprep.subr.bf16.mxu0 0
    %1290 = vmatpush1.bf16.msra.mxu0 0
    %1291 = vmatprep.subr.bf16.mxu0 0
    %1292 = vmatpush1.bf16.msra.mxu0 0
    %1293 = vmatprep.subr.bf16.mxu0 0
    %1294 = vmatpush1.bf16.msra.mxu0 0
    %1295 = vmatprep.subr.bf16.mxu0 0
    %1296 = vmatpush1.bf16.msra.mxu0 0
    %1297 = vmatprep.subr.bf16.mxu0 0
    %1298 = vmatpush1.bf16.msra.mxu0 0
    %1299 = vmatprep.subr.bf16.mxu0 0
    %1300 = vmatpush1.bf16.msra.mxu0 0
    %1301 = vmatprep.subr.bf16.mxu0 0
    %1302 = vmatpush1.bf16.msra.mxu0 0
    %1303 = vmatprep.subr.bf16.mxu0 0
    %1304 = vmatpush1.bf16.msra.mxu0 0
    %1305 = vmatprep.subr.bf16.mxu0 0
    %1306 = vmatpush1.bf16.msra.mxu0 0
    %1307 = vmatprep.subr.bf16.mxu0 0
    %1308 = vmatpush1.bf16.msra.mxu0 0
    %1309 = vmatprep.subr.bf16.mxu0 0
    %1310 = vmatpush1.bf16.msra.mxu0 0
    %1311 = vmatprep.subr.bf16.mxu0 0
    %1312 = vmatpush1.bf16.msra.mxu0 0
    %1313 = vmatprep.subr.bf16.mxu0 0
    %1314 = vmatpush1.bf16.msra.mxu0 0
    %1315 = vmatprep.mubr.bf16.mxu0 0
    %1316 = vmatmul.mubr.bf16.gmra.mrb[0].mxu0 %v1257
    %v1317 = vpop.f32.mrb[0].mxu0
    %v1318 = vadd.f32 0.0, %v1317
    %v1319 = vpop.f32.mrb[0].mxu0
    %v1320 = vpop.f32.mrb[0].mxu0
    %v1321 = vadd.f32 0.0, %v1320
    %v1322 = vpop.f32.mrb[0].mxu0
    %1323 = vmatprep.mubr.bf16.mxu0 0
    %1324 = vmatmul.mubr.bf16.gmra.mrb[0].mxu0 %v1260
    %v1325 = vpop.f32.mrb[0].mxu0
    %v1326 = vadd.f32 0.0, %v1325
    %v1327 = vpop.f32.mrb[0].mxu0
    %v1328 = vpop.f32.mrb[0].mxu0
    %v1329 = vadd.f32 0.0, %v1328
    %v1330 = vpop.f32.mrb[0].mxu0
    %1331 = vmatprep.mubr.bf16.mxu0 0
    %1332 = vmatmul.mubr.bf16.gmra.mrb[0].mxu0 %v1263
    %v1333 = vpop.f32.mrb[0].mxu0
    %v1334 = vadd.f32 0.0, %v1333
    %v1335 = vpop.f32.mrb[0].mxu0
    %v1336 = vpop.f32.mrb[0].mxu0
    %v1337 = vadd.f32 0.0, %v1336
    %v1338 = vpop.f32.mrb[0].mxu0
    %1339 = vmatprep.mubr.bf16.mxu0 0
    %1340 = vmatmul.mubr.bf16.gmra.mrb[0].mxu0 %v1266
    %v1341 = vpop.f32.mrb[0].mxu0
    %v1342 = vadd.f32 0.0, %v1341
    %v1343 = vpop.f32.mrb[0].mxu0
    %v1344 = vpop.f32.mrb[0].mxu0
    %v1345 = vadd.f32 0.0, %v1344
    %v1346 = vpop.f32.mrb[0].mxu0
    %1347 = vmatprep.mubr.bf16.mxu0 0
    %1348 = vmatmul.mubr.bf16.gmra.mrb[0].mxu0 %v1269
    %v1349 = vpop.f32.mrb[0].mxu0
    %v1350 = vadd.f32 0.0, %v1349
    %v1351 = vpop.f32.mrb[0].mxu0
    %v1352 = vpop.f32.mrb[0].mxu0
    %v1353 = vadd.f32 0.0, %v1352
    %v1354 = vpop.f32.mrb[0].mxu0
    %1355 = vmatprep.mubr.bf16.mxu0 0
    %1356 = vmatmul.mubr.bf16.gmra.mrb[0].mxu0 %v1272
    %v1357 = vpop.f32.mrb[0].mxu0
    %v1358 = vadd.f32 0.0, %v1357
    %v1359 = vpop.f32.mrb[0].mxu0
    %v1360 = vpop.f32.mrb[0].mxu0
    %v1361 = vadd.f32 0.0, %v1360
    %v1362 = vpop.f32.mrb[0].mxu0
    %1363 = vmatprep.mubr.bf16.mxu0 0
    %1364 = vmatmul.mubr.bf16.gmra.mrb[0].mxu0 %v1275
    %v1365 = vpop.f32.mrb[0].mxu0
    %v1366 = vadd.f32 0.0, %v1365
    %v1367 = vpop.f32.mrb[0].mxu0
    %v1368 = vpop.f32.mrb[0].mxu0
    %v1369 = vadd.f32 0.0, %v1368
    %v1370 = vpop.f32.mrb[0].mxu0
    %1371 = vmatprep.mubr.bf16.mxu0 0
    %1372 = vmatmul.mubr.bf16.gmra.mrb[0].mxu0 %v1278
    %v1373 = vpop.f32.mrb[0].mxu0
    %v1374 = vadd.f32 0.0, %v1373
    %v1375 = vpop.f32.mrb[0].mxu0
    %v1376 = vpop.f32.mrb[0].mxu0
    %v1377 = vadd.f32 0.0, %v1376
    %v1378 = vpop.f32.mrb[0].mxu0
    %1379 = vdwg.mxu0
    %v1380 = vadd.f32 %v1029, %v1318
    %v1381 = vadd.f32 %v1032, %v1321
    %v1382 = vadd.f32 %v1037, %v1326
    %v1383 = vadd.f32 %v1040, %v1329
    %v1384 = vadd.f32 %v1045, %v1334
    %v1385 = vadd.f32 %v1048, %v1337
    %v1386 = vadd.f32 %v1053, %v1342
    %v1387 = vadd.f32 %v1056, %v1345
    %v1388 = vadd.f32 %v1061, %v1350
    %v1389 = vadd.f32 %v1064, %v1353
    %v1390 = vadd.f32 %v1069, %v1358
    %v1391 = vadd.f32 %v1072, %v1361
    %v1392 = vadd.f32 %v1077, %v1366
    %v1393 = vadd.f32 %v1080, %v1369
    %v1394 = vadd.f32 %v1085, %v1374
    %v1395 = vadd.f32 %v1088, %v1377
    %v1396 = vld [vmem:[#allocation2 + $0x4] sm:$0xc]
    %v1397 = vld [vmem:[#allocation2 + $0x20] sm:$0xc]
    %v1398 = vld [vmem:[#allocation2 + $0x3c] sm:$0xc]
    %v1399 = vld [vmem:[#allocation2 + $0x58] sm:$0xc]
    %v1408 = vrot.slane %v1396, 6
    %v1409 = vrot.slane %v1408, 4
    %v1410 = vrot.slane %v513, 6
    %v1411 = vsel %vm427, %v1409, %v1410
    %v1412 = vrot.slane %v1410, 4
    %v1413 = vrot.slane %v514, 6
    %v1414 = vsel %vm427, %v1412, %v1413
    %v1415 = vrot.slane %v1413, 4
    %v1416 = vrot.slane %v515, 6
    %v1417 = vsel %vm427, %v1415, %v1416
    %v1418 = vrot.slane %v1416, 4
    %v1419 = vrot.slane %v1091, 6
    %v1420 = vsel %vm427, %v1418, %v1419
    %v1421 = vrot.slane %v1397, 6
    %v1422 = vrot.slane %v1421, 4
    %v1423 = vrot.slane %v518, 6
    %v1424 = vsel %vm427, %v1422, %v1423
    %v1425 = vrot.slane %v1423, 4
    %v1426 = vrot.slane %v519, 6
    %v1427 = vsel %vm427, %v1425, %v1426
    %v1428 = vrot.slane %v1426, 4
    %v1429 = vrot.slane %v520, 6
    %v1430 = vsel %vm427, %v1428, %v1429
    %v1431 = vrot.slane %v1429, 4
    %v1432 = vrot.slane %v1092, 6
    %v1433 = vsel %vm427, %v1431, %v1432
    %v1434 = vrot.slane %v1398, 6
    %v1435 = vrot.slane %v1434, 4
    %v1436 = vrot.slane %v523, 6
    %v1437 = vsel %vm427, %v1435, %v1436
    %v1438 = vrot.slane %v1436, 4
    %v1439 = vrot.slane %v524, 6
    %v1440 = vsel %vm427, %v1438, %v1439
    %v1441 = vrot.slane %v1439, 4
    %v1442 = vrot.slane %v525, 6
    %v1443 = vsel %vm427, %v1441, %v1442
    %v1444 = vrot.slane %v1442, 4
    %v1445 = vrot.slane %v1093, 6
    %v1446 = vsel %vm427, %v1444, %v1445
    %v1447 = vrot.slane %v1399, 6
    %v1448 = vrot.slane %v1447, 4
    %v1449 = vrot.slane %v528, 6
    %v1450 = vsel %vm427, %v1448, %v1449
    %v1451 = vrot.slane %v1449, 4
    %v1452 = vrot.slane %v529, 6
    %v1453 = vsel %vm427, %v1451, %v1452
    %v1454 = vrot.slane %v1452, 4
    %v1455 = vrot.slane %v530, 6
    %v1456 = vsel %vm427, %v1454, %v1455
    %v1457 = vrot.slane %v1455, 4
    %v1458 = vrot.slane %v1094, 6
    %v1459 = vsel %vm427, %v1457, %v1458
    %s1460 = scalar_lea.vmem [#allocation9], 12
    %v1461 = vld [vmem:[%s1460] sm:$0xf]
    %v1462 = vunpack.c.l.b16 %v1411
    %v1463 = vunpack.c.l.b16 %v1414
    %v1464 = vunpack.c.l.b16 %v1417
    %v1465 = vunpack.c.l.b16 %v1420
    %v1466 = vunpack.c.l.b16 %v1424
    %v1467 = vunpack.c.l.b16 %v1427
    %v1468 = vunpack.c.l.b16 %v1430
    %v1469 = vunpack.c.l.b16 %v1433
    %v1470 = vunpack.c.l.b16 %v1437
    %v1471 = vunpack.c.l.b16 %v1440
    %v1472 = vunpack.c.l.b16 %v1443
    %v1473 = vunpack.c.l.b16 %v1446
    %v1474 = vunpack.c.l.b16 %v1450
    %v1475 = vunpack.c.l.b16 %v1453
    %v1476 = vunpack.c.l.b16 %v1456
    %v1477 = vunpack.c.l.b16 %v1459
    %v1478 = vpack.c.b16 %v1463, %v1462
    %v1479 = vpack.c.b16 %v1465, %v1464
    %v1480 = vpack.c.b16 %v1467, %v1466
    %v1481 = vpack.c.b16 %v1469, %v1468
    %v1482 = vpack.c.b16 %v1471, %v1470
    %v1483 = vpack.c.b16 %v1473, %v1472
    %v1484 = vpack.c.b16 %v1475, %v1474
    %v1485 = vpack.c.b16 %v1477, %v1476
    %v1487 = vsel %vm817, %v1478, 0
    %v1490 = vsel %vm817, %v1479, 0
    %v1493 = vsel %vm817, %v1480, 0
    %v1496 = vsel %vm817, %v1481, 0
    %v1499 = vsel %vm817, %v1482, 0
    %v1502 = vsel %vm817, %v1483, 0
    %v1505 = vsel %vm817, %v1484, 0
    %v1508 = vsel %vm817, %v1485, 0
    %v1511 = vsel %vm842, %v1461, 0
    %1513 = vmatprep.subr.bf16.mxu0 0
    %1514 = vmatpush1.bf16.msra.mxu0 %v1511
    %1515 = vmatprep.subr.bf16.mxu0 0
    %1516 = vmatpush1.bf16.msra.mxu0 0
    %1517 = vmatprep.subr.bf16.mxu0 0
    %1518 = vmatpush1.bf16.msra.mxu0 0
    %1519 = vmatprep.subr.bf16.mxu0 0
    %1520 = vmatpush1.bf16.msra.mxu0 0
    %1521 = vmatprep.subr.bf16.mxu0 0
    %1522 = vmatpush1.bf16.msra.mxu0 0
    %1523 = vmatprep.subr.bf16.mxu0 0
    %1524 = vmatpush1.bf16.msra.mxu0 0
    %1525 = vmatprep.subr.bf16.mxu0 0
    %1526 = vmatpush1.bf16.msra.mxu0 0
    %1527 = vmatprep.subr.bf16.mxu0 0
    %1528 = vmatpush1.bf16.msra.mxu0 0
    %1529 = vmatprep.subr.bf16.mxu0 0
    %1530 = vmatpush1.bf16.msra.mxu0 0
    %1531 = vmatprep.subr.bf16.mxu0 0
    %1532 = vmatpush1.bf16.msra.mxu0 0
    %1533 = vmatprep.subr.bf16.mxu0 0
    %1534 = vmatpush1.bf16.msra.mxu0 0
    %1535 = vmatprep.subr.bf16.mxu0 0
    %1536 = vmatpush1.bf16.msra.mxu0 0
    %1537 = vmatprep.subr.bf16.mxu0 0
    %1538 = vmatpush1.bf16.msra.mxu0 0
    %1539 = vmatprep.subr.bf16.mxu0 0
    %1540 = vmatpush1.bf16.msra.mxu0 0
    %1541 = vmatprep.subr.bf16.mxu0 0
    %1542 = vmatpush1.bf16.msra.mxu0 0
    %1543 = vmatprep.subr.bf16.mxu0 0
    %1544 = vmatpush1.bf16.msra.mxu0 0
    %1545 = vmatprep.mubr.bf16.mxu0 0
    %1546 = vmatmul.mubr.bf16.gmra.mrb[0].mxu0 %v1487
    %v1547 = vpop.f32.mrb[0].mxu0
    %v1548 = vadd.f32 0.0, %v1547
    %v1549 = vpop.f32.mrb[0].mxu0
    %v1550 = vpop.f32.mrb[0].mxu0
    %v1551 = vadd.f32 0.0, %v1550
    %v1552 = vpop.f32.mrb[0].mxu0
    %1553 = vmatprep.mubr.bf16.mxu0 0
    %1554 = vmatmul.mubr.bf16.gmra.mrb[0].mxu0 %v1490
    %v1555 = vpop.f32.mrb[0].mxu0
    %v1556 = vadd.f32 0.0, %v1555
    %v1557 = vpop.f32.mrb[0].mxu0
    %v1558 = vpop.f32.mrb[0].mxu0
    %v1559 = vadd.f32 0.0, %v1558
    %v1560 = vpop.f32.mrb[0].mxu0
    %1561 = vmatprep.mubr.bf16.mxu0 0
    %1562 = vmatmul.mubr.bf16.gmra.mrb[0].mxu0 %v1493
    %v1563 = vpop.f32.mrb[0].mxu0
    %v1564 = vadd.f32 0.0, %v1563
    %v1565 = vpop.f32.mrb[0].mxu0
    %v1566 = vpop.f32.mrb[0].mxu0
    %v1567 = vadd.f32 0.0, %v1566
    %v1568 = vpop.f32.mrb[0].mxu0
    %1569 = vmatprep.mubr.bf16.mxu0 0
    %1570 = vmatmul.mubr.bf16.gmra.mrb[0].mxu0 %v1496
    %v1571 = vpop.f32.mrb[0].mxu0
    %v1572 = vadd.f32 0.0, %v1571
    %v1573 = vpop.f32.mrb[0].mxu0
    %v1574 = vpop.f32.mrb[0].mxu0
    %v1575 = vadd.f32 0.0, %v1574
    %v1576 = vpop.f32.mrb[0].mxu0
    %1577 = vmatprep.mubr.bf16.mxu0 0
    %1578 = vmatmul.mubr.bf16.gmra.mrb[0].mxu0 %v1499
    %v1579 = vpop.f32.mrb[0].mxu0
    %v1580 = vadd.f32 0.0, %v1579
    %v1581 = vpop.f32.mrb[0].mxu0
    %v1582 = vpop.f32.mrb[0].mxu0
    %v1583 = vadd.f32 0.0, %v1582
    %v1584 = vpop.f32.mrb[0].mxu0
    %1585 = vmatprep.mubr.bf16.mxu0 0
    %1586 = vmatmul.mubr.bf16.gmra.mrb[0].mxu0 %v1502
    %v1587 = vpop.f32.mrb[0].mxu0
    %v1588 = vadd.f32 0.0, %v1587
    %v1589 = vpop.f32.mrb[0].mxu0
    %v1590 = vpop.f32.mrb[0].mxu0
    %v1591 = vadd.f32 0.0, %v1590
    %v1592 = vpop.f32.mrb[0].mxu0
    %1593 = vmatprep.mubr.bf16.mxu0 0
    %1594 = vmatmul.mubr.bf16.gmra.mrb[0].mxu0 %v1505
    %v1595 = vpop.f32.mrb[0].mxu0
    %v1596 = vadd.f32 0.0, %v1595
    %v1597 = vpop.f32.mrb[0].mxu0
    %v1598 = vpop.f32.mrb[0].mxu0
    %v1599 = vadd.f32 0.0, %v1598
    %v1600 = vpop.f32.mrb[0].mxu0
    %1601 = vmatprep.mubr.bf16.mxu0 0
    %1602 = vmatmul.mubr.bf16.gmra.mrb[0].mxu0 %v1508
    %v1603 = vpop.f32.mrb[0].mxu0
    %v1604 = vadd.f32 0.0, %v1603
    %v1605 = vpop.f32.mrb[0].mxu0
    %v1606 = vpop.f32.mrb[0].mxu0
    %v1607 = vadd.f32 0.0, %v1606
    %v1608 = vpop.f32.mrb[0].mxu0
    %1609 = vdwg.mxu0
    %v1610 = vadd.f32 %v1380, %v1548
    %v1611 = vadd.f32 %v1381, %v1551
    %v1612 = vadd.f32 %v1382, %v1556
    %v1613 = vadd.f32 %v1383, %v1559
    %v1614 = vadd.f32 %v1384, %v1564
    %v1615 = vadd.f32 %v1385, %v1567
    %v1616 = vadd.f32 %v1386, %v1572
    %v1617 = vadd.f32 %v1387, %v1575
    %v1618 = vadd.f32 %v1388, %v1580
    %v1619 = vadd.f32 %v1389, %v1583
    %v1620 = vadd.f32 %v1390, %v1588
    %v1621 = vadd.f32 %v1391, %v1591
    %v1622 = vadd.f32 %v1392, %v1596
    %v1623 = vadd.f32 %v1393, %v1599
    %v1624 = vadd.f32 %v1394, %v1604
    %v1625 = vadd.f32 %v1395, %v1607
    %v1626 = vld [vmem:[#allocation2 + $0x14] sm:$0x7]
    %v1627 = vld [vmem:[#allocation2 + $0x30] sm:$0x7]
    %v1628 = vld [vmem:[#allocation2 + $0x4c] sm:$0x7]
    %v1629 = vld [vmem:[#allocation2 + $0x68] sm:$0x7]
    %vm1630 = vsmask.f32 1280
    %vm1631 = vsmask.f32 5392
    %vm1632 = vmor %vm1630, %vm1631
    %v1634 = vshrl.u32 %v1396, 16
    %v1636 = vrot.slane %v1634, 6
    %v1637 = vshll.u32 %v1396, 16
    %v1639 = vrot.slane %v1637, 7
    %v1640 = vor.u32 %v1636, %v1639
    %v1641 = vrot.slane %v1640, 4
    %v1642 = vrot.slane %v549, 6
    %v1643 = vrot.slane %v545, 7
    %v1644 = vor.u32 %v1642, %v1643
    %v1645 = vsel %vm1632, %v1641, %v1644
    %v1646 = vrot.slane %v1644, 4
    %v1647 = vrot.slane %v559, 6
    %v1648 = vrot.slane %v555, 7
    %v1649 = vor.u32 %v1647, %v1648
    %v1650 = vsel %vm1632, %v1646, %v1649
    %v1651 = vrot.slane %v1649, 4
    %v1652 = vrot.slane %v569, 6
    %v1653 = vrot.slane %v565, 7
    %v1654 = vor.u32 %v1652, %v1653
    %v1655 = vsel %vm1632, %v1651, %v1654
    %v1656 = vrot.slane %v1654, 4
    %v1658 = vshrl.u32 %v1626, 16
    %v1660 = vrot.slane %v1658, 6
    %v1661 = vshll.u32 %v1626, 16
    %v1663 = vrot.slane %v1661, 7
    %v1664 = vor.u32 %v1660, %v1663
    %v1665 = vsel %vm1632, %v1656, %v1664
    %v1667 = vshrl.u32 %v1397, 16
    %v1669 = vrot.slane %v1667, 6
    %v1670 = vshll.u32 %v1397, 16
    %v1672 = vrot.slane %v1670, 7
    %v1673 = vor.u32 %v1669, %v1672
    %v1674 = vrot.slane %v1673, 4
    %v1675 = vrot.slane %v593, 6
    %v1676 = vrot.slane %v589, 7
    %v1677 = vor.u32 %v1675, %v1676
    %v1678 = vsel %vm1632, %v1674, %v1677
    %v1679 = vrot.slane %v1677, 4
    %v1680 = vrot.slane %v603, 6
    %v1681 = vrot.slane %v599, 7
    %v1682 = vor.u32 %v1680, %v1681
    %v1683 = vsel %vm1632, %v1679, %v1682
    %v1684 = vrot.slane %v1682, 4
    %v1685 = vrot.slane %v613, 6
    %v1686 = vrot.slane %v609, 7
    %v1687 = vor.u32 %v1685, %v1686
    %v1688 = vsel %vm1632, %v1684, %v1687
    %v1689 = vrot.slane %v1687, 4
    %v1691 = vshrl.u32 %v1627, 16
    %v1693 = vrot.slane %v1691, 6
    %v1694 = vshll.u32 %v1627, 16
    %v1696 = vrot.slane %v1694, 7
    %v1697 = vor.u32 %v1693, %v1696
    %v1698 = vsel %vm1632, %v1689, %v1697
    %v1700 = vshrl.u32 %v1398, 16
    %v1702 = vrot.slane %v1700, 6
    %v1703 = vshll.u32 %v1398, 16
    %v1705 = vrot.slane %v1703, 7
    %v1706 = vor.u32 %v1702, %v1705
    %v1707 = vrot.slane %v1706, 4
    %v1708 = vrot.slane %v637, 6
    %v1709 = vrot.slane %v633, 7
    %v1710 = vor.u32 %v1708, %v1709
    %v1711 = vsel %vm1632, %v1707, %v1710
    %v1712 = vrot.slane %v1710, 4
    %v1713 = vrot.slane %v647, 6
    %v1714 = vrot.slane %v643, 7
    %v1715 = vor.u32 %v1713, %v1714
    %v1716 = vsel %vm1632, %v1712, %v1715
    %v1717 = vrot.slane %v1715, 4
    %v1718 = vrot.slane %v657, 6
    %v1719 = vrot.slane %v653, 7
    %v1720 = vor.u32 %v1718, %v1719
    %v1721 = vsel %vm1632, %v1717, %v1720
    %v1722 = vrot.slane %v1720, 4
    %v1724 = vshrl.u32 %v1628, 16
    %v1726 = vrot.slane %v1724, 6
    %v1727 = vshll.u32 %v1628, 16
    %v1729 = vrot.slane %v1727, 7
    %v1730 = vor.u32 %v1726, %v1729
    %v1731 = vsel %vm1632, %v1722, %v1730
    %v1733 = vshrl.u32 %v1399, 16
    %v1735 = vrot.slane %v1733, 6
    %v1736 = vshll.u32 %v1399, 16
    %v1738 = vrot.slane %v1736, 7
    %v1739 = vor.u32 %v1735, %v1738
    %v1740 = vrot.slane %v1739, 4
    %v1741 = vrot.slane %v681, 6
    %v1742 = vrot.slane %v677, 7
    %v1743 = vor.u32 %v1741, %v1742
    %v1744 = vsel %vm1632, %v1740, %v1743
    %v1745 = vrot.slane %v1743, 4
    %v1746 = vrot.slane %v691, 6
    %v1747 = vrot.slane %v687, 7
    %v1748 = vor.u32 %v1746, %v1747
    %v1749 = vsel %vm1632, %v1745, %v1748
    %v1750 = vrot.slane %v1748, 4
    %v1751 = vrot.slane %v701, 6
    %v1752 = vrot.slane %v697, 7
    %v1753 = vor.u32 %v1751, %v1752
    %v1754 = vsel %vm1632, %v1750, %v1753
    %v1755 = vrot.slane %v1753, 4
    %v1757 = vshrl.u32 %v1629, 16
    %v1759 = vrot.slane %v1757, 6
    %v1760 = vshll.u32 %v1629, 16
    %v1762 = vrot.slane %v1760, 7
    %v1763 = vor.u32 %v1759, %v1762
    %v1764 = vsel %vm1632, %v1755, %v1763
    %s1765 = scalar_lea.vmem [#allocation9], 16
    %v1766 = vld [vmem:[%s1765] sm:$0xf]
    %v1767 = vunpack.c.l.b16 %v1645
    %v1768 = vunpack.c.l.b16 %v1650
    %v1769 = vunpack.c.l.b16 %v1655
    %v1770 = vunpack.c.l.b16 %v1665
    %v1771 = vunpack.c.l.b16 %v1678
    %v1772 = vunpack.c.l.b16 %v1683
    %v1773 = vunpack.c.l.b16 %v1688
    %v1774 = vunpack.c.l.b16 %v1698
    %v1775 = vunpack.c.l.b16 %v1711
    %v1776 = vunpack.c.l.b16 %v1716
    %v1777 = vunpack.c.l.b16 %v1721
    %v1778 = vunpack.c.l.b16 %v1731
    %v1779 = vunpack.c.l.b16 %v1744
    %v1780 = vunpack.c.l.b16 %v1749
    %v1781 = vunpack.c.l.b16 %v1754
    %v1782 = vunpack.c.l.b16 %v1764
    %v1783 = vpack.c.b16 %v1768, %v1767
    %v1784 = vpack.c.b16 %v1770, %v1769
    %v1785 = vpack.c.b16 %v1772, %v1771
    %v1786 = vpack.c.b16 %v1774, %v1773
    %v1787 = vpack.c.b16 %v1776, %v1775
    %v1788 = vpack.c.b16 %v1778, %v1777
    %v1789 = vpack.c.b16 %v1780, %v1779
    %v1790 = vpack.c.b16 %v1782, %v1781
    %v1792 = vsel %vm817, %v1783, 0
    %v1795 = vsel %vm817, %v1784, 0
    %v1798 = vsel %vm817, %v1785, 0
    %v1801 = vsel %vm817, %v1786, 0
    %v1804 = vsel %vm817, %v1787, 0
    %v1807 = vsel %vm817, %v1788, 0
    %v1810 = vsel %vm817, %v1789, 0
    %v1813 = vsel %vm817, %v1790, 0
    %v1816 = vsel %vm842, %v1766, 0
    %1818 = vmatprep.subr.bf16.mxu0 0
    %1819 = vmatpush1.bf16.msra.mxu0 %v1816
    %1820 = vmatprep.subr.bf16.mxu0 0
    %1821 = vmatpush1.bf16.msra.mxu0 0
    %1822 = vmatprep.subr.bf16.mxu0 0
    %1823 = vmatpush1.bf16.msra.mxu0 0
    %1824 = vmatprep.subr.bf16.mxu0 0
    %1825 = vmatpush1.bf16.msra.mxu0 0
    %1826 = vmatprep.subr.bf16.mxu0 0
    %1827 = vmatpush1.bf16.msra.mxu0 0
    %1828 = vmatprep.subr.bf16.mxu0 0
    %1829 = vmatpush1.bf16.msra.mxu0 0
    %1830 = vmatprep.subr.bf16.mxu0 0
    %1831 = vmatpush1.bf16.msra.mxu0 0
    %1832 = vmatprep.subr.bf16.mxu0 0
    %1833 = vmatpush1.bf16.msra.mxu0 0
    %1834 = vmatprep.subr.bf16.mxu0 0
    %1835 = vmatpush1.bf16.msra.mxu0 0
    %1836 = vmatprep.subr.bf16.mxu0 0
    %1837 = vmatpush1.bf16.msra.mxu0 0
    %1838 = vmatprep.subr.bf16.mxu0 0
    %1839 = vmatpush1.bf16.msra.mxu0 0
    %1840 = vmatprep.subr.bf16.mxu0 0
    %1841 = vmatpush1.bf16.msra.mxu0 0
    %1842 = vmatprep.subr.bf16.mxu0 0
    %1843 = vmatpush1.bf16.msra.mxu0 0
    %1844 = vmatprep.subr.bf16.mxu0 0
    %1845 = vmatpush1.bf16.msra.mxu0 0
    %1846 = vmatprep.subr.bf16.mxu0 0
    %1847 = vmatpush1.bf16.msra.mxu0 0
    %1848 = vmatprep.subr.bf16.mxu0 0
    %1849 = vmatpush1.bf16.msra.mxu0 0
    %1850 = vmatprep.mubr.bf16.mxu0 0
    %1851 = vmatmul.mubr.bf16.gmra.mrb[0].mxu0 %v1792
    %v1852 = vpop.f32.mrb[0].mxu0
    %v1853 = vadd.f32 0.0, %v1852
    %v1854 = vpop.f32.mrb[0].mxu0
    %v1855 = vpop.f32.mrb[0].mxu0
    %v1856 = vadd.f32 0.0, %v1855
    %v1857 = vpop.f32.mrb[0].mxu0
    %1858 = vmatprep.mubr.bf16.mxu0 0
    %1859 = vmatmul.mubr.bf16.gmra.mrb[0].mxu0 %v1795
    %v1860 = vpop.f32.mrb[0].mxu0
    %v1861 = vadd.f32 0.0, %v1860
    %v1862 = vpop.f32.mrb[0].mxu0
    %v1863 = vpop.f32.mrb[0].mxu0
    %v1864 = vadd.f32 0.0, %v1863
    %v1865 = vpop.f32.mrb[0].mxu0
    %1866 = vmatprep.mubr.bf16.mxu0 0
    %1867 = vmatmul.mubr.bf16.gmra.mrb[0].mxu0 %v1798
    %v1868 = vpop.f32.mrb[0].mxu0
    %v1869 = vadd.f32 0.0, %v1868
    %v1870 = vpop.f32.mrb[0].mxu0
    %v1871 = vpop.f32.mrb[0].mxu0
    %v1872 = vadd.f32 0.0, %v1871
    %v1873 = vpop.f32.mrb[0].mxu0
    %1874 = vmatprep.mubr.bf16.mxu0 0
    %1875 = vmatmul.mubr.bf16.gmra.mrb[0].mxu0 %v1801
    %v1876 = vpop.f32.mrb[0].mxu0
    %v1877 = vadd.f32 0.0, %v1876
    %v1878 = vpop.f32.mrb[0].mxu0
    %v1879 = vpop.f32.mrb[0].mxu0
    %v1880 = vadd.f32 0.0, %v1879
    %v1881 = vpop.f32.mrb[0].mxu0
    %1882 = vmatprep.mubr.bf16.mxu0 0
    %1883 = vmatmul.mubr.bf16.gmra.mrb[0].mxu0 %v1804
    %v1884 = vpop.f32.mrb[0].mxu0
    %v1885 = vadd.f32 0.0, %v1884
    %v1886 = vpop.f32.mrb[0].mxu0
    %v1887 = vpop.f32.mrb[0].mxu0
    %v1888 = vadd.f32 0.0, %v1887
    %v1889 = vpop.f32.mrb[0].mxu0
    %1890 = vmatprep.mubr.bf16.mxu0 0
    %1891 = vmatmul.mubr.bf16.gmra.mrb[0].mxu0 %v1807
    %v1892 = vpop.f32.mrb[0].mxu0
    %v1893 = vadd.f32 0.0, %v1892
    %v1894 = vpop.f32.mrb[0].mxu0
    %v1895 = vpop.f32.mrb[0].mxu0
    %v1896 = vadd.f32 0.0, %v1895
    %v1897 = vpop.f32.mrb[0].mxu0
    %1898 = vmatprep.mubr.bf16.mxu0 0
    %1899 = vmatmul.mubr.bf16.gmra.mrb[0].mxu0 %v1810
    %v1900 = vpop.f32.mrb[0].mxu0
    %v1901 = vadd.f32 0.0, %v1900
    %v1902 = vpop.f32.mrb[0].mxu0
    %v1903 = vpop.f32.mrb[0].mxu0
    %v1904 = vadd.f32 0.0, %v1903
    %v1905 = vpop.f32.mrb[0].mxu0
    %1906 = vmatprep.mubr.bf16.mxu0 0
    %1907 = vmatmul.mubr.bf16.gmra.mrb[0].mxu0 %v1813
    %v1908 = vpop.f32.mrb[0].mxu0
    %v1909 = vadd.f32 0.0, %v1908
    %v1910 = vpop.f32.mrb[0].mxu0
    %v1911 = vpop.f32.mrb[0].mxu0
    %v1912 = vadd.f32 0.0, %v1911
    %v1913 = vpop.f32.mrb[0].mxu0
    %1914 = vdwg.mxu0
    %v1915 = vadd.f32 %v1610, %v1853
    %v1916 = vadd.f32 %v1611, %v1856
    %v1917 = vadd.f32 %v1612, %v1861
    %v1918 = vadd.f32 %v1613, %v1864
    %v1919 = vadd.f32 %v1614, %v1869
    %v1920 = vadd.f32 %v1615, %v1872
    %v1921 = vadd.f32 %v1616, %v1877
    %v1922 = vadd.f32 %v1617, %v1880
    %v1923 = vadd.f32 %v1618, %v1885
    %v1924 = vadd.f32 %v1619, %v1888
    %v1925 = vadd.f32 %v1620, %v1893
    %v1926 = vadd.f32 %v1621, %v1896
    %v1927 = vadd.f32 %v1622, %v1901
    %v1928 = vadd.f32 %v1623, %v1904
    %v1929 = vadd.f32 %v1624, %v1909
    %v1930 = vadd.f32 %v1625, %v1912
    %v1931 = vld [vmem:[#allocation2 + $0x4] sm:$0x8]
    %v1932 = vld [vmem:[#allocation2 + $0x20] sm:$0x8]
    %v1933 = vld [vmem:[#allocation2 + $0x3c] sm:$0x8]
    %v1934 = vld [vmem:[#allocation2 + $0x58] sm:$0x8]
    %vm1943 = vcmask 1040384
    %vm1944 = vcmask 1044484
    %vm1945 = vmor %vm1943, %vm1944
    %v1946 = vrot.slane %v1931, 7
    %v1947 = vrot.slane %v1946, 4
    %v1948 = vrot.slane %v513, 7
    %v1949 = vsel %vm1945, %v1947, %v1948
    %v1950 = vrot.slane %v1948, 4
    %v1951 = vrot.slane %v514, 7
    %v1952 = vsel %vm1945, %v1950, %v1951
    %v1953 = vrot.slane %v1951, 4
    %v1954 = vrot.slane %v515, 7
    %v1955 = vsel %vm1945, %v1953, %v1954
    %v1956 = vrot.slane %v1954, 4
    %v1957 = vrot.slane %v1626, 7
    %v1958 = vsel %vm1945, %v1956, %v1957
    %v1959 = vrot.slane %v1932, 7
    %v1960 = vrot.slane %v1959, 4
    %v1961 = vrot.slane %v518, 7
    %v1962 = vsel %vm1945, %v1960, %v1961
    %v1963 = vrot.slane %v1961, 4
    %v1964 = vrot.slane %v519, 7
    %v1965 = vsel %vm1945, %v1963, %v1964
    %v1966 = vrot.slane %v1964, 4
    %v1967 = vrot.slane %v520, 7
    %v1968 = vsel %vm1945, %v1966, %v1967
    %v1969 = vrot.slane %v1967, 4
    %v1970 = vrot.slane %v1627, 7
    %v1971 = vsel %vm1945, %v1969, %v1970
    %v1972 = vrot.slane %v1933, 7
    %v1973 = vrot.slane %v1972, 4
    %v1974 = vrot.slane %v523, 7
    %v1975 = vsel %vm1945, %v1973, %v1974
    %v1976 = vrot.slane %v1974, 4
    %v1977 = vrot.slane %v524, 7
    %v1978 = vsel %vm1945, %v1976, %v1977
    %v1979 = vrot.slane %v1977, 4
    %v1980 = vrot.slane %v525, 7
    %v1981 = vsel %vm1945, %v1979, %v1980
    %v1982 = vrot.slane %v1980, 4
    %v1983 = vrot.slane %v1628, 7
    %v1984 = vsel %vm1945, %v1982, %v1983
    %v1985 = vrot.slane %v1934, 7
    %v1986 = vrot.slane %v1985, 4
    %v1987 = vrot.slane %v528, 7
    %v1988 = vsel %vm1945, %v1986, %v1987
    %v1989 = vrot.slane %v1987, 4
    %v1990 = vrot.slane %v529, 7
    %v1991 = vsel %vm1945, %v1989, %v1990
    %v1992 = vrot.slane %v1990, 4
    %v1993 = vrot.slane %v530, 7
    %v1994 = vsel %vm1945, %v1992, %v1993
    %v1995 = vrot.slane %v1993, 4
    %v1996 = vrot.slane %v1629, 7
    %v1997 = vsel %vm1945, %v1995, %v1996
    %s1998 = scalar_lea.vmem [#allocation9], 20
    %v1999 = vld [vmem:[%s1998] sm:$0xf]
    %v2000 = vunpack.c.l.b16 %v1949
    %v2001 = vunpack.c.l.b16 %v1952
    %v2002 = vunpack.c.l.b16 %v1955
    %v2003 = vunpack.c.l.b16 %v1958
    %v2004 = vunpack.c.l.b16 %v1962
    %v2005 = vunpack.c.l.b16 %v1965
    %v2006 = vunpack.c.l.b16 %v1968
    %v2007 = vunpack.c.l.b16 %v1971
    %v2008 = vunpack.c.l.b16 %v1975
    %v2009 = vunpack.c.l.b16 %v1978
    %v2010 = vunpack.c.l.b16 %v1981
    %v2011 = vunpack.c.l.b16 %v1984
    %v2012 = vunpack.c.l.b16 %v1988
    %v2013 = vunpack.c.l.b16 %v1991
    %v2014 = vunpack.c.l.b16 %v1994
    %v2015 = vunpack.c.l.b16 %v1997
    %v2016 = vpack.c.b16 %v2001, %v2000
    %v2017 = vpack.c.b16 %v2003, %v2002
    %v2018 = vpack.c.b16 %v2005, %v2004
    %v2019 = vpack.c.b16 %v2007, %v2006
    %v2020 = vpack.c.b16 %v2009, %v2008
    %v2021 = vpack.c.b16 %v2011, %v2010
    %v2022 = vpack.c.b16 %v2013, %v2012
    %v2023 = vpack.c.b16 %v2015, %v2014
    %v2025 = vsel %vm817, %v2016, 0
    %v2028 = vsel %vm817, %v2017, 0
    %v2031 = vsel %vm817, %v2018, 0
    %v2034 = vsel %vm817, %v2019, 0
    %v2037 = vsel %vm817, %v2020, 0
    %v2040 = vsel %vm817, %v2021, 0
    %v2043 = vsel %vm817, %v2022, 0
    %v2046 = vsel %vm817, %v2023, 0
    %v2049 = vsel %vm842, %v1999, 0
    %2051 = vmatprep.subr.bf16.mxu0 0
    %2052 = vmatpush1.bf16.msra.mxu0 %v2049
    %2053 = vmatprep.subr.bf16.mxu0 0
    %2054 = vmatpush1.bf16.msra.mxu0 0
    %2055 = vmatprep.subr.bf16.mxu0 0
    %2056 = vmatpush1.bf16.msra.mxu0 0
    %2057 = vmatprep.subr.bf16.mxu0 0
    %2058 = vmatpush1.bf16.msra.mxu0 0
    %2059 = vmatprep.subr.bf16.mxu0 0
    %2060 = vmatpush1.bf16.msra.mxu0 0
    %2061 = vmatprep.subr.bf16.mxu0 0
    %2062 = vmatpush1.bf16.msra.mxu0 0
    %2063 = vmatprep.subr.bf16.mxu0 0
    %2064 = vmatpush1.bf16.msra.mxu0 0
    %2065 = vmatprep.subr.bf16.mxu0 0
    %2066 = vmatpush1.bf16.msra.mxu0 0
    %2067 = vmatprep.subr.bf16.mxu0 0
    %2068 = vmatpush1.bf16.msra.mxu0 0
    %2069 = vmatprep.subr.bf16.mxu0 0
    %2070 = vmatpush1.bf16.msra.mxu0 0
    %2071 = vmatprep.subr.bf16.mxu0 0
    %2072 = vmatpush1.bf16.msra.mxu0 0
    %2073 = vmatprep.subr.bf16.mxu0 0
    %2074 = vmatpush1.bf16.msra.mxu0 0
    %2075 = vmatprep.subr.bf16.mxu0 0
    %2076 = vmatpush1.bf16.msra.mxu0 0
    %2077 = vmatprep.subr.bf16.mxu0 0
    %2078 = vmatpush1.bf16.msra.mxu0 0
    %2079 = vmatprep.subr.bf16.mxu0 0
    %2080 = vmatpush1.bf16.msra.mxu0 0
    %2081 = vmatprep.subr.bf16.mxu0 0
    %2082 = vmatpush1.bf16.msra.mxu0 0
    %2083 = vmatprep.mubr.bf16.mxu0 0
    %2084 = vmatmul.mubr.bf16.gmra.mrb[0].mxu0 %v2025
    %v2085 = vpop.f32.mrb[0].mxu0
    %v2086 = vadd.f32 0.0, %v2085
    %v2087 = vpop.f32.mrb[0].mxu0
    %v2088 = vpop.f32.mrb[0].mxu0
    %v2089 = vadd.f32 0.0, %v2088
    %v2090 = vpop.f32.mrb[0].mxu0
    %2091 = vmatprep.mubr.bf16.mxu0 0
    %2092 = vmatmul.mubr.bf16.gmra.mrb[0].mxu0 %v2028
    %v2093 = vpop.f32.mrb[0].mxu0
    %v2094 = vadd.f32 0.0, %v2093
    %v2095 = vpop.f32.mrb[0].mxu0
    %v2096 = vpop.f32.mrb[0].mxu0
    %v2097 = vadd.f32 0.0, %v2096
    %v2098 = vpop.f32.mrb[0].mxu0
    %2099 = vmatprep.mubr.bf16.mxu0 0
    %2100 = vmatmul.mubr.bf16.gmra.mrb[0].mxu0 %v2031
    %v2101 = vpop.f32.mrb[0].mxu0
    %v2102 = vadd.f32 0.0, %v2101
    %v2103 = vpop.f32.mrb[0].mxu0
    %v2104 = vpop.f32.mrb[0].mxu0
    %v2105 = vadd.f32 0.0, %v2104
    %v2106 = vpop.f32.mrb[0].mxu0
    %2107 = vmatprep.mubr.bf16.mxu0 0
    %2108 = vmatmul.mubr.bf16.gmra.mrb[0].mxu0 %v2034
    %v2109 = vpop.f32.mrb[0].mxu0
    %v2110 = vadd.f32 0.0, %v2109
    %v2111 = vpop.f32.mrb[0].mxu0
    %v2112 = vpop.f32.mrb[0].mxu0
    %v2113 = vadd.f32 0.0, %v2112
    %v2114 = vpop.f32.mrb[0].mxu0
    %2115 = vmatprep.mubr.bf16.mxu0 0
    %2116 = vmatmul.mubr.bf16.gmra.mrb[0].mxu0 %v2037
    %v2117 = vpop.f32.mrb[0].mxu0
    %v2118 = vadd.f32 0.0, %v2117
    %v2119 = vpop.f32.mrb[0].mxu0
    %v2120 = vpop.f32.mrb[0].mxu0
    %v2121 = vadd.f32 0.0, %v2120
    %v2122 = vpop.f32.mrb[0].mxu0
    %2123 = vmatprep.mubr.bf16.mxu0 0
    %2124 = vmatmul.mubr.bf16.gmra.mrb[0].mxu0 %v2040
    %v2125 = vpop.f32.mrb[0].mxu0
    %v2126 = vadd.f32 0.0, %v2125
    %v2127 = vpop.f32.mrb[0].mxu0
    %v2128 = vpop.f32.mrb[0].mxu0
    %v2129 = vadd.f32 0.0, %v2128
    %v2130 = vpop.f32.mrb[0].mxu0
    %2131 = vmatprep.mubr.bf16.mxu0 0
    %2132 = vmatmul.mubr.bf16.gmra.mrb[0].mxu0 %v2043
    %v2133 = vpop.f32.mrb[0].mxu0
    %v2134 = vadd.f32 0.0, %v2133
    %v2135 = vpop.f32.mrb[0].mxu0
    %v2136 = vpop.f32.mrb[0].mxu0
    %v2137 = vadd.f32 0.0, %v2136
    %v2138 = vpop.f32.mrb[0].mxu0
    %2139 = vmatprep.mubr.bf16.mxu0 0
    %2140 = vmatmul.mubr.bf16.gmra.mrb[0].mxu0 %v2046
    %v2141 = vpop.f32.mrb[0].mxu0
    %v2142 = vadd.f32 0.0, %v2141
    %v2143 = vpop.f32.mrb[0].mxu0
    %v2144 = vpop.f32.mrb[0].mxu0
    %v2145 = vadd.f32 0.0, %v2144
    %v2146 = vpop.f32.mrb[0].mxu0
    %2147 = vdwg.mxu0
    %v2148 = vadd.f32 %v1915, %v2086
    %v2149 = vadd.f32 %v1916, %v2089
    %v2150 = vadd.f32 %v1917, %v2094
    %v2151 = vadd.f32 %v1918, %v2097
    %v2152 = vadd.f32 %v1919, %v2102
    %v2153 = vadd.f32 %v1920, %v2105
    %v2154 = vadd.f32 %v1921, %v2110
    %v2155 = vadd.f32 %v1922, %v2113
    %v2156 = vadd.f32 %v1923, %v2118
    %v2157 = vadd.f32 %v1924, %v2121
    %v2158 = vadd.f32 %v1925, %v2126
    %v2159 = vadd.f32 %v1926, %v2129
    %v2160 = vadd.f32 %v1927, %v2134
    %v2161 = vadd.f32 %v1928, %v2137
    %v2162 = vadd.f32 %v1929, %v2142
    %v2163 = vadd.f32 %v1930, %v2145
    %v2164 = vld [vmem:[#allocation2 + $0x14] sm:$0xf]
    %v2165 = vld [vmem:[#allocation2 + $0x30] sm:$0xf]
    %v2166 = vld [vmem:[#allocation2 + $0x4c] sm:$0xf]
    %v2167 = vld [vmem:[#allocation2 + $0x68] sm:$0xf]
    %vm2168 = vsmask.f32 256
    %vm2169 = vsmask.f32 4368
    %vm2170 = vmor %vm2168, %vm2169
    %v2172 = vshrl.u32 %v1931, 16
    %v2174 = vrot.slane %v2172, 7
    %v2175 = vrot.slane %v2174, 4
    %v2176 = vrot.slane %v549, 7
    %v2177 = vor.u32 %v2176, %v545
    %v2178 = vsel %vm2170, %v2175, %v2177
    %v2179 = vrot.slane %v2176, 4
    %v2180 = vrot.slane %v559, 7
    %v2181 = vor.u32 %v2180, %v555
    %v2182 = vsel %vm2170, %v2179, %v2181
    %v2183 = vrot.slane %v2180, 4
    %v2184 = vrot.slane %v569, 7
    %v2185 = vor.u32 %v2184, %v565
    %v2186 = vsel %vm2170, %v2183, %v2185
    %v2187 = vrot.slane %v2184, 4
    %v2189 = vshrl.u32 %v2164, 16
    %v2191 = vrot.slane %v2189, 7
    %v2192 = vshll.u32 %v2164, 16
    %v2194 = vor.u32 %v2191, %v2192
    %v2195 = vsel %vm2170, %v2187, %v2194
    %v2197 = vshrl.u32 %v1932, 16
    %v2199 = vrot.slane %v2197, 7
    %v2200 = vrot.slane %v2199, 4
    %v2201 = vrot.slane %v593, 7
    %v2202 = vor.u32 %v2201, %v589
    %v2203 = vsel %vm2170, %v2200, %v2202
    %v2204 = vrot.slane %v2201, 4
    %v2205 = vrot.slane %v603, 7
    %v2206 = vor.u32 %v2205, %v599
    %v2207 = vsel %vm2170, %v2204, %v2206
    %v2208 = vrot.slane %v2205, 4
    %v2209 = vrot.slane %v613, 7
    %v2210 = vor.u32 %v2209, %v609
    %v2211 = vsel %vm2170, %v2208, %v2210
    %v2212 = vrot.slane %v2209, 4
    %v2214 = vshrl.u32 %v2165, 16
    %v2216 = vrot.slane %v2214, 7
    %v2217 = vshll.u32 %v2165, 16
    %v2219 = vor.u32 %v2216, %v2217
    %v2220 = vsel %vm2170, %v2212, %v2219
    %v2222 = vshrl.u32 %v1933, 16
    %v2224 = vrot.slane %v2222, 7
    %v2225 = vrot.slane %v2224, 4
    %v2226 = vrot.slane %v637, 7
    %v2227 = vor.u32 %v2226, %v633
    %v2228 = vsel %vm2170, %v2225, %v2227
    %v2229 = vrot.slane %v2226, 4
    %v2230 = vrot.slane %v647, 7
    %v2231 = vor.u32 %v2230, %v643
    %v2232 = vsel %vm2170, %v2229, %v2231
    %v2233 = vrot.slane %v2230, 4
    %v2234 = vrot.slane %v657, 7
    %v2235 = vor.u32 %v2234, %v653
    %v2236 = vsel %vm2170, %v2233, %v2235
    %v2237 = vrot.slane %v2234, 4
    %v2239 = vshrl.u32 %v2166, 16
    %v2241 = vrot.slane %v2239, 7
    %v2242 = vshll.u32 %v2166, 16
    %v2244 = vor.u32 %v2241, %v2242
    %v2245 = vsel %vm2170, %v2237, %v2244
    %v2247 = vshrl.u32 %v1934, 16
    %v2249 = vrot.slane %v2247, 7
    %v2250 = vrot.slane %v2249, 4
    %v2251 = vrot.slane %v681, 7
    %v2252 = vor.u32 %v2251, %v677
    %v2253 = vsel %vm2170, %v2250, %v2252
    %v2254 = vrot.slane %v2251, 4
    %v2255 = vrot.slane %v691, 7
    %v2256 = vor.u32 %v2255, %v687
    %v2257 = vsel %vm2170, %v2254, %v2256
    %v2258 = vrot.slane %v2255, 4
    %v2259 = vrot.slane %v701, 7
    %v2260 = vor.u32 %v2259, %v697
    %v2261 = vsel %vm2170, %v2258, %v2260
    %v2262 = vrot.slane %v2259, 4
    %v2264 = vshrl.u32 %v2167, 16
    %v2266 = vrot.slane %v2264, 7
    %v2267 = vshll.u32 %v2167, 16
    %v2269 = vor.u32 %v2266, %v2267
    %v2270 = vsel %vm2170, %v2262, %v2269
    %s2271 = scalar_lea.vmem [#allocation9], 24
    %v2272 = vld [vmem:[%s2271] sm:$0xf]
    %v2273 = vunpack.c.l.b16 %v2178
    %v2274 = vunpack.c.l.b16 %v2182
    %v2275 = vunpack.c.l.b16 %v2186
    %v2276 = vunpack.c.l.b16 %v2195
    %v2277 = vunpack.c.l.b16 %v2203
    %v2278 = vunpack.c.l.b16 %v2207
    %v2279 = vunpack.c.l.b16 %v2211
    %v2280 = vunpack.c.l.b16 %v2220
    %v2281 = vunpack.c.l.b16 %v2228
    %v2282 = vunpack.c.l.b16 %v2232
    %v2283 = vunpack.c.l.b16 %v2236
    %v2284 = vunpack.c.l.b16 %v2245
    %v2285 = vunpack.c.l.b16 %v2253
    %v2286 = vunpack.c.l.b16 %v2257
    %v2287 = vunpack.c.l.b16 %v2261
    %v2288 = vunpack.c.l.b16 %v2270
    %v2289 = vpack.c.b16 %v2274, %v2273
    %v2290 = vpack.c.b16 %v2276, %v2275
    %v2291 = vpack.c.b16 %v2278, %v2277
    %v2292 = vpack.c.b16 %v2280, %v2279
    %v2293 = vpack.c.b16 %v2282, %v2281
    %v2294 = vpack.c.b16 %v2284, %v2283
    %v2295 = vpack.c.b16 %v2286, %v2285
    %v2296 = vpack.c.b16 %v2288, %v2287
    %v2298 = vsel %vm817, %v2289, 0
    %v2301 = vsel %vm817, %v2290, 0
    %v2304 = vsel %vm817, %v2291, 0
    %v2307 = vsel %vm817, %v2292, 0
    %v2310 = vsel %vm817, %v2293, 0
    %v2313 = vsel %vm817, %v2294, 0
    %v2316 = vsel %vm817, %v2295, 0
    %v2319 = vsel %vm817, %v2296, 0
    %v2322 = vsel %vm842, %v2272, 0
    %2324 = vmatprep.subr.bf16.mxu0 0
    %2325 = vmatpush1.bf16.msra.mxu0 %v2322
    %2326 = vmatprep.subr.bf16.mxu0 0
    %2327 = vmatpush1.bf16.msra.mxu0 0
    %2328 = vmatprep.subr.bf16.mxu0 0
    %2329 = vmatpush1.bf16.msra.mxu0 0
    %2330 = vmatprep.subr.bf16.mxu0 0
    %2331 = vmatpush1.bf16.msra.mxu0 0
    %2332 = vmatprep.subr.bf16.mxu0 0
    %2333 = vmatpush1.bf16.msra.mxu0 0
    %2334 = vmatprep.subr.bf16.mxu0 0
    %2335 = vmatpush1.bf16.msra.mxu0 0
    %2336 = vmatprep.subr.bf16.mxu0 0
    %2337 = vmatpush1.bf16.msra.mxu0 0
    %2338 = vmatprep.subr.bf16.mxu0 0
    %2339 = vmatpush1.bf16.msra.mxu0 0
    %2340 = vmatprep.subr.bf16.mxu0 0
    %2341 = vmatpush1.bf16.msra.mxu0 0
    %2342 = vmatprep.subr.bf16.mxu0 0
    %2343 = vmatpush1.bf16.msra.mxu0 0
    %2344 = vmatprep.subr.bf16.mxu0 0
    %2345 = vmatpush1.bf16.msra.mxu0 0
    %2346 = vmatprep.subr.bf16.mxu0 0
    %2347 = vmatpush1.bf16.msra.mxu0 0
    %2348 = vmatprep.subr.bf16.mxu0 0
    %2349 = vmatpush1.bf16.msra.mxu0 0
    %2350 = vmatprep.subr.bf16.mxu0 0
    %2351 = vmatpush1.bf16.msra.mxu0 0
    %2352 = vmatprep.subr.bf16.mxu0 0
    %2353 = vmatpush1.bf16.msra.mxu0 0
    %2354 = vmatprep.subr.bf16.mxu0 0
    %2355 = vmatpush1.bf16.msra.mxu0 0
    %2356 = vmatprep.mubr.bf16.mxu0 0
    %2357 = vmatmul.mubr.bf16.gmra.mrb[0].mxu0 %v2298
    %v2358 = vpop.f32.mrb[0].mxu0
    %v2359 = vadd.f32 0.0, %v2358
    %v2360 = vpop.f32.mrb[0].mxu0
    %v2361 = vpop.f32.mrb[0].mxu0
    %v2362 = vadd.f32 0.0, %v2361
    %v2363 = vpop.f32.mrb[0].mxu0
    %2364 = vmatprep.mubr.bf16.mxu0 0
    %2365 = vmatmul.mubr.bf16.gmra.mrb[0].mxu0 %v2301
    %v2366 = vpop.f32.mrb[0].mxu0
    %v2367 = vadd.f32 0.0, %v2366
    %v2368 = vpop.f32.mrb[0].mxu0
    %v2369 = vpop.f32.mrb[0].mxu0
    %v2370 = vadd.f32 0.0, %v2369
    %v2371 = vpop.f32.mrb[0].mxu0
    %2372 = vmatprep.mubr.bf16.mxu0 0
    %2373 = vmatmul.mubr.bf16.gmra.mrb[0].mxu0 %v2304
    %v2374 = vpop.f32.mrb[0].mxu0
    %v2375 = vadd.f32 0.0, %v2374
    %v2376 = vpop.f32.mrb[0].mxu0
    %v2377 = vpop.f32.mrb[0].mxu0
    %v2378 = vadd.f32 0.0, %v2377
    %v2379 = vpop.f32.mrb[0].mxu0
    %2380 = vmatprep.mubr.bf16.mxu0 0
    %2381 = vmatmul.mubr.bf16.gmra.mrb[0].mxu0 %v2307
    %v2382 = vpop.f32.mrb[0].mxu0
    %v2383 = vadd.f32 0.0, %v2382
    %v2384 = vpop.f32.mrb[0].mxu0
    %v2385 = vpop.f32.mrb[0].mxu0
    %v2386 = vadd.f32 0.0, %v2385
    %v2387 = vpop.f32.mrb[0].mxu0
    %2388 = vmatprep.mubr.bf16.mxu0 0
    %2389 = vmatmul.mubr.bf16.gmra.mrb[0].mxu0 %v2310
    %v2390 = vpop.f32.mrb[0].mxu0
    %v2391 = vadd.f32 0.0, %v2390
    %v2392 = vpop.f32.mrb[0].mxu0
    %v2393 = vpop.f32.mrb[0].mxu0
    %v2394 = vadd.f32 0.0, %v2393
    %v2395 = vpop.f32.mrb[0].mxu0
    %2396 = vmatprep.mubr.bf16.mxu0 0
    %2397 = vmatmul.mubr.bf16.gmra.mrb[0].mxu0 %v2313
    %v2398 = vpop.f32.mrb[0].mxu0
    %v2399 = vadd.f32 0.0, %v2398
    %v2400 = vpop.f32.mrb[0].mxu0
    %v2401 = vpop.f32.mrb[0].mxu0
    %v2402 = vadd.f32 0.0, %v2401
    %v2403 = vpop.f32.mrb[0].mxu0
    %2404 = vmatprep.mubr.bf16.mxu0 0
    %2405 = vmatmul.mubr.bf16.gmra.mrb[0].mxu0 %v2316
    %v2406 = vpop.f32.mrb[0].mxu0
    %v2407 = vadd.f32 0.0, %v2406
    %v2408 = vpop.f32.mrb[0].mxu0
    %v2409 = vpop.f32.mrb[0].mxu0
    %v2410 = vadd.f32 0.0, %v2409
    %v2411 = vpop.f32.mrb[0].mxu0
    %2412 = vmatprep.mubr.bf16.mxu0 0
    %2413 = vmatmul.mubr.bf16.gmra.mrb[0].mxu0 %v2319
    %v2414 = vpop.f32.mrb[0].mxu0
    %v2415 = vadd.f32 0.0, %v2414
    %v2416 = vpop.f32.mrb[0].mxu0
    %v2417 = vpop.f32.mrb[0].mxu0
    %v2418 = vadd.f32 0.0, %v2417
    %v2419 = vpop.f32.mrb[0].mxu0
    %2420 = vdwg.mxu0
    %v2421 = vadd.f32 %v2148, %v2359
    %v2422 = vadd.f32 %v2149, %v2362
    %v2423 = vadd.f32 %v2150, %v2367
    %v2424 = vadd.f32 %v2151, %v2370
    %v2425 = vadd.f32 %v2152, %v2375
    %v2426 = vadd.f32 %v2153, %v2378
    %v2427 = vadd.f32 %v2154, %v2383
    %v2428 = vadd.f32 %v2155, %v2386
    %v2429 = vadd.f32 %v2156, %v2391
    %v2430 = vadd.f32 %v2157, %v2394
    %v2431 = vadd.f32 %v2158, %v2399
    %v2432 = vadd.f32 %v2159, %v2402
    %v2433 = vadd.f32 %v2160, %v2407
    %v2434 = vadd.f32 %v2161, %v2410
    %v2435 = vadd.f32 %v2162, %v2415
    %v2436 = vadd.f32 %v2163, %v2418
    %v2437 = vld [vmem:[#allocation11] sm:$0x1]
    %v2439 = vlaneseq
    %v2440 = vshrl.u32 %v2439, 7
    %v2441 = vsub.s32 0, %v2440
    %v2442 = vrot.slane %v2437, %v2441
    %v2444 = vadd.f32 %v2421, %v2442
    %v2445 = vadd.f32 %v2422, %v2442
    %v2446 = vadd.f32 %v2423, %v2442
    %v2447 = vadd.f32 %v2424, %v2442
    %v2448 = vadd.f32 %v2425, %v2442
    %v2449 = vadd.f32 %v2426, %v2442
    %v2450 = vadd.f32 %v2427, %v2442
    %v2451 = vadd.f32 %v2428, %v2442
    %v2452 = vadd.f32 %v2429, %v2442
    %v2453 = vadd.f32 %v2430, %v2442
    %v2454 = vadd.f32 %v2431, %v2442
    %v2455 = vadd.f32 %v2432, %v2442
    %v2456 = vadd.f32 %v2433, %v2442
    %v2457 = vadd.f32 %v2434, %v2442
    %v2458 = vadd.f32 %v2435, %v2442
    %v2459 = vadd.f32 %v2436, %v2442
    %v2460 = vmax.f32 %v2444, 0.0
    %v2461 = vmax.f32 %v2445, 0.0
    %v2462 = vmax.f32 %v2446, 0.0
    %v2463 = vmax.f32 %v2447, 0.0
    %v2464 = vmax.f32 %v2448, 0.0
    %v2465 = vmax.f32 %v2449, 0.0
    %v2466 = vmax.f32 %v2450, 0.0
    %v2467 = vmax.f32 %v2451, 0.0
    %v2468 = vmax.f32 %v2452, 0.0
    %v2469 = vmax.f32 %v2453, 0.0
    %v2470 = vmax.f32 %v2454, 0.0
    %v2471 = vmax.f32 %v2455, 0.0
    %v2472 = vmax.f32 %v2456, 0.0
    %v2473 = vmax.f32 %v2457, 0.0
    %v2474 = vmax.f32 %v2458, 0.0
    %v2475 = vmax.f32 %v2459, 0.0
    %v2476 = vadd.f32 %v2460, %v296
    %v2477 = vadd.f32 %v2461, %v299
    %v2478 = vadd.f32 %v2462, %v304
    %v2479 = vadd.f32 %v2463, %v307
    %v2480 = vadd.f32 %v2464, %v312
    %v2481 = vadd.f32 %v2465, %v315
    %v2482 = vadd.f32 %v2466, %v320
    %v2483 = vadd.f32 %v2467, %v323
    %v2484 = vadd.f32 %v2468, %v328
    %v2485 = vadd.f32 %v2469, %v331
    %v2486 = vadd.f32 %v2470, %v336
    %v2487 = vadd.f32 %v2471, %v339
    %v2488 = vadd.f32 %v2472, %v344
    %v2489 = vadd.f32 %v2473, %v347
    %v2490 = vadd.f32 %v2474, %v352
    %v2491 = vadd.f32 %v2475, %v355
    %v2492 = vpack.c.bf16 %v2477, %v2476
    %v2493 = vpack.c.bf16 %v2479, %v2478
    %v2494 = vpack.c.bf16 %v2481, %v2480
    %v2495 = vpack.c.bf16 %v2483, %v2482
    %v2496 = vpack.c.bf16 %v2485, %v2484
    %v2497 = vpack.c.bf16 %v2487, %v2486
    %v2498 = vpack.c.bf16 %v2489, %v2488
    %v2499 = vpack.c.bf16 %v2491, %v2490
    %v2500 = vld [vmem:[#allocation12] sm:$0xf]
    %v2501 = vld [vmem:[#allocation2] sm:$0x8]
    %v2502 = vld [vmem:[#allocation2 + $0x4] sm:$0xf]
    %v2503 = vld [vmem:[#allocation2 + $0x8] sm:$0xf]
    %v2504 = vld [vmem:[#allocation2 + $0xc] sm:$0xf]
    %v2505 = vld [vmem:[#allocation2 + $0x10] sm:$0x7]
    %v2506 = vld [vmem:[#allocation2 + $0x1c] sm:$0x8]
    %v2507 = vld [vmem:[#allocation2 + $0x20] sm:$0xf]
    %v2508 = vld [vmem:[#allocation2 + $0x24] sm:$0xf]
    %v2509 = vld [vmem:[#allocation2 + $0x28] sm:$0xf]
    %v2510 = vld [vmem:[#allocation2 + $0x2c] sm:$0x7]
    %v2511 = vld [vmem:[#allocation2 + $0x38] sm:$0x8]
    %v2512 = vld [vmem:[#allocation2 + $0x3c] sm:$0xf]
    %v2513 = vld [vmem:[#allocation2 + $0x40] sm:$0xf]
    %v2514 = vld [vmem:[#allocation2 + $0x44] sm:$0xf]
    %v2515 = vld [vmem:[#allocation2 + $0x48] sm:$0x7]
    %v2516 = vld [vmem:[#allocation2 + $0x54] sm:$0x8]
    %v2517 = vld [vmem:[#allocation2 + $0x58] sm:$0xf]
    %v2518 = vld [vmem:[#allocation2 + $0x5c] sm:$0xf]
    %v2519 = vld [vmem:[#allocation2 + $0x60] sm:$0xf]
    %v2520 = vld [vmem:[#allocation2 + $0x64] sm:$0x7]
    %v2541 = vrot.slane %v2501, 7
    %v2542 = vrot.slane %v2541, 4
    %v2543 = vrot.slane %v2502, 7
    %v2544 = vsel %vm1945, %v2542, %v2543
    %v2545 = vrot.slane %v2543, 4
    %v2546 = vrot.slane %v2503, 7
    %v2547 = vsel %vm1945, %v2545, %v2546
    %v2548 = vrot.slane %v2546, 4
    %v2549 = vrot.slane %v2504, 7
    %v2550 = vsel %vm1945, %v2548, %v2549
    %v2551 = vrot.slane %v2549, 4
    %v2552 = vrot.slane %v2505, 7
    %v2553 = vsel %vm1945, %v2551, %v2552
    %v2554 = vrot.slane %v2506, 7
    %v2555 = vrot.slane %v2554, 4
    %v2556 = vrot.slane %v2507, 7
    %v2557 = vsel %vm1945, %v2555, %v2556
    %v2558 = vrot.slane %v2556, 4
    %v2559 = vrot.slane %v2508, 7
    %v2560 = vsel %vm1945, %v2558, %v2559
    %v2561 = vrot.slane %v2559, 4
    %v2562 = vrot.slane %v2509, 7
    %v2563 = vsel %vm1945, %v2561, %v2562
    %v2564 = vrot.slane %v2562, 4
    %v2565 = vrot.slane %v2510, 7
    %v2566 = vsel %vm1945, %v2564, %v2565
    %v2567 = vrot.slane %v2511, 7
    %v2568 = vrot.slane %v2567, 4
    %v2569 = vrot.slane %v2512, 7
    %v2570 = vsel %vm1945, %v2568, %v2569
    %v2571 = vrot.slane %v2569, 4
    %v2572 = vrot.slane %v2513, 7
    %v2573 = vsel %vm1945, %v2571, %v2572
    %v2574 = vrot.slane %v2572, 4
    %v2575 = vrot.slane %v2514, 7
    %v2576 = vsel %vm1945, %v2574, %v2575
    %v2577 = vrot.slane %v2575, 4
    %v2578 = vrot.slane %v2515, 7
    %v2579 = vsel %vm1945, %v2577, %v2578
    %v2580 = vrot.slane %v2516, 7
    %v2581 = vrot.slane %v2580, 4
    %v2582 = vrot.slane %v2517, 7
    %v2583 = vsel %vm1945, %v2581, %v2582
    %v2584 = vrot.slane %v2582, 4
    %v2585 = vrot.slane %v2518, 7
    %v2586 = vsel %vm1945, %v2584, %v2585
    %v2587 = vrot.slane %v2585, 4
    %v2588 = vrot.slane %v2519, 7
    %v2589 = vsel %vm1945, %v2587, %v2588
    %v2590 = vrot.slane %v2588, 4
    %v2591 = vrot.slane %v2520, 7
    %v2592 = vsel %vm1945, %v2590, %v2591
    %s2593 = scalar_lea.vmem [#allocation9], 28
    %v2594 = vld [vmem:[%s2593] sm:$0xf]
    %v2595 = vld [vmem:[#allocation2 + $0x10] sm:$0xf]
    %v2596 = vld [vmem:[#allocation2 + $0x2c] sm:$0xf]
    %v2597 = vld [vmem:[#allocation2 + $0x48] sm:$0xf]
    %v2598 = vld [vmem:[#allocation2 + $0x64] sm:$0xf]
    %s2599 = scalar_lea.vmem [#allocation9], 32
    %v2600 = vld [vmem:[%s2599] sm:$0xf]
    %v2605 = vunpack.c.l.b16 %v2502
    %v2606 = vunpack.c.l.b16 %v2503
    %v2607 = vunpack.c.l.b16 %v2504
    %v2608 = vunpack.c.l.b16 %v2595
    %v2609 = vunpack.c.l.b16 %v2507
    %v2610 = vunpack.c.l.b16 %v2508
    %v2611 = vunpack.c.l.b16 %v2509
    %v2612 = vunpack.c.l.b16 %v2596
    %v2613 = vunpack.c.l.b16 %v2512
    %v2614 = vunpack.c.l.b16 %v2513
    %v2615 = vunpack.c.l.b16 %v2514
    %v2616 = vunpack.c.l.b16 %v2597
    %v2617 = vunpack.c.l.b16 %v2517
    %v2618 = vunpack.c.l.b16 %v2518
    %v2619 = vunpack.c.l.b16 %v2519
    %v2620 = vunpack.c.l.b16 %v2598
    %v2621 = vpack.c.b16 %v2606, %v2605
    %v2622 = vpack.c.b16 %v2608, %v2607
    %v2623 = vpack.c.b16 %v2610, %v2609
    %v2624 = vpack.c.b16 %v2612, %v2611
    %v2625 = vpack.c.b16 %v2614, %v2613
    %v2626 = vpack.c.b16 %v2616, %v2615
    %v2627 = vpack.c.b16 %v2618, %v2617
    %v2628 = vpack.c.b16 %v2620, %v2619
    %v2630 = vsel %vm817, %v2621, 0
    %v2633 = vsel %vm817, %v2622, 0
    %v2636 = vsel %vm817, %v2623, 0
    %v2639 = vsel %vm817, %v2624, 0
    %v2642 = vsel %vm817, %v2625, 0
    %v2645 = vsel %vm817, %v2626, 0
    %v2648 = vsel %vm817, %v2627, 0
    %v2651 = vsel %vm817, %v2628, 0
    %v2654 = vsel %vm842, %v2600, 0
    %2656 = vmatprep.subr.bf16.mxu0 0
    %2657 = vmatpush1.bf16.msra.mxu0 %v2654
    %2658 = vmatprep.subr.bf16.mxu0 0
    %2659 = vmatpush1.bf16.msra.mxu0 0
    %2660 = vmatprep.subr.bf16.mxu0 0
    %2661 = vmatpush1.bf16.msra.mxu0 0
    %2662 = vmatprep.subr.bf16.mxu0 0
    %2663 = vmatpush1.bf16.msra.mxu0 0
    %2664 = vmatprep.subr.bf16.mxu0 0
    %2665 = vmatpush1.bf16.msra.mxu0 0
    %2666 = vmatprep.subr.bf16.mxu0 0
    %2667 = vmatpush1.bf16.msra.mxu0 0
    %2668 = vmatprep.subr.bf16.mxu0 0
    %2669 = vmatpush1.bf16.msra.mxu0 0
    %2670 = vmatprep.subr.bf16.mxu0 0
    %2671 = vmatpush1.bf16.msra.mxu0 0
    %2672 = vmatprep.subr.bf16.mxu0 0
    %2673 = vmatpush1.bf16.msra.mxu0 0
    %2674 = vmatprep.subr.bf16.mxu0 0
    %2675 = vmatpush1.bf16.msra.mxu0 0
    %2676 = vmatprep.subr.bf16.mxu0 0
    %2677 = vmatpush1.bf16.msra.mxu0 0
    %2678 = vmatprep.subr.bf16.mxu0 0
    %2679 = vmatpush1.bf16.msra.mxu0 0
    %2680 = vmatprep.subr.bf16.mxu0 0
    %2681 = vmatpush1.bf16.msra.mxu0 0
    %2682 = vmatprep.subr.bf16.mxu0 0
    %2683 = vmatpush1.bf16.msra.mxu0 0
    %2684 = vmatprep.subr.bf16.mxu0 0
    %2685 = vmatpush1.bf16.msra.mxu0 0
    %2686 = vmatprep.subr.bf16.mxu0 0
    %2687 = vmatpush1.bf16.msra.mxu0 0
    %2688 = vmatprep.mubr.bf16.mxu0 0
    %2689 = vmatmul.mubr.bf16.gmra.mrb[0].mxu0 %v2630
    %v2690 = vpop.f32.mrb[0].mxu0
    %v2691 = vadd.f32 0.0, %v2690
    %v2692 = vpop.f32.mrb[0].mxu0
    %v2693 = vpop.f32.mrb[0].mxu0
    %v2694 = vadd.f32 0.0, %v2693
    %v2695 = vpop.f32.mrb[0].mxu0
    %2696 = vmatprep.mubr.bf16.mxu0 0
    %2697 = vmatmul.mubr.bf16.gmra.mrb[0].mxu0 %v2633
    %v2698 = vpop.f32.mrb[0].mxu0
    %v2699 = vadd.f32 0.0, %v2698
    %v2700 = vpop.f32.mrb[0].mxu0
    %v2701 = vpop.f32.mrb[0].mxu0
    %v2702 = vadd.f32 0.0, %v2701
    %v2703 = vpop.f32.mrb[0].mxu0
    %2704 = vmatprep.mubr.bf16.mxu0 0
    %2705 = vmatmul.mubr.bf16.gmra.mrb[0].mxu0 %v2636
    %v2706 = vpop.f32.mrb[0].mxu0
    %v2707 = vadd.f32 0.0, %v2706
    %v2708 = vpop.f32.mrb[0].mxu0
    %v2709 = vpop.f32.mrb[0].mxu0
    %v2710 = vadd.f32 0.0, %v2709
    %v2711 = vpop.f32.mrb[0].mxu0
    %2712 = vmatprep.mubr.bf16.mxu0 0
    %2713 = vmatmul.mubr.bf16.gmra.mrb[0].mxu0 %v2639
    %v2714 = vpop.f32.mrb[0].mxu0
    %v2715 = vadd.f32 0.0, %v2714
    %v2716 = vpop.f32.mrb[0].mxu0
    %v2717 = vpop.f32.mrb[0].mxu0
    %v2718 = vadd.f32 0.0, %v2717
    %v2719 = vpop.f32.mrb[0].mxu0
    %2720 = vmatprep.mubr.bf16.mxu0 0
    %2721 = vmatmul.mubr.bf16.gmra.mrb[0].mxu0 %v2642
    %v2722 = vpop.f32.mrb[0].mxu0
    %v2723 = vadd.f32 0.0, %v2722
    %v2724 = vpop.f32.mrb[0].mxu0
    %v2725 = vpop.f32.mrb[0].mxu0
    %v2726 = vadd.f32 0.0, %v2725
    %v2727 = vpop.f32.mrb[0].mxu0
    %2728 = vmatprep.mubr.bf16.mxu0 0
    %2729 = vmatmul.mubr.bf16.gmra.mrb[0].mxu0 %v2645
    %v2730 = vpop.f32.mrb[0].mxu0
    %v2731 = vadd.f32 0.0, %v2730
    %v2732 = vpop.f32.mrb[0].mxu0
    %v2733 = vpop.f32.mrb[0].mxu0
    %v2734 = vadd.f32 0.0, %v2733
    %v2735 = vpop.f32.mrb[0].mxu0
    %2736 = vmatprep.mubr.bf16.mxu0 0
    %2737 = vmatmul.mubr.bf16.gmra.mrb[0].mxu0 %v2648
    %v2738 = vpop.f32.mrb[0].mxu0
    %v2739 = vadd.f32 0.0, %v2738
    %v2740 = vpop.f32.mrb[0].mxu0
    %v2741 = vpop.f32.mrb[0].mxu0
    %v2742 = vadd.f32 0.0, %v2741
    %v2743 = vpop.f32.mrb[0].mxu0
    %2744 = vmatprep.mubr.bf16.mxu0 0
    %2745 = vmatmul.mubr.bf16.gmra.mrb[0].mxu0 %v2651
    %v2746 = vpop.f32.mrb[0].mxu0
    %v2747 = vadd.f32 0.0, %v2746
    %v2748 = vpop.f32.mrb[0].mxu0
    %v2749 = vpop.f32.mrb[0].mxu0
    %v2750 = vadd.f32 0.0, %v2749
    %v2751 = vpop.f32.mrb[0].mxu0
    %2752 = vdwg.mxu0
    %v2753 = vunpack.c.l.b16 %v2544
    %v2754 = vunpack.c.l.b16 %v2547
    %v2755 = vunpack.c.l.b16 %v2550
    %v2756 = vunpack.c.l.b16 %v2553
    %v2757 = vunpack.c.l.b16 %v2557
    %v2758 = vunpack.c.l.b16 %v2560
    %v2759 = vunpack.c.l.b16 %v2563
    %v2760 = vunpack.c.l.b16 %v2566
    %v2761 = vunpack.c.l.b16 %v2570
    %v2762 = vunpack.c.l.b16 %v2573
    %v2763 = vunpack.c.l.b16 %v2576
    %v2764 = vunpack.c.l.b16 %v2579
    %v2765 = vunpack.c.l.b16 %v2583
    %v2766 = vunpack.c.l.b16 %v2586
    %v2767 = vunpack.c.l.b16 %v2589
    %v2768 = vunpack.c.l.b16 %v2592
    %v2769 = vpack.c.b16 %v2754, %v2753
    %v2770 = vpack.c.b16 %v2756, %v2755
    %v2771 = vpack.c.b16 %v2758, %v2757
    %v2772 = vpack.c.b16 %v2760, %v2759
    %v2773 = vpack.c.b16 %v2762, %v2761
    %v2774 = vpack.c.b16 %v2764, %v2763
    %v2775 = vpack.c.b16 %v2766, %v2765
    %v2776 = vpack.c.b16 %v2768, %v2767
    %v2778 = vsel %vm817, %v2769, 0
    %v2781 = vsel %vm817, %v2770, 0
    %v2784 = vsel %vm817, %v2771, 0
    %v2787 = vsel %vm817, %v2772, 0
    %v2790 = vsel %vm817, %v2773, 0
    %v2793 = vsel %vm817, %v2774, 0
    %v2796 = vsel %vm817, %v2775, 0
    %v2799 = vsel %vm817, %v2776, 0
    %v2802 = vsel %vm842, %v2594, 0
    %2804 = vmatprep.subr.bf16.mxu0 0
    %2805 = vmatpush1.bf16.msra.mxu0 %v2802
    %2806 = vmatprep.subr.bf16.mxu0 0
    %2807 = vmatpush1.bf16.msra.mxu0 0
    %2808 = vmatprep.subr.bf16.mxu0 0
    %2809 = vmatpush1.bf16.msra.mxu0 0
    %2810 = vmatprep.subr.bf16.mxu0 0
    %2811 = vmatpush1.bf16.msra.mxu0 0
    %2812 = vmatprep.subr.bf16.mxu0 0
    %2813 = vmatpush1.bf16.msra.mxu0 0
    %2814 = vmatprep.subr.bf16.mxu0 0
    %2815 = vmatpush1.bf16.msra.mxu0 0
    %2816 = vmatprep.subr.bf16.mxu0 0
    %2817 = vmatpush1.bf16.msra.mxu0 0
    %2818 = vmatprep.subr.bf16.mxu0 0
    %2819 = vmatpush1.bf16.msra.mxu0 0
    %2820 = vmatprep.subr.bf16.mxu0 0
    %2821 = vmatpush1.bf16.msra.mxu0 0
    %2822 = vmatprep.subr.bf16.mxu0 0
    %2823 = vmatpush1.bf16.msra.mxu0 0
    %2824 = vmatprep.subr.bf16.mxu0 0
    %2825 = vmatpush1.bf16.msra.mxu0 0
    %2826 = vmatprep.subr.bf16.mxu0 0
    %2827 = vmatpush1.bf16.msra.mxu0 0
    %2828 = vmatprep.subr.bf16.mxu0 0
    %2829 = vmatpush1.bf16.msra.mxu0 0
    %2830 = vmatprep.subr.bf16.mxu0 0
    %2831 = vmatpush1.bf16.msra.mxu0 0
    %2832 = vmatprep.subr.bf16.mxu0 0
    %2833 = vmatpush1.bf16.msra.mxu0 0
    %2834 = vmatprep.subr.bf16.mxu0 0
    %2835 = vmatpush1.bf16.msra.mxu0 0
    %2836 = vmatprep.mubr.bf16.mxu0 0
    %2837 = vmatmul.mubr.bf16.gmra.mrb[0].mxu0 %v2778
    %v2838 = vpop.f32.mrb[0].mxu0
    %v2839 = vadd.f32 %v2691, %v2838
    %v2840 = vpop.f32.mrb[0].mxu0
    %v2841 = vpop.f32.mrb[0].mxu0
    %v2842 = vadd.f32 %v2694, %v2841
    %v2843 = vpop.f32.mrb[0].mxu0
    %2844 = vmatprep.mubr.bf16.mxu0 0
    %2845 = vmatmul.mubr.bf16.gmra.mrb[0].mxu0 %v2781
    %v2846 = vpop.f32.mrb[0].mxu0
    %v2847 = vadd.f32 %v2699, %v2846
    %v2848 = vpop.f32.mrb[0].mxu0
    %v2849 = vpop.f32.mrb[0].mxu0
    %v2850 = vadd.f32 %v2702, %v2849
    %v2851 = vpop.f32.mrb[0].mxu0
    %2852 = vmatprep.mubr.bf16.mxu0 0
    %2853 = vmatmul.mubr.bf16.gmra.mrb[0].mxu0 %v2784
    %v2854 = vpop.f32.mrb[0].mxu0
    %v2855 = vadd.f32 %v2707, %v2854
    %v2856 = vpop.f32.mrb[0].mxu0
    %v2857 = vpop.f32.mrb[0].mxu0
    %v2858 = vadd.f32 %v2710, %v2857
    %v2859 = vpop.f32.mrb[0].mxu0
    %2860 = vmatprep.mubr.bf16.mxu0 0
    %2861 = vmatmul.mubr.bf16.gmra.mrb[0].mxu0 %v2787
    %v2862 = vpop.f32.mrb[0].mxu0
    %v2863 = vadd.f32 %v2715, %v2862
    %v2864 = vpop.f32.mrb[0].mxu0
    %v2865 = vpop.f32.mrb[0].mxu0
    %v2866 = vadd.f32 %v2718, %v2865
    %v2867 = vpop.f32.mrb[0].mxu0
    %2868 = vmatprep.mubr.bf16.mxu0 0
    %2869 = vmatmul.mubr.bf16.gmra.mrb[0].mxu0 %v2790
    %v2870 = vpop.f32.mrb[0].mxu0
    %v2871 = vadd.f32 %v2723, %v2870
    %v2872 = vpop.f32.mrb[0].mxu0
    %v2873 = vpop.f32.mrb[0].mxu0
    %v2874 = vadd.f32 %v2726, %v2873
    %v2875 = vpop.f32.mrb[0].mxu0
    %2876 = vmatprep.mubr.bf16.mxu0 0
    %2877 = vmatmul.mubr.bf16.gmra.mrb[0].mxu0 %v2793
    %v2878 = vpop.f32.mrb[0].mxu0
    %v2879 = vadd.f32 %v2731, %v2878
    %v2880 = vpop.f32.mrb[0].mxu0
    %v2881 = vpop.f32.mrb[0].mxu0
    %v2882 = vadd.f32 %v2734, %v2881
    %v2883 = vpop.f32.mrb[0].mxu0
    %2884 = vmatprep.mubr.bf16.mxu0 0
    %2885 = vmatmul.mubr.bf16.gmra.mrb[0].mxu0 %v2796
    %v2886 = vpop.f32.mrb[0].mxu0
    %v2887 = vadd.f32 %v2739, %v2886
    %v2888 = vpop.f32.mrb[0].mxu0
    %v2889 = vpop.f32.mrb[0].mxu0
    %v2890 = vadd.f32 %v2742, %v2889
    %v2891 = vpop.f32.mrb[0].mxu0
    %2892 = vmatprep.mubr.bf16.mxu0 0
    %2893 = vmatmul.mubr.bf16.gmra.mrb[0].mxu0 %v2799
    %v2894 = vpop.f32.mrb[0].mxu0
    %v2895 = vadd.f32 %v2747, %v2894
    %v2896 = vpop.f32.mrb[0].mxu0
    %v2897 = vpop.f32.mrb[0].mxu0
    %v2898 = vadd.f32 %v2750, %v2897
    %v2899 = vpop.f32.mrb[0].mxu0
    %2900 = vdwg.mxu0
    %s2901 = scalar_lea.vmem [#allocation9], 36
    %v2902 = vld [vmem:[%s2901] sm:$0xf]
    %v2904 = vsel %vm842, %v2902, 0
    %2906 = vmatprep.subr.bf16.mxu0 0
    %2907 = vmatpush1.bf16.msra.mxu0 %v2904
    %2908 = vmatprep.subr.bf16.mxu0 0
    %2909 = vmatpush1.bf16.msra.mxu0 0
    %2910 = vmatprep.subr.bf16.mxu0 0
    %2911 = vmatpush1.bf16.msra.mxu0 0
    %2912 = vmatprep.subr.bf16.mxu0 0
    %2913 = vmatpush1.bf16.msra.mxu0 0
    %2914 = vmatprep.subr.bf16.mxu0 0
    %2915 = vmatpush1.bf16.msra.mxu0 0
    %2916 = vmatprep.subr.bf16.mxu0 0
    %2917 = vmatpush1.bf16.msra.mxu0 0
    %2918 = vmatprep.subr.bf16.mxu0 0
    %2919 = vmatpush1.bf16.msra.mxu0 0
    %2920 = vmatprep.subr.bf16.mxu0 0
    %2921 = vmatpush1.bf16.msra.mxu0 0
    %2922 = vmatprep.subr.bf16.mxu0 0
    %2923 = vmatpush1.bf16.msra.mxu0 0
    %2924 = vmatprep.subr.bf16.mxu0 0
    %2925 = vmatpush1.bf16.msra.mxu0 0
    %2926 = vmatprep.subr.bf16.mxu0 0
    %2927 = vmatpush1.bf16.msra.mxu0 0
    %2928 = vmatprep.subr.bf16.mxu0 0
    %2929 = vmatpush1.bf16.msra.mxu0 0
    %2930 = vmatprep.subr.bf16.mxu0 0
    %2931 = vmatpush1.bf16.msra.mxu0 0
    %2932 = vmatprep.subr.bf16.mxu0 0
    %2933 = vmatpush1.bf16.msra.mxu0 0
    %2934 = vmatprep.subr.bf16.mxu0 0
    %2935 = vmatpush1.bf16.msra.mxu0 0
    %2936 = vmatprep.subr.bf16.mxu0 0
    %2937 = vmatpush1.bf16.msra.mxu0 0
    %2938 = vmatprep.mubr.bf16.mxu0 0
    %2939 = vmatmul.mubr.bf16.gmra.mrb[0].mxu0 %v819
    %v2940 = vpop.f32.mrb[0].mxu0
    %v2941 = vadd.f32 0.0, %v2940
    %v2942 = vpop.f32.mrb[0].mxu0
    %v2943 = vpop.f32.mrb[0].mxu0
    %v2944 = vadd.f32 0.0, %v2943
    %v2945 = vpop.f32.mrb[0].mxu0
    %2946 = vmatprep.mubr.bf16.mxu0 0
    %2947 = vmatmul.mubr.bf16.gmra.mrb[0].mxu0 %v822
    %v2948 = vpop.f32.mrb[0].mxu0
    %v2949 = vadd.f32 0.0, %v2948
    %v2950 = vpop.f32.mrb[0].mxu0
    %v2951 = vpop.f32.mrb[0].mxu0
    %v2952 = vadd.f32 0.0, %v2951
    %v2953 = vpop.f32.mrb[0].mxu0
    %2954 = vmatprep.mubr.bf16.mxu0 0
    %2955 = vmatmul.mubr.bf16.gmra.mrb[0].mxu0 %v825
    %v2956 = vpop.f32.mrb[0].mxu0
    %v2957 = vadd.f32 0.0, %v2956
    %v2958 = vpop.f32.mrb[0].mxu0
    %v2959 = vpop.f32.mrb[0].mxu0
    %v2960 = vadd.f32 0.0, %v2959
    %v2961 = vpop.f32.mrb[0].mxu0
    %2962 = vmatprep.mubr.bf16.mxu0 0
    %2963 = vmatmul.mubr.bf16.gmra.mrb[0].mxu0 %v828
    %v2964 = vpop.f32.mrb[0].mxu0
    %v2965 = vadd.f32 0.0, %v2964
    %v2966 = vpop.f32.mrb[0].mxu0
    %v2967 = vpop.f32.mrb[0].mxu0
    %v2968 = vadd.f32 0.0, %v2967
    %v2969 = vpop.f32.mrb[0].mxu0
    %2970 = vmatprep.mubr.bf16.mxu0 0
    %2971 = vmatmul.mubr.bf16.gmra.mrb[0].mxu0 %v831
    %v2972 = vpop.f32.mrb[0].mxu0
    %v2973 = vadd.f32 0.0, %v2972
    %v2974 = vpop.f32.mrb[0].mxu0
    %v2975 = vpop.f32.mrb[0].mxu0
    %v2976 = vadd.f32 0.0, %v2975
    %v2977 = vpop.f32.mrb[0].mxu0
    %2978 = vmatprep.mubr.bf16.mxu0 0
    %2979 = vmatmul.mubr.bf16.gmra.mrb[0].mxu0 %v834
    %v2980 = vpop.f32.mrb[0].mxu0
    %v2981 = vadd.f32 0.0, %v2980
    %v2982 = vpop.f32.mrb[0].mxu0
    %v2983 = vpop.f32.mrb[0].mxu0
    %v2984 = vadd.f32 0.0, %v2983
    %v2985 = vpop.f32.mrb[0].mxu0
    %2986 = vmatprep.mubr.bf16.mxu0 0
    %2987 = vmatmul.mubr.bf16.gmra.mrb[0].mxu0 %v837
    %v2988 = vpop.f32.mrb[0].mxu0
    %v2989 = vadd.f32 0.0, %v2988
    %v2990 = vpop.f32.mrb[0].mxu0
    %v2991 = vpop.f32.mrb[0].mxu0
    %v2992 = vadd.f32 0.0, %v2991
    %v2993 = vpop.f32.mrb[0].mxu0
    %2994 = vmatprep.mubr.bf16.mxu0 0
    %2995 = vmatmul.mubr.bf16.gmra.mrb[0].mxu0 %v840
    %v2996 = vpop.f32.mrb[0].mxu0
    %v2997 = vadd.f32 0.0, %v2996
    %v2998 = vpop.f32.mrb[0].mxu0
    %v2999 = vpop.f32.mrb[0].mxu0
    %v3000 = vadd.f32 0.0, %v2999
    %v3001 = vpop.f32.mrb[0].mxu0
    %3002 = vdwg.mxu0
    %v3003 = vadd.f32 %v2839, %v2941
    %v3004 = vadd.f32 %v2842, %v2944
    %v3005 = vadd.f32 %v2847, %v2949
    %v3006 = vadd.f32 %v2850, %v2952
    %v3007 = vadd.f32 %v2855, %v2957
    %v3008 = vadd.f32 %v2858, %v2960
    %v3009 = vadd.f32 %v2863, %v2965
    %v3010 = vadd.f32 %v2866, %v2968
    %v3011 = vadd.f32 %v2871, %v2973
    %v3012 = vadd.f32 %v2874, %v2976
    %v3013 = vadd.f32 %v2879, %v2981
    %v3014 = vadd.f32 %v2882, %v2984
    %v3015 = vadd.f32 %v2887, %v2989
    %v3016 = vadd.f32 %v2890, %v2992
    %v3017 = vadd.f32 %v2895, %v2997
    %v3018 = vadd.f32 %v2898, %v3000
    %s3019 = scalar_lea.vmem [#allocation9], 40
    %v3020 = vld [vmem:[%s3019] sm:$0xf]
    %v3022 = vsel %vm842, %v3020, 0
    %3024 = vmatprep.subr.bf16.mxu0 0
    %3025 = vmatpush1.bf16.msra.mxu0 %v3022
    %3026 = vmatprep.subr.bf16.mxu0 0
    %3027 = vmatpush1.bf16.msra.mxu0 0
    %3028 = vmatprep.subr.bf16.mxu0 0
    %3029 = vmatpush1.bf16.msra.mxu0 0
    %3030 = vmatprep.subr.bf16.mxu0 0
    %3031 = vmatpush1.bf16.msra.mxu0 0
    %3032 = vmatprep.subr.bf16.mxu0 0
    %3033 = vmatpush1.bf16.msra.mxu0 0
    %3034 = vmatprep.subr.bf16.mxu0 0
    %3035 = vmatpush1.bf16.msra.mxu0 0
    %3036 = vmatprep.subr.bf16.mxu0 0
    %3037 = vmatpush1.bf16.msra.mxu0 0
    %3038 = vmatprep.subr.bf16.mxu0 0
    %3039 = vmatpush1.bf16.msra.mxu0 0
    %3040 = vmatprep.subr.bf16.mxu0 0
    %3041 = vmatpush1.bf16.msra.mxu0 0
    %3042 = vmatprep.subr.bf16.mxu0 0
    %3043 = vmatpush1.bf16.msra.mxu0 0
    %3044 = vmatprep.subr.bf16.mxu0 0
    %3045 = vmatpush1.bf16.msra.mxu0 0
    %3046 = vmatprep.subr.bf16.mxu0 0
    %3047 = vmatpush1.bf16.msra.mxu0 0
    %3048 = vmatprep.subr.bf16.mxu0 0
    %3049 = vmatpush1.bf16.msra.mxu0 0
    %3050 = vmatprep.subr.bf16.mxu0 0
    %3051 = vmatpush1.bf16.msra.mxu0 0
    %3052 = vmatprep.subr.bf16.mxu0 0
    %3053 = vmatpush1.bf16.msra.mxu0 0
    %3054 = vmatprep.subr.bf16.mxu0 0
    %3055 = vmatpush1.bf16.msra.mxu0 0
    %3056 = vmatprep.mubr.bf16.mxu0 0
    %3057 = vmatmul.mubr.bf16.gmra.mrb[0].mxu0 %v1487
    %v3058 = vpop.f32.mrb[0].mxu0
    %v3059 = vadd.f32 0.0, %v3058
    %v3060 = vpop.f32.mrb[0].mxu0
    %v3061 = vpop.f32.mrb[0].mxu0
    %v3062 = vadd.f32 0.0, %v3061
    %v3063 = vpop.f32.mrb[0].mxu0
    %3064 = vmatprep.mubr.bf16.mxu0 0
    %3065 = vmatmul.mubr.bf16.gmra.mrb[0].mxu0 %v1490
    %v3066 = vpop.f32.mrb[0].mxu0
    %v3067 = vadd.f32 0.0, %v3066
    %v3068 = vpop.f32.mrb[0].mxu0
    %v3069 = vpop.f32.mrb[0].mxu0
    %v3070 = vadd.f32 0.0, %v3069
    %v3071 = vpop.f32.mrb[0].mxu0
    %3072 = vmatprep.mubr.bf16.mxu0 0
    %3073 = vmatmul.mubr.bf16.gmra.mrb[0].mxu0 %v1493
    %v3074 = vpop.f32.mrb[0].mxu0
    %v3075 = vadd.f32 0.0, %v3074
    %v3076 = vpop.f32.mrb[0].mxu0
    %v3077 = vpop.f32.mrb[0].mxu0
    %v3078 = vadd.f32 0.0, %v3077
    %v3079 = vpop.f32.mrb[0].mxu0
    %3080 = vmatprep.mubr.bf16.mxu0 0
    %3081 = vmatmul.mubr.bf16.gmra.mrb[0].mxu0 %v1496
    %v3082 = vpop.f32.mrb[0].mxu0
    %v3083 = vadd.f32 0.0, %v3082
    %v3084 = vpop.f32.mrb[0].mxu0
    %v3085 = vpop.f32.mrb[0].mxu0
    %v3086 = vadd.f32 0.0, %v3085
    %v3087 = vpop.f32.mrb[0].mxu0
    %3088 = vmatprep.mubr.bf16.mxu0 0
    %3089 = vmatmul.mubr.bf16.gmra.mrb[0].mxu0 %v1499
    %v3090 = vpop.f32.mrb[0].mxu0
    %v3091 = vadd.f32 0.0, %v3090
    %v3092 = vpop.f32.mrb[0].mxu0
    %v3093 = vpop.f32.mrb[0].mxu0
    %v3094 = vadd.f32 0.0, %v3093
    %v3095 = vpop.f32.mrb[0].mxu0
    %3096 = vmatprep.mubr.bf16.mxu0 0
    %3097 = vmatmul.mubr.bf16.gmra.mrb[0].mxu0 %v1502
    %v3098 = vpop.f32.mrb[0].mxu0
    %v3099 = vadd.f32 0.0, %v3098
    %v3100 = vpop.f32.mrb[0].mxu0
    %v3101 = vpop.f32.mrb[0].mxu0
    %v3102 = vadd.f32 0.0, %v3101
    %v3103 = vpop.f32.mrb[0].mxu0
    %3104 = vmatprep.mubr.bf16.mxu0 0
    %3105 = vmatmul.mubr.bf16.gmra.mrb[0].mxu0 %v1505
    %v3106 = vpop.f32.mrb[0].mxu0
    %v3107 = vadd.f32 0.0, %v3106
    %v3108 = vpop.f32.mrb[0].mxu0
    %v3109 = vpop.f32.mrb[0].mxu0
    %v3110 = vadd.f32 0.0, %v3109
    %v3111 = vpop.f32.mrb[0].mxu0
    %3112 = vmatprep.mubr.bf16.mxu0 0
    %3113 = vmatmul.mubr.bf16.gmra.mrb[0].mxu0 %v1508
    %v3114 = vpop.f32.mrb[0].mxu0
    %v3115 = vadd.f32 0.0, %v3114
    %v3116 = vpop.f32.mrb[0].mxu0
    %v3117 = vpop.f32.mrb[0].mxu0
    %v3118 = vadd.f32 0.0, %v3117
    %v3119 = vpop.f32.mrb[0].mxu0
    %3120 = vdwg.mxu0
    %v3121 = vadd.f32 %v3003, %v3059
    %v3122 = vadd.f32 %v3004, %v3062
    %v3123 = vadd.f32 %v3005, %v3067
    %v3124 = vadd.f32 %v3006, %v3070
    %v3125 = vadd.f32 %v3007, %v3075
    %v3126 = vadd.f32 %v3008, %v3078
    %v3127 = vadd.f32 %v3009, %v3083
    %v3128 = vadd.f32 %v3010, %v3086
    %v3129 = vadd.f32 %v3011, %v3091
    %v3130 = vadd.f32 %v3012, %v3094
    %v3131 = vadd.f32 %v3013, %v3099
    %v3132 = vadd.f32 %v3014, %v3102
    %v3133 = vadd.f32 %v3015, %v3107
    %v3134 = vadd.f32 %v3016, %v3110
    %v3135 = vadd.f32 %v3017, %v3115
    %v3136 = vadd.f32 %v3018, %v3118
    %s3137 = scalar_lea.vmem [#allocation9], 44
    %v3138 = vld [vmem:[%s3137] sm:$0xf]
    %v3140 = vsel %vm842, %v3138, 0
    %3142 = vmatprep.subr.bf16.mxu0 0
    %3143 = vmatpush1.bf16.msra.mxu0 %v3140
    %3144 = vmatprep.subr.bf16.mxu0 0
    %3145 = vmatpush1.bf16.msra.mxu0 0
    %3146 = vmatprep.subr.bf16.mxu0 0
    %3147 = vmatpush1.bf16.msra.mxu0 0
    %3148 = vmatprep.subr.bf16.mxu0 0
    %3149 = vmatpush1.bf16.msra.mxu0 0
    %3150 = vmatprep.subr.bf16.mxu0 0
    %3151 = vmatpush1.bf16.msra.mxu0 0
    %3152 = vmatprep.subr.bf16.mxu0 0
    %3153 = vmatpush1.bf16.msra.mxu0 0
    %3154 = vmatprep.subr.bf16.mxu0 0
    %3155 = vmatpush1.bf16.msra.mxu0 0
    %3156 = vmatprep.subr.bf16.mxu0 0
    %3157 = vmatpush1.bf16.msra.mxu0 0
    %3158 = vmatprep.subr.bf16.mxu0 0
    %3159 = vmatpush1.bf16.msra.mxu0 0
    %3160 = vmatprep.subr.bf16.mxu0 0
    %3161 = vmatpush1.bf16.msra.mxu0 0
    %3162 = vmatprep.subr.bf16.mxu0 0
    %3163 = vmatpush1.bf16.msra.mxu0 0
    %3164 = vmatprep.subr.bf16.mxu0 0
    %3165 = vmatpush1.bf16.msra.mxu0 0
    %3166 = vmatprep.subr.bf16.mxu0 0
    %3167 = vmatpush1.bf16.msra.mxu0 0
    %3168 = vmatprep.subr.bf16.mxu0 0
    %3169 = vmatpush1.bf16.msra.mxu0 0
    %3170 = vmatprep.subr.bf16.mxu0 0
    %3171 = vmatpush1.bf16.msra.mxu0 0
    %3172 = vmatprep.subr.bf16.mxu0 0
    %3173 = vmatpush1.bf16.msra.mxu0 0
    %3174 = vmatprep.mubr.bf16.mxu0 0
    %3175 = vmatmul.mubr.bf16.gmra.mrb[0].mxu0 %v2025
    %v3176 = vpop.f32.mrb[0].mxu0
    %v3177 = vadd.f32 0.0, %v3176
    %v3178 = vpop.f32.mrb[0].mxu0
    %v3179 = vpop.f32.mrb[0].mxu0
    %v3180 = vadd.f32 0.0, %v3179
    %v3181 = vpop.f32.mrb[0].mxu0
    %3182 = vmatprep.mubr.bf16.mxu0 0
    %3183 = vmatmul.mubr.bf16.gmra.mrb[0].mxu0 %v2028
    %v3184 = vpop.f32.mrb[0].mxu0
    %v3185 = vadd.f32 0.0, %v3184
    %v3186 = vpop.f32.mrb[0].mxu0
    %v3187 = vpop.f32.mrb[0].mxu0
    %v3188 = vadd.f32 0.0, %v3187
    %v3189 = vpop.f32.mrb[0].mxu0
    %3190 = vmatprep.mubr.bf16.mxu0 0
    %3191 = vmatmul.mubr.bf16.gmra.mrb[0].mxu0 %v2031
    %v3192 = vpop.f32.mrb[0].mxu0
    %v3193 = vadd.f32 0.0, %v3192
    %v3194 = vpop.f32.mrb[0].mxu0
    %v3195 = vpop.f32.mrb[0].mxu0
    %v3196 = vadd.f32 0.0, %v3195
    %v3197 = vpop.f32.mrb[0].mxu0
    %3198 = vmatprep.mubr.bf16.mxu0 0
    %3199 = vmatmul.mubr.bf16.gmra.mrb[0].mxu0 %v2034
    %v3200 = vpop.f32.mrb[0].mxu0
    %v3201 = vadd.f32 0.0, %v3200
    %v3202 = vpop.f32.mrb[0].mxu0
    %v3203 = vpop.f32.mrb[0].mxu0
    %v3204 = vadd.f32 0.0, %v3203
    %v3205 = vpop.f32.mrb[0].mxu0
    %3206 = vmatprep.mubr.bf16.mxu0 0
    %3207 = vmatmul.mubr.bf16.gmra.mrb[0].mxu0 %v2037
    %v3208 = vpop.f32.mrb[0].mxu0
    %v3209 = vadd.f32 0.0, %v3208
    %v3210 = vpop.f32.mrb[0].mxu0
    %v3211 = vpop.f32.mrb[0].mxu0
    %v3212 = vadd.f32 0.0, %v3211
    %v3213 = vpop.f32.mrb[0].mxu0
    %3214 = vmatprep.mubr.bf16.mxu0 0
    %3215 = vmatmul.mubr.bf16.gmra.mrb[0].mxu0 %v2040
    %v3216 = vpop.f32.mrb[0].mxu0
    %v3217 = vadd.f32 0.0, %v3216
    %v3218 = vpop.f32.mrb[0].mxu0
    %v3219 = vpop.f32.mrb[0].mxu0
    %v3220 = vadd.f32 0.0, %v3219
    %v3221 = vpop.f32.mrb[0].mxu0
    %3222 = vmatprep.mubr.bf16.mxu0 0
    %3223 = vmatmul.mubr.bf16.gmra.mrb[0].mxu0 %v2043
    %v3224 = vpop.f32.mrb[0].mxu0
    %v3225 = vadd.f32 0.0, %v3224
    %v3226 = vpop.f32.mrb[0].mxu0
    %v3227 = vpop.f32.mrb[0].mxu0
    %v3228 = vadd.f32 0.0, %v3227
    %v3229 = vpop.f32.mrb[0].mxu0
    %3230 = vmatprep.mubr.bf16.mxu0 0
    %3231 = vmatmul.mubr.bf16.gmra.mrb[0].mxu0 %v2046
    %v3232 = vpop.f32.mrb[0].mxu0
    %v3233 = vadd.f32 0.0, %v3232
    %v3234 = vpop.f32.mrb[0].mxu0
    %v3235 = vpop.f32.mrb[0].mxu0
    %v3236 = vadd.f32 0.0, %v3235
    %v3237 = vpop.f32.mrb[0].mxu0
    %3238 = vdwg.mxu0
    %v3239 = vadd.f32 %v3121, %v3177
    %v3240 = vadd.f32 %v3122, %v3180
    %v3241 = vadd.f32 %v3123, %v3185
    %v3242 = vadd.f32 %v3124, %v3188
    %v3243 = vadd.f32 %v3125, %v3193
    %v3244 = vadd.f32 %v3126, %v3196
    %v3245 = vadd.f32 %v3127, %v3201
    %v3246 = vadd.f32 %v3128, %v3204
    %v3247 = vadd.f32 %v3129, %v3209
    %v3248 = vadd.f32 %v3130, %v3212
    %v3249 = vadd.f32 %v3131, %v3217
    %v3250 = vadd.f32 %v3132, %v3220
    %v3251 = vadd.f32 %v3133, %v3225
    %v3252 = vadd.f32 %v3134, %v3228
    %v3253 = vadd.f32 %v3135, %v3233
    %v3254 = vadd.f32 %v3136, %v3236
    %s3255 = scalar_lea.vmem [#allocation9], 48
    %v3256 = vld [vmem:[%s3255] sm:$0xf]
    %v3261 = vunpack.c.l.b16 %v513
    %v3262 = vunpack.c.l.b16 %v514
    %v3263 = vunpack.c.l.b16 %v515
    %v3264 = vunpack.c.l.b16 %v2164
    %v3265 = vunpack.c.l.b16 %v518
    %v3266 = vunpack.c.l.b16 %v519
    %v3267 = vunpack.c.l.b16 %v520
    %v3268 = vunpack.c.l.b16 %v2165
    %v3269 = vunpack.c.l.b16 %v523
    %v3270 = vunpack.c.l.b16 %v524
    %v3271 = vunpack.c.l.b16 %v525
    %v3272 = vunpack.c.l.b16 %v2166
    %v3273 = vunpack.c.l.b16 %v528
    %v3274 = vunpack.c.l.b16 %v529
    %v3275 = vunpack.c.l.b16 %v530
    %v3276 = vunpack.c.l.b16 %v2167
    %v3277 = vpack.c.b16 %v3262, %v3261
    %v3278 = vpack.c.b16 %v3264, %v3263
    %v3279 = vpack.c.b16 %v3266, %v3265
    %v3280 = vpack.c.b16 %v3268, %v3267
    %v3281 = vpack.c.b16 %v3270, %v3269
    %v3282 = vpack.c.b16 %v3272, %v3271
    %v3283 = vpack.c.b16 %v3274, %v3273
    %v3284 = vpack.c.b16 %v3276, %v3275
    %v3286 = vsel %vm817, %v3277, 0
    %v3289 = vsel %vm817, %v3278, 0
    %v3292 = vsel %vm817, %v3279, 0
    %v3295 = vsel %vm817, %v3280, 0
    %v3298 = vsel %vm817, %v3281, 0
    %v3301 = vsel %vm817, %v3282, 0
    %v3304 = vsel %vm817, %v3283, 0
    %v3307 = vsel %vm817, %v3284, 0
    %v3310 = vsel %vm842, %v3256, 0
    %3312 = vmatprep.subr.bf16.mxu0 0
    %3313 = vmatpush1.bf16.msra.mxu0 %v3310
    %3314 = vmatprep.subr.bf16.mxu0 0
    %3315 = vmatpush1.bf16.msra.mxu0 0
    %3316 = vmatprep.subr.bf16.mxu0 0
    %3317 = vmatpush1.bf16.msra.mxu0 0
    %3318 = vmatprep.subr.bf16.mxu0 0
    %3319 = vmatpush1.bf16.msra.mxu0 0
    %3320 = vmatprep.subr.bf16.mxu0 0
    %3321 = vmatpush1.bf16.msra.mxu0 0
    %3322 = vmatprep.subr.bf16.mxu0 0
    %3323 = vmatpush1.bf16.msra.mxu0 0
    %3324 = vmatprep.subr.bf16.mxu0 0
    %3325 = vmatpush1.bf16.msra.mxu0 0
    %3326 = vmatprep.subr.bf16.mxu0 0
    %3327 = vmatpush1.bf16.msra.mxu0 0
    %3328 = vmatprep.subr.bf16.mxu0 0
    %3329 = vmatpush1.bf16.msra.mxu0 0
    %3330 = vmatprep.subr.bf16.mxu0 0
    %3331 = vmatpush1.bf16.msra.mxu0 0
    %3332 = vmatprep.subr.bf16.mxu0 0
    %3333 = vmatpush1.bf16.msra.mxu0 0
    %3334 = vmatprep.subr.bf16.mxu0 0
    %3335 = vmatpush1.bf16.msra.mxu0 0
    %3336 = vmatprep.subr.bf16.mxu0 0
    %3337 = vmatpush1.bf16.msra.mxu0 0
    %3338 = vmatprep.subr.bf16.mxu0 0
    %3339 = vmatpush1.bf16.msra.mxu0 0
    %3340 = vmatprep.subr.bf16.mxu0 0
    %3341 = vmatpush1.bf16.msra.mxu0 0
    %3342 = vmatprep.subr.bf16.mxu0 0
    %3343 = vmatpush1.bf16.msra.mxu0 0
    %3344 = vmatprep.mubr.bf16.mxu0 0
    %3345 = vmatmul.mubr.bf16.gmra.mrb[0].mxu0 %v3286
    %v3346 = vpop.f32.mrb[0].mxu0
    %v3347 = vadd.f32 0.0, %v3346
    %v3348 = vpop.f32.mrb[0].mxu0
    %v3349 = vpop.f32.mrb[0].mxu0
    %v3350 = vadd.f32 0.0, %v3349
    %v3351 = vpop.f32.mrb[0].mxu0
    %3352 = vmatprep.mubr.bf16.mxu0 0
    %3353 = vmatmul.mubr.bf16.gmra.mrb[0].mxu0 %v3289
    %v3354 = vpop.f32.mrb[0].mxu0
    %v3355 = vadd.f32 0.0, %v3354
    %v3356 = vpop.f32.mrb[0].mxu0
    %v3357 = vpop.f32.mrb[0].mxu0
    %v3358 = vadd.f32 0.0, %v3357
    %v3359 = vpop.f32.mrb[0].mxu0
    %3360 = vmatprep.mubr.bf16.mxu0 0
    %3361 = vmatmul.mubr.bf16.gmra.mrb[0].mxu0 %v3292
    %v3362 = vpop.f32.mrb[0].mxu0
    %v3363 = vadd.f32 0.0, %v3362
    %v3364 = vpop.f32.mrb[0].mxu0
    %v3365 = vpop.f32.mrb[0].mxu0
    %v3366 = vadd.f32 0.0, %v3365
    %v3367 = vpop.f32.mrb[0].mxu0
    %3368 = vmatprep.mubr.bf16.mxu0 0
    %3369 = vmatmul.mubr.bf16.gmra.mrb[0].mxu0 %v3295
    %v3370 = vpop.f32.mrb[0].mxu0
    %v3371 = vadd.f32 0.0, %v3370
    %v3372 = vpop.f32.mrb[0].mxu0
    %v3373 = vpop.f32.mrb[0].mxu0
    %v3374 = vadd.f32 0.0, %v3373
    %v3375 = vpop.f32.mrb[0].mxu0
    %3376 = vmatprep.mubr.bf16.mxu0 0
    %3377 = vmatmul.mubr.bf16.gmra.mrb[0].mxu0 %v3298
    %v3378 = vpop.f32.mrb[0].mxu0
    %v3379 = vadd.f32 0.0, %v3378
    %v3380 = vpop.f32.mrb[0].mxu0
    %v3381 = vpop.f32.mrb[0].mxu0
    %v3382 = vadd.f32 0.0, %v3381
    %v3383 = vpop.f32.mrb[0].mxu0
    %3384 = vmatprep.mubr.bf16.mxu0 0
    %3385 = vmatmul.mubr.bf16.gmra.mrb[0].mxu0 %v3301
    %v3386 = vpop.f32.mrb[0].mxu0
    %v3387 = vadd.f32 0.0, %v3386
    %v3388 = vpop.f32.mrb[0].mxu0
    %v3389 = vpop.f32.mrb[0].mxu0
    %v3390 = vadd.f32 0.0, %v3389
    %v3391 = vpop.f32.mrb[0].mxu0
    %3392 = vmatprep.mubr.bf16.mxu0 0
    %3393 = vmatmul.mubr.bf16.gmra.mrb[0].mxu0 %v3304
    %v3394 = vpop.f32.mrb[0].mxu0
    %v3395 = vadd.f32 0.0, %v3394
    %v3396 = vpop.f32.mrb[0].mxu0
    %v3397 = vpop.f32.mrb[0].mxu0
    %v3398 = vadd.f32 0.0, %v3397
    %v3399 = vpop.f32.mrb[0].mxu0
    %3400 = vmatprep.mubr.bf16.mxu0 0
    %3401 = vmatmul.mubr.bf16.gmra.mrb[0].mxu0 %v3307
    %v3402 = vpop.f32.mrb[0].mxu0
    %v3403 = vadd.f32 0.0, %v3402
    %v3404 = vpop.f32.mrb[0].mxu0
    %v3405 = vpop.f32.mrb[0].mxu0
    %v3406 = vadd.f32 0.0, %v3405
    %v3407 = vpop.f32.mrb[0].mxu0
    %3408 = vdwg.mxu0
    %v3409 = vadd.f32 %v3239, %v3347
    %v3410 = vadd.f32 %v3240, %v3350
    %v3411 = vadd.f32 %v3241, %v3355
    %v3412 = vadd.f32 %v3242, %v3358
    %v3413 = vadd.f32 %v3243, %v3363
    %v3414 = vadd.f32 %v3244, %v3366
    %v3415 = vadd.f32 %v3245, %v3371
    %v3416 = vadd.f32 %v3246, %v3374
    %v3417 = vadd.f32 %v3247, %v3379
    %v3418 = vadd.f32 %v3248, %v3382
    %v3419 = vadd.f32 %v3249, %v3387
    %v3420 = vadd.f32 %v3250, %v3390
    %v3421 = vadd.f32 %v3251, %v3395
    %v3422 = vadd.f32 %v3252, %v3398
    %v3423 = vadd.f32 %v3253, %v3403
    %v3424 = vadd.f32 %v3254, %v3406
    %v3425 = vld [vmem:[#allocation2 + $0x8] sm:$0xe]
    %v3426 = vld [vmem:[#allocation2 + $0xc] sm:$0xf]
    %v3427 = vld [vmem:[#allocation2 + $0x10] sm:$0xf]
    %v3428 = vld [vmem:[#allocation2 + $0x14] sm:$0xf]
    %v3429 = vld [vmem:[#allocation2 + $0x18] sm:$0x1]
    %v3430 = vld [vmem:[#allocation2 + $0x24] sm:$0xe]
    %v3431 = vld [vmem:[#allocation2 + $0x28] sm:$0xf]
    %v3432 = vld [vmem:[#allocation2 + $0x2c] sm:$0xf]
    %v3433 = vld [vmem:[#allocation2 + $0x30] sm:$0xf]
    %v3434 = vld [vmem:[#allocation2 + $0x34] sm:$0x1]
    %v3435 = vld [vmem:[#allocation2 + $0x40] sm:$0xe]
    %v3436 = vld [vmem:[#allocation2 + $0x44] sm:$0xf]
    %v3437 = vld [vmem:[#allocation2 + $0x48] sm:$0xf]
    %v3438 = vld [vmem:[#allocation2 + $0x4c] sm:$0xf]
    %v3439 = vld [vmem:[#allocation2 + $0x50] sm:$0x1]
    %v3440 = vld [vmem:[#allocation2 + $0x5c] sm:$0xe]
    %v3441 = vld [vmem:[#allocation2 + $0x60] sm:$0xf]
    %v3442 = vld [vmem:[#allocation2 + $0x64] sm:$0xf]
    %v3443 = vld [vmem:[#allocation2 + $0x68] sm:$0xf]
    %v3444 = vld [vmem:[#allocation2 + $0x6c] sm:$0x1]
    %v3465 = vrot.slane %v3425, 5
    %v3466 = vrot.slane %v3465, 4
    %v3467 = vrot.slane %v3426, 5
    %v3468 = vsel %vm738, %v3466, %v3467
    %v3469 = vrot.slane %v3467, 4
    %v3470 = vrot.slane %v3427, 5
    %v3471 = vsel %vm738, %v3469, %v3470
    %v3472 = vrot.slane %v3470, 4
    %v3473 = vrot.slane %v3428, 5
    %v3474 = vsel %vm738, %v3472, %v3473
    %v3475 = vrot.slane %v3473, 4
    %v3476 = vrot.slane %v3429, 5
    %v3477 = vsel %vm738, %v3475, %v3476
    %v3478 = vrot.slane %v3430, 5
    %v3479 = vrot.slane %v3478, 4
    %v3480 = vrot.slane %v3431, 5
    %v3481 = vsel %vm738, %v3479, %v3480
    %v3482 = vrot.slane %v3480, 4
    %v3483 = vrot.slane %v3432, 5
    %v3484 = vsel %vm738, %v3482, %v3483
    %v3485 = vrot.slane %v3483, 4
    %v3486 = vrot.slane %v3433, 5
    %v3487 = vsel %vm738, %v3485, %v3486
    %v3488 = vrot.slane %v3486, 4
    %v3489 = vrot.slane %v3434, 5
    %v3490 = vsel %vm738, %v3488, %v3489
    %v3491 = vrot.slane %v3435, 5
    %v3492 = vrot.slane %v3491, 4
    %v3493 = vrot.slane %v3436, 5
    %v3494 = vsel %vm738, %v3492, %v3493
    %v3495 = vrot.slane %v3493, 4
    %v3496 = vrot.slane %v3437, 5
    %v3497 = vsel %vm738, %v3495, %v3496
    %v3498 = vrot.slane %v3496, 4
    %v3499 = vrot.slane %v3438, 5
    %v3500 = vsel %vm738, %v3498, %v3499
    %v3501 = vrot.slane %v3499, 4
    %v3502 = vrot.slane %v3439, 5
    %v3503 = vsel %vm738, %v3501, %v3502
    %v3504 = vrot.slane %v3440, 5
    %v3505 = vrot.slane %v3504, 4
    %v3506 = vrot.slane %v3441, 5
    %v3507 = vsel %vm738, %v3505, %v3506
    %v3508 = vrot.slane %v3506, 4
    %v3509 = vrot.slane %v3442, 5
    %v3510 = vsel %vm738, %v3508, %v3509
    %v3511 = vrot.slane %v3509, 4
    %v3512 = vrot.slane %v3443, 5
    %v3513 = vsel %vm738, %v3511, %v3512
    %v3514 = vrot.slane %v3512, 4
    %v3515 = vrot.slane %v3444, 5
    %v3516 = vsel %vm738, %v3514, %v3515
    %s3517 = scalar_lea.vmem [#allocation9], 52
    %v3518 = vld [vmem:[%s3517] sm:$0xf]
    %v3519 = vunpack.c.l.b16 %v3468
    %v3520 = vunpack.c.l.b16 %v3471
    %v3521 = vunpack.c.l.b16 %v3474
    %v3522 = vunpack.c.l.b16 %v3477
    %v3523 = vunpack.c.l.b16 %v3481
    %v3524 = vunpack.c.l.b16 %v3484
    %v3525 = vunpack.c.l.b16 %v3487
    %v3526 = vunpack.c.l.b16 %v3490
    %v3527 = vunpack.c.l.b16 %v3494
    %v3528 = vunpack.c.l.b16 %v3497
    %v3529 = vunpack.c.l.b16 %v3500
    %v3530 = vunpack.c.l.b16 %v3503
    %v3531 = vunpack.c.l.b16 %v3507
    %v3532 = vunpack.c.l.b16 %v3510
    %v3533 = vunpack.c.l.b16 %v3513
    %v3534 = vunpack.c.l.b16 %v3516
    %v3535 = vpack.c.b16 %v3520, %v3519
    %v3536 = vpack.c.b16 %v3522, %v3521
    %v3537 = vpack.c.b16 %v3524, %v3523
    %v3538 = vpack.c.b16 %v3526, %v3525
    %v3539 = vpack.c.b16 %v3528, %v3527
    %v3540 = vpack.c.b16 %v3530, %v3529
    %v3541 = vpack.c.b16 %v3532, %v3531
    %v3542 = vpack.c.b16 %v3534, %v3533
    %v3544 = vsel %vm817, %v3535, 0
    %v3547 = vsel %vm817, %v3536, 0
    %v3550 = vsel %vm817, %v3537, 0
    %v3553 = vsel %vm817, %v3538, 0
    %v3556 = vsel %vm817, %v3539, 0
    %v3559 = vsel %vm817, %v3540, 0
    %v3562 = vsel %vm817, %v3541, 0
    %v3565 = vsel %vm817, %v3542, 0
    %v3568 = vsel %vm842, %v3518, 0
    %3570 = vmatprep.subr.bf16.mxu0 0
    %3571 = vmatpush1.bf16.msra.mxu0 %v3568
    %3572 = vmatprep.subr.bf16.mxu0 0
    %3573 = vmatpush1.bf16.msra.mxu0 0
    %3574 = vmatprep.subr.bf16.mxu0 0
    %3575 = vmatpush1.bf16.msra.mxu0 0
    %3576 = vmatprep.subr.bf16.mxu0 0
    %3577 = vmatpush1.bf16.msra.mxu0 0
    %3578 = vmatprep.subr.bf16.mxu0 0
    %3579 = vmatpush1.bf16.msra.mxu0 0
    %3580 = vmatprep.subr.bf16.mxu0 0
    %3581 = vmatpush1.bf16.msra.mxu0 0
    %3582 = vmatprep.subr.bf16.mxu0 0
    %3583 = vmatpush1.bf16.msra.mxu0 0
    %3584 = vmatprep.subr.bf16.mxu0 0
    %3585 = vmatpush1.bf16.msra.mxu0 0
    %3586 = vmatprep.subr.bf16.mxu0 0
    %3587 = vmatpush1.bf16.msra.mxu0 0
    %3588 = vmatprep.subr.bf16.mxu0 0
    %3589 = vmatpush1.bf16.msra.mxu0 0
    %3590 = vmatprep.subr.bf16.mxu0 0
    %3591 = vmatpush1.bf16.msra.mxu0 0
    %3592 = vmatprep.subr.bf16.mxu0 0
    %3593 = vmatpush1.bf16.msra.mxu0 0
    %3594 = vmatprep.subr.bf16.mxu0 0
    %3595 = vmatpush1.bf16.msra.mxu0 0
    %3596 = vmatprep.subr.bf16.mxu0 0
    %3597 = vmatpush1.bf16.msra.mxu0 0
    %3598 = vmatprep.subr.bf16.mxu0 0
    %3599 = vmatpush1.bf16.msra.mxu0 0
    %3600 = vmatprep.subr.bf16.mxu0 0
    %3601 = vmatpush1.bf16.msra.mxu0 0
    %3602 = vmatprep.mubr.bf16.mxu0 0
    %3603 = vmatmul.mubr.bf16.gmra.mrb[0].mxu0 %v3544
    %v3604 = vpop.f32.mrb[0].mxu0
    %v3605 = vadd.f32 0.0, %v3604
    %v3606 = vpop.f32.mrb[0].mxu0
    %v3607 = vpop.f32.mrb[0].mxu0
    %v3608 = vadd.f32 0.0, %v3607
    %v3609 = vpop.f32.mrb[0].mxu0
    %3610 = vmatprep.mubr.bf16.mxu0 0
    %3611 = vmatmul.mubr.bf16.gmra.mrb[0].mxu0 %v3547
    %v3612 = vpop.f32.mrb[0].mxu0
    %v3613 = vadd.f32 0.0, %v3612
    %v3614 = vpop.f32.mrb[0].mxu0
    %v3615 = vpop.f32.mrb[0].mxu0
    %v3616 = vadd.f32 0.0, %v3615
    %v3617 = vpop.f32.mrb[0].mxu0
    %3618 = vmatprep.mubr.bf16.mxu0 0
    %3619 = vmatmul.mubr.bf16.gmra.mrb[0].mxu0 %v3550
    %v3620 = vpop.f32.mrb[0].mxu0
    %v3621 = vadd.f32 0.0, %v3620
    %v3622 = vpop.f32.mrb[0].mxu0
    %v3623 = vpop.f32.mrb[0].mxu0
    %v3624 = vadd.f32 0.0, %v3623
    %v3625 = vpop.f32.mrb[0].mxu0
    %3626 = vmatprep.mubr.bf16.mxu0 0
    %3627 = vmatmul.mubr.bf16.gmra.mrb[0].mxu0 %v3553
    %v3628 = vpop.f32.mrb[0].mxu0
    %v3629 = vadd.f32 0.0, %v3628
    %v3630 = vpop.f32.mrb[0].mxu0
    %v3631 = vpop.f32.mrb[0].mxu0
    %v3632 = vadd.f32 0.0, %v3631
    %v3633 = vpop.f32.mrb[0].mxu0
    %3634 = vmatprep.mubr.bf16.mxu0 0
    %3635 = vmatmul.mubr.bf16.gmra.mrb[0].mxu0 %v3556
    %v3636 = vpop.f32.mrb[0].mxu0
    %v3637 = vadd.f32 0.0, %v3636
    %v3638 = vpop.f32.mrb[0].mxu0
    %v3639 = vpop.f32.mrb[0].mxu0
    %v3640 = vadd.f32 0.0, %v3639
    %v3641 = vpop.f32.mrb[0].mxu0
    %3642 = vmatprep.mubr.bf16.mxu0 0
    %3643 = vmatmul.mubr.bf16.gmra.mrb[0].mxu0 %v3559
    %v3644 = vpop.f32.mrb[0].mxu0
    %v3645 = vadd.f32 0.0, %v3644
    %v3646 = vpop.f32.mrb[0].mxu0
    %v3647 = vpop.f32.mrb[0].mxu0
    %v3648 = vadd.f32 0.0, %v3647
    %v3649 = vpop.f32.mrb[0].mxu0
    %3650 = vmatprep.mubr.bf16.mxu0 0
    %3651 = vmatmul.mubr.bf16.gmra.mrb[0].mxu0 %v3562
    %v3652 = vpop.f32.mrb[0].mxu0
    %v3653 = vadd.f32 0.0, %v3652
    %v3654 = vpop.f32.mrb[0].mxu0
    %v3655 = vpop.f32.mrb[0].mxu0
    %v3656 = vadd.f32 0.0, %v3655
    %v3657 = vpop.f32.mrb[0].mxu0
    %3658 = vmatprep.mubr.bf16.mxu0 0
    %3659 = vmatmul.mubr.bf16.gmra.mrb[0].mxu0 %v3565
    %v3660 = vpop.f32.mrb[0].mxu0
    %v3661 = vadd.f32 0.0, %v3660
    %v3662 = vpop.f32.mrb[0].mxu0
    %v3663 = vpop.f32.mrb[0].mxu0
    %v3664 = vadd.f32 0.0, %v3663
    %v3665 = vpop.f32.mrb[0].mxu0
    %3666 = vdwg.mxu0
    %v3667 = vadd.f32 %v3409, %v3605
    %v3668 = vadd.f32 %v3410, %v3608
    %v3669 = vadd.f32 %v3411, %v3613
    %v3670 = vadd.f32 %v3412, %v3616
    %v3671 = vadd.f32 %v3413, %v3621
    %v3672 = vadd.f32 %v3414, %v3624
    %v3673 = vadd.f32 %v3415, %v3629
    %v3674 = vadd.f32 %v3416, %v3632
    %v3675 = vadd.f32 %v3417, %v3637
    %v3676 = vadd.f32 %v3418, %v3640
    %v3677 = vadd.f32 %v3419, %v3645
    %v3678 = vadd.f32 %v3420, %v3648
    %v3679 = vadd.f32 %v3421, %v3653
    %v3680 = vadd.f32 %v3422, %v3656
    %v3681 = vadd.f32 %v3423, %v3661
    %v3682 = vadd.f32 %v3424, %v3664
    %s3683 = scalar_lea.vmem [#allocation11], 1
    %v3684 = vld [vmem:[%s3683] sm:$0x1]
    %v3686 = vlaneseq
    %v3687 = vshrl.u32 %v3686, 7
    %v3688 = vsub.s32 0, %v3687
    %v3689 = vrot.slane %v3684, %v3688
    %v3691 = vadd.f32 %v3667, %v3689
    %v3692 = vadd.f32 %v3668, %v3689
    %v3693 = vadd.f32 %v3669, %v3689
    %v3694 = vadd.f32 %v3670, %v3689
    %v3695 = vadd.f32 %v3671, %v3689
    %v3696 = vadd.f32 %v3672, %v3689
    %v3697 = vadd.f32 %v3673, %v3689
    %v3698 = vadd.f32 %v3674, %v3689
    %v3699 = vadd.f32 %v3675, %v3689
    %v3700 = vadd.f32 %v3676, %v3689
    %v3701 = vadd.f32 %v3677, %v3689
    %v3702 = vadd.f32 %v3678, %v3689
    %v3703 = vadd.f32 %v3679, %v3689
    %v3704 = vadd.f32 %v3680, %v3689
    %v3705 = vadd.f32 %v3681, %v3689
    %v3706 = vadd.f32 %v3682, %v3689
    %v3707 = vmax.f32 %v3691, 0.0
    %v3708 = vmax.f32 %v3692, 0.0
    %v3709 = vmax.f32 %v3693, 0.0
    %v3710 = vmax.f32 %v3694, 0.0
    %v3711 = vmax.f32 %v3695, 0.0
    %v3712 = vmax.f32 %v3696, 0.0
    %v3713 = vmax.f32 %v3697, 0.0
    %v3714 = vmax.f32 %v3698, 0.0
    %v3715 = vmax.f32 %v3699, 0.0
    %v3716 = vmax.f32 %v3700, 0.0
    %v3717 = vmax.f32 %v3701, 0.0
    %v3718 = vmax.f32 %v3702, 0.0
    %v3719 = vmax.f32 %v3703, 0.0
    %v3720 = vmax.f32 %v3704, 0.0
    %v3721 = vmax.f32 %v3705, 0.0
    %v3722 = vmax.f32 %v3706, 0.0
    %v3723 = vadd.f32 %v3707, %v296
    %v3724 = vadd.f32 %v3708, %v299
    %v3725 = vadd.f32 %v3709, %v304
    %v3726 = vadd.f32 %v3710, %v307
    %v3727 = vadd.f32 %v3711, %v312
    %v3728 = vadd.f32 %v3712, %v315
    %v3729 = vadd.f32 %v3713, %v320
    %v3730 = vadd.f32 %v3714, %v323
    %v3731 = vadd.f32 %v3715, %v328
    %v3732 = vadd.f32 %v3716, %v331
    %v3733 = vadd.f32 %v3717, %v336
    %v3734 = vadd.f32 %v3718, %v339
    %v3735 = vadd.f32 %v3719, %v344
    %v3736 = vadd.f32 %v3720, %v347
    %v3737 = vadd.f32 %v3721, %v352
    %v3738 = vadd.f32 %v3722, %v355
    %v3739 = vpack.c.bf16 %v3724, %v3723
    %v3740 = vpack.c.bf16 %v3726, %v3725
    %v3741 = vpack.c.bf16 %v3728, %v3727
    %v3742 = vpack.c.bf16 %v3730, %v3729
    %v3743 = vpack.c.bf16 %v3732, %v3731
    %v3744 = vpack.c.bf16 %v3734, %v3733
    %v3745 = vpack.c.bf16 %v3736, %v3735
    %v3746 = vpack.c.bf16 %v3738, %v3737
    %s3747 = scalar_lea.vmem [#allocation12], 4
    %v3748 = vld [vmem:[%s3747] sm:$0xf]
    %v3750 = vsel %vm817, %v3739, 0
    %v3753 = vsel %vm817, %v3740, 0
    %v3756 = vsel %vm817, %v3741, 0
    %v3759 = vsel %vm817, %v3742, 0
    %v3762 = vsel %vm817, %v3743, 0
    %v3765 = vsel %vm817, %v3744, 0
    %v3768 = vsel %vm817, %v3745, 0
    %v3771 = vsel %vm817, %v3746, 0
    %v3774 = vsel %vm842, %v3748, 0
    %3776 = vmatprep.subr.bf16.mxu0 0
    %3777 = vmatpush1.bf16.msra.mxu0 %v3774
    %3778 = vmatprep.subr.bf16.mxu0 0
    %3779 = vmatpush1.bf16.msra.mxu0 0
    %3780 = vmatprep.subr.bf16.mxu0 0
    %3781 = vmatpush1.bf16.msra.mxu0 0
    %3782 = vmatprep.subr.bf16.mxu0 0
    %3783 = vmatpush1.bf16.msra.mxu0 0
    %3784 = vmatprep.subr.bf16.mxu0 0
    %3785 = vmatpush1.bf16.msra.mxu0 0
    %3786 = vmatprep.subr.bf16.mxu0 0
    %3787 = vmatpush1.bf16.msra.mxu0 0
    %3788 = vmatprep.subr.bf16.mxu0 0
    %3789 = vmatpush1.bf16.msra.mxu0 0
    %3790 = vmatprep.subr.bf16.mxu0 0
    %3791 = vmatpush1.bf16.msra.mxu0 0
    %3792 = vmatprep.subr.bf16.mxu0 0
    %3793 = vmatpush1.bf16.msra.mxu0 0
    %3794 = vmatprep.subr.bf16.mxu0 0
    %3795 = vmatpush1.bf16.msra.mxu0 0
    %3796 = vmatprep.subr.bf16.mxu0 0
    %3797 = vmatpush1.bf16.msra.mxu0 0
    %3798 = vmatprep.subr.bf16.mxu0 0
    %3799 = vmatpush1.bf16.msra.mxu0 0
    %3800 = vmatprep.subr.bf16.mxu0 0
    %3801 = vmatpush1.bf16.msra.mxu0 0
    %3802 = vmatprep.subr.bf16.mxu0 0
    %3803 = vmatpush1.bf16.msra.mxu0 0
    %3804 = vmatprep.subr.bf16.mxu0 0
    %3805 = vmatpush1.bf16.msra.mxu0 0
    %3806 = vmatprep.subr.bf16.mxu0 0
    %3807 = vmatpush1.bf16.msra.mxu0 0
    %3808 = vmatprep.mubr.bf16.mxu0 0
    %3809 = vmatmul.mubr.bf16.gmra.mrb[0].mxu0 %v3750
    %v3810 = vpop.f32.mrb[0].mxu0
    %v3811 = vadd.f32 0.0, %v3810
    %v3812 = vpop.f32.mrb[0].mxu0
    %v3813 = vpop.f32.mrb[0].mxu0
    %v3814 = vadd.f32 0.0, %v3813
    %v3815 = vpop.f32.mrb[0].mxu0
    %3816 = vmatprep.mubr.bf16.mxu0 0
    %3817 = vmatmul.mubr.bf16.gmra.mrb[0].mxu0 %v3753
    %v3818 = vpop.f32.mrb[0].mxu0
    %v3819 = vadd.f32 0.0, %v3818
    %v3820 = vpop.f32.mrb[0].mxu0
    %v3821 = vpop.f32.mrb[0].mxu0
    %v3822 = vadd.f32 0.0, %v3821
    %v3823 = vpop.f32.mrb[0].mxu0
    %3824 = vmatprep.mubr.bf16.mxu0 0
    %3825 = vmatmul.mubr.bf16.gmra.mrb[0].mxu0 %v3756
    %v3826 = vpop.f32.mrb[0].mxu0
    %v3827 = vadd.f32 0.0, %v3826
    %v3828 = vpop.f32.mrb[0].mxu0
    %v3829 = vpop.f32.mrb[0].mxu0
    %v3830 = vadd.f32 0.0, %v3829
    %v3831 = vpop.f32.mrb[0].mxu0
    %3832 = vmatprep.mubr.bf16.mxu0 0
    %3833 = vmatmul.mubr.bf16.gmra.mrb[0].mxu0 %v3759
    %v3834 = vpop.f32.mrb[0].mxu0
    %v3835 = vadd.f32 0.0, %v3834
    %v3836 = vpop.f32.mrb[0].mxu0
    %v3837 = vpop.f32.mrb[0].mxu0
    %v3838 = vadd.f32 0.0, %v3837
    %v3839 = vpop.f32.mrb[0].mxu0
    %3840 = vmatprep.mubr.bf16.mxu0 0
    %3841 = vmatmul.mubr.bf16.gmra.mrb[0].mxu0 %v3762
    %v3842 = vpop.f32.mrb[0].mxu0
    %v3843 = vadd.f32 0.0, %v3842
    %v3844 = vpop.f32.mrb[0].mxu0
    %v3845 = vpop.f32.mrb[0].mxu0
    %v3846 = vadd.f32 0.0, %v3845
    %v3847 = vpop.f32.mrb[0].mxu0
    %3848 = vmatprep.mubr.bf16.mxu0 0
    %3849 = vmatmul.mubr.bf16.gmra.mrb[0].mxu0 %v3765
    %v3850 = vpop.f32.mrb[0].mxu0
    %v3851 = vadd.f32 0.0, %v3850
    %v3852 = vpop.f32.mrb[0].mxu0
    %v3853 = vpop.f32.mrb[0].mxu0
    %v3854 = vadd.f32 0.0, %v3853
    %v3855 = vpop.f32.mrb[0].mxu0
    %3856 = vmatprep.mubr.bf16.mxu0 0
    %3857 = vmatmul.mubr.bf16.gmra.mrb[0].mxu0 %v3768
    %v3858 = vpop.f32.mrb[0].mxu0
    %v3859 = vadd.f32 0.0, %v3858
    %v3860 = vpop.f32.mrb[0].mxu0
    %v3861 = vpop.f32.mrb[0].mxu0
    %v3862 = vadd.f32 0.0, %v3861
    %v3863 = vpop.f32.mrb[0].mxu0
    %3864 = vmatprep.mubr.bf16.mxu0 0
    %3865 = vmatmul.mubr.bf16.gmra.mrb[0].mxu0 %v3771
    %v3866 = vpop.f32.mrb[0].mxu0
    %v3867 = vadd.f32 0.0, %v3866
    %v3868 = vpop.f32.mrb[0].mxu0
    %v3869 = vpop.f32.mrb[0].mxu0
    %v3870 = vadd.f32 0.0, %v3869
    %v3871 = vpop.f32.mrb[0].mxu0
    %3872 = vdwg.mxu0
    %v3874 = vsel %vm817, %v2492, 0
    %v3877 = vsel %vm817, %v2493, 0
    %v3880 = vsel %vm817, %v2494, 0
    %v3883 = vsel %vm817, %v2495, 0
    %v3886 = vsel %vm817, %v2496, 0
    %v3889 = vsel %vm817, %v2497, 0
    %v3892 = vsel %vm817, %v2498, 0
    %v3895 = vsel %vm817, %v2499, 0
    %v3898 = vsel %vm842, %v2500, 0
    %3900 = vmatprep.subr.bf16.mxu0 0
    %3901 = vmatpush1.bf16.msra.mxu0 %v3898
    %3902 = vmatprep.subr.bf16.mxu0 0
    %3903 = vmatpush1.bf16.msra.mxu0 0
    %3904 = vmatprep.subr.bf16.mxu0 0
    %3905 = vmatpush1.bf16.msra.mxu0 0
    %3906 = vmatprep.subr.bf16.mxu0 0
    %3907 = vmatpush1.bf16.msra.mxu0 0
    %3908 = vmatprep.subr.bf16.mxu0 0
    %3909 = vmatpush1.bf16.msra.mxu0 0
    %3910 = vmatprep.subr.bf16.mxu0 0
    %3911 = vmatpush1.bf16.msra.mxu0 0
    %3912 = vmatprep.subr.bf16.mxu0 0
    %3913 = vmatpush1.bf16.msra.mxu0 0
    %3914 = vmatprep.subr.bf16.mxu0 0
    %3915 = vmatpush1.bf16.msra.mxu0 0
    %3916 = vmatprep.subr.bf16.mxu0 0
    %3917 = vmatpush1.bf16.msra.mxu0 0
    %3918 = vmatprep.subr.bf16.mxu0 0
    %3919 = vmatpush1.bf16.msra.mxu0 0
    %3920 = vmatprep.subr.bf16.mxu0 0
    %3921 = vmatpush1.bf16.msra.mxu0 0
    %3922 = vmatprep.subr.bf16.mxu0 0
    %3923 = vmatpush1.bf16.msra.mxu0 0
    %3924 = vmatprep.subr.bf16.mxu0 0
    %3925 = vmatpush1.bf16.msra.mxu0 0
    %3926 = vmatprep.subr.bf16.mxu0 0
    %3927 = vmatpush1.bf16.msra.mxu0 0
    %3928 = vmatprep.subr.bf16.mxu0 0
    %3929 = vmatpush1.bf16.msra.mxu0 0
    %3930 = vmatprep.subr.bf16.mxu0 0
    %3931 = vmatpush1.bf16.msra.mxu0 0
    %3932 = vmatprep.mubr.bf16.mxu0 0
    %3933 = vmatmul.mubr.bf16.gmra.mrb[0].mxu0 %v3874
    %v3934 = vpop.f32.mrb[0].mxu0
    %v3935 = vadd.f32 %v3811, %v3934
    %v3936 = vpop.f32.mrb[0].mxu0
    %v3937 = vpop.f32.mrb[0].mxu0
    %v3938 = vadd.f32 %v3814, %v3937
    %v3939 = vpop.f32.mrb[0].mxu0
    %3940 = vmatprep.mubr.bf16.mxu0 0
    %3941 = vmatmul.mubr.bf16.gmra.mrb[0].mxu0 %v3877
    %v3942 = vpop.f32.mrb[0].mxu0
    %v3943 = vadd.f32 %v3819, %v3942
    %v3944 = vpop.f32.mrb[0].mxu0
    %v3945 = vpop.f32.mrb[0].mxu0
    %v3946 = vadd.f32 %v3822, %v3945
    %v3947 = vpop.f32.mrb[0].mxu0
    %3948 = vmatprep.mubr.bf16.mxu0 0
    %3949 = vmatmul.mubr.bf16.gmra.mrb[0].mxu0 %v3880
    %v3950 = vpop.f32.mrb[0].mxu0
    %v3951 = vadd.f32 %v3827, %v3950
    %v3952 = vpop.f32.mrb[0].mxu0
    %v3953 = vpop.f32.mrb[0].mxu0
    %v3954 = vadd.f32 %v3830, %v3953
    %v3955 = vpop.f32.mrb[0].mxu0
    %3956 = vmatprep.mubr.bf16.mxu0 0
    %3957 = vmatmul.mubr.bf16.gmra.mrb[0].mxu0 %v3883
    %v3958 = vpop.f32.mrb[0].mxu0
    %v3959 = vadd.f32 %v3835, %v3958
    %v3960 = vpop.f32.mrb[0].mxu0
    %v3961 = vpop.f32.mrb[0].mxu0
    %v3962 = vadd.f32 %v3838, %v3961
    %v3963 = vpop.f32.mrb[0].mxu0
    %3964 = vmatprep.mubr.bf16.mxu0 0
    %3965 = vmatmul.mubr.bf16.gmra.mrb[0].mxu0 %v3886
    %v3966 = vpop.f32.mrb[0].mxu0
    %v3967 = vadd.f32 %v3843, %v3966
    %v3968 = vpop.f32.mrb[0].mxu0
    %v3969 = vpop.f32.mrb[0].mxu0
    %v3970 = vadd.f32 %v3846, %v3969
    %v3971 = vpop.f32.mrb[0].mxu0
    %3972 = vmatprep.mubr.bf16.mxu0 0
    %3973 = vmatmul.mubr.bf16.gmra.mrb[0].mxu0 %v3889
    %v3974 = vpop.f32.mrb[0].mxu0
    %v3975 = vadd.f32 %v3851, %v3974
    %v3976 = vpop.f32.mrb[0].mxu0
    %v3977 = vpop.f32.mrb[0].mxu0
    %v3978 = vadd.f32 %v3854, %v3977
    %v3979 = vpop.f32.mrb[0].mxu0
    %3980 = vmatprep.mubr.bf16.mxu0 0
    %3981 = vmatmul.mubr.bf16.gmra.mrb[0].mxu0 %v3892
    %v3982 = vpop.f32.mrb[0].mxu0
    %v3983 = vadd.f32 %v3859, %v3982
    %v3984 = vpop.f32.mrb[0].mxu0
    %v3985 = vpop.f32.mrb[0].mxu0
    %v3986 = vadd.f32 %v3862, %v3985
    %v3987 = vpop.f32.mrb[0].mxu0
    %3988 = vmatprep.mubr.bf16.mxu0 0
    %3989 = vmatmul.mubr.bf16.gmra.mrb[0].mxu0 %v3895
    %v3990 = vpop.f32.mrb[0].mxu0
    %v3991 = vadd.f32 %v3867, %v3990
    %v3992 = vpop.f32.mrb[0].mxu0
    %v3993 = vpop.f32.mrb[0].mxu0
    %v3994 = vadd.f32 %v3870, %v3993
    %v3995 = vpop.f32.mrb[0].mxu0
    %3996 = vdwg.mxu0
    %v3997 = vld [vmem:[#allocation2] sm:$0xf]
    %v3998 = vld [vmem:[#allocation2 + $0x4] sm:$0xf]
    %v3999 = vld [vmem:[#allocation2 + $0x8] sm:$0xf]
    %v4000 = vld [vmem:[#allocation2 + $0xc] sm:$0xf]
    %v4001 = vld [vmem:[#allocation2 + $0x1c] sm:$0xf]
    %v4002 = vld [vmem:[#allocation2 + $0x20] sm:$0xf]
    %v4003 = vld [vmem:[#allocation2 + $0x24] sm:$0xf]
    %v4004 = vld [vmem:[#allocation2 + $0x28] sm:$0xf]
    %v4005 = vld [vmem:[#allocation2 + $0x38] sm:$0xf]
    %v4006 = vld [vmem:[#allocation2 + $0x3c] sm:$0xf]
    %v4007 = vld [vmem:[#allocation2 + $0x40] sm:$0xf]
    %v4008 = vld [vmem:[#allocation2 + $0x44] sm:$0xf]
    %v4009 = vld [vmem:[#allocation2 + $0x54] sm:$0xf]
    %v4010 = vld [vmem:[#allocation2 + $0x58] sm:$0xf]
    %v4011 = vld [vmem:[#allocation2 + $0x5c] sm:$0xf]
    %v4012 = vld [vmem:[#allocation2 + $0x60] sm:$0xf]
    %s4013 = scalar_lea.vmem [#allocation9], 56
    %v4014 = vld [vmem:[%s4013] sm:$0xf]
    %v4015 = vld [vmem:[#allocation2] sm:$0xc]
    %v4016 = vld [vmem:[#allocation2 + $0x10] sm:$0x3]
    %v4017 = vld [vmem:[#allocation2 + $0x1c] sm:$0xc]
    %v4018 = vld [vmem:[#allocation2 + $0x2c] sm:$0x3]
    %v4019 = vld [vmem:[#allocation2 + $0x38] sm:$0xc]
    %v4020 = vld [vmem:[#allocation2 + $0x48] sm:$0x3]
    %v4021 = vld [vmem:[#allocation2 + $0x54] sm:$0xc]
    %v4022 = vld [vmem:[#allocation2 + $0x64] sm:$0x3]
    %v4031 = vrot.slane %v4015, 6
    %v4032 = vrot.slane %v4031, 4
    %v4033 = vrot.slane %v2502, 6
    %v4034 = vsel %vm427, %v4032, %v4033
    %v4035 = vrot.slane %v4033, 4
    %v4036 = vrot.slane %v2503, 6
    %v4037 = vsel %vm427, %v4035, %v4036
    %v4038 = vrot.slane %v4036, 4
    %v4039 = vrot.slane %v2504, 6
    %v4040 = vsel %vm427, %v4038, %v4039
    %v4041 = vrot.slane %v4039, 4
    %v4042 = vrot.slane %v4016, 6
    %v4043 = vsel %vm427, %v4041, %v4042
    %v4044 = vrot.slane %v4017, 6
    %v4045 = vrot.slane %v4044, 4
    %v4046 = vrot.slane %v2507, 6
    %v4047 = vsel %vm427, %v4045, %v4046
    %v4048 = vrot.slane %v4046, 4
    %v4049 = vrot.slane %v2508, 6
    %v4050 = vsel %vm427, %v4048, %v4049
    %v4051 = vrot.slane %v4049, 4
    %v4052 = vrot.slane %v2509, 6
    %v4053 = vsel %vm427, %v4051, %v4052
    %v4054 = vrot.slane %v4052, 4
    %v4055 = vrot.slane %v4018, 6
    %v4056 = vsel %vm427, %v4054, %v4055
    %v4057 = vrot.slane %v4019, 6
    %v4058 = vrot.slane %v4057, 4
    %v4059 = vrot.slane %v2512, 6
    %v4060 = vsel %vm427, %v4058, %v4059
    %v4061 = vrot.slane %v4059, 4
    %v4062 = vrot.slane %v2513, 6
    %v4063 = vsel %vm427, %v4061, %v4062
    %v4064 = vrot.slane %v4062, 4
    %v4065 = vrot.slane %v2514, 6
    %v4066 = vsel %vm427, %v4064, %v4065
    %v4067 = vrot.slane %v4065, 4
    %v4068 = vrot.slane %v4020, 6
    %v4069 = vsel %vm427, %v4067, %v4068
    %v4070 = vrot.slane %v4021, 6
    %v4071 = vrot.slane %v4070, 4
    %v4072 = vrot.slane %v2517, 6
    %v4073 = vsel %vm427, %v4071, %v4072
    %v4074 = vrot.slane %v4072, 4
    %v4075 = vrot.slane %v2518, 6
    %v4076 = vsel %vm427, %v4074, %v4075
    %v4077 = vrot.slane %v4075, 4
    %v4078 = vrot.slane %v2519, 6
    %v4079 = vsel %vm427, %v4077, %v4078
    %v4080 = vrot.slane %v4078, 4
    %v4081 = vrot.slane %v4022, 6
    %v4082 = vsel %vm427, %v4080, %v4081
    %s4083 = scalar_lea.vmem [#allocation9], 60
    %v4084 = vld [vmem:[%s4083] sm:$0xf]
    %v4085 = vunpack.c.l.b16 %v4034
    %v4086 = vunpack.c.l.b16 %v4037
    %v4087 = vunpack.c.l.b16 %v4040
    %v4088 = vunpack.c.l.b16 %v4043
    %v4089 = vunpack.c.l.b16 %v4047
    %v4090 = vunpack.c.l.b16 %v4050
    %v4091 = vunpack.c.l.b16 %v4053
    %v4092 = vunpack.c.l.b16 %v4056
    %v4093 = vunpack.c.l.b16 %v4060
    %v4094 = vunpack.c.l.b16 %v4063
    %v4095 = vunpack.c.l.b16 %v4066
    %v4096 = vunpack.c.l.b16 %v4069
    %v4097 = vunpack.c.l.b16 %v4073
    %v4098 = vunpack.c.l.b16 %v4076
    %v4099 = vunpack.c.l.b16 %v4079
    %v4100 = vunpack.c.l.b16 %v4082
    %v4101 = vpack.c.b16 %v4086, %v4085
    %v4102 = vpack.c.b16 %v4088, %v4087
    %v4103 = vpack.c.b16 %v4090, %v4089
    %v4104 = vpack.c.b16 %v4092, %v4091
    %v4105 = vpack.c.b16 %v4094, %v4093
    %v4106 = vpack.c.b16 %v4096, %v4095
    %v4107 = vpack.c.b16 %v4098, %v4097
    %v4108 = vpack.c.b16 %v4100, %v4099
    %v4110 = vsel %vm817, %v4101, 0
    %v4113 = vsel %vm817, %v4102, 0
    %v4116 = vsel %vm817, %v4103, 0
    %v4119 = vsel %vm817, %v4104, 0
    %v4122 = vsel %vm817, %v4105, 0
    %v4125 = vsel %vm817, %v4106, 0
    %v4128 = vsel %vm817, %v4107, 0
    %v4131 = vsel %vm817, %v4108, 0
    %v4134 = vsel %vm842, %v4084, 0
    %4136 = vmatprep.subr.bf16.mxu0 0
    %4137 = vmatpush1.bf16.msra.mxu0 %v4134
    %4138 = vmatprep.subr.bf16.mxu0 0
    %4139 = vmatpush1.bf16.msra.mxu0 0
    %4140 = vmatprep.subr.bf16.mxu0 0
    %4141 = vmatpush1.bf16.msra.mxu0 0
    %4142 = vmatprep.subr.bf16.mxu0 0
    %4143 = vmatpush1.bf16.msra.mxu0 0
    %4144 = vmatprep.subr.bf16.mxu0 0
    %4145 = vmatpush1.bf16.msra.mxu0 0
    %4146 = vmatprep.subr.bf16.mxu0 0
    %4147 = vmatpush1.bf16.msra.mxu0 0
    %4148 = vmatprep.subr.bf16.mxu0 0
    %4149 = vmatpush1.bf16.msra.mxu0 0
    %4150 = vmatprep.subr.bf16.mxu0 0
    %4151 = vmatpush1.bf16.msra.mxu0 0
    %4152 = vmatprep.subr.bf16.mxu0 0
    %4153 = vmatpush1.bf16.msra.mxu0 0
    %4154 = vmatprep.subr.bf16.mxu0 0
    %4155 = vmatpush1.bf16.msra.mxu0 0
    %4156 = vmatprep.subr.bf16.mxu0 0
    %4157 = vmatpush1.bf16.msra.mxu0 0
    %4158 = vmatprep.subr.bf16.mxu0 0
    %4159 = vmatpush1.bf16.msra.mxu0 0
    %4160 = vmatprep.subr.bf16.mxu0 0
    %4161 = vmatpush1.bf16.msra.mxu0 0
    %4162 = vmatprep.subr.bf16.mxu0 0
    %4163 = vmatpush1.bf16.msra.mxu0 0
    %4164 = vmatprep.subr.bf16.mxu0 0
    %4165 = vmatpush1.bf16.msra.mxu0 0
    %4166 = vmatprep.subr.bf16.mxu0 0
    %4167 = vmatpush1.bf16.msra.mxu0 0
    %4168 = vmatprep.mubr.bf16.mxu0 0
    %4169 = vmatmul.mubr.bf16.gmra.mrb[0].mxu0 %v4110
    %v4170 = vpop.f32.mrb[0].mxu0
    %v4171 = vadd.f32 0.0, %v4170
    %v4172 = vpop.f32.mrb[0].mxu0
    %v4173 = vpop.f32.mrb[0].mxu0
    %v4174 = vadd.f32 0.0, %v4173
    %v4175 = vpop.f32.mrb[0].mxu0
    %4176 = vmatprep.mubr.bf16.mxu0 0
    %4177 = vmatmul.mubr.bf16.gmra.mrb[0].mxu0 %v4113
    %v4178 = vpop.f32.mrb[0].mxu0
    %v4179 = vadd.f32 0.0, %v4178
    %v4180 = vpop.f32.mrb[0].mxu0
    %v4181 = vpop.f32.mrb[0].mxu0
    %v4182 = vadd.f32 0.0, %v4181
    %v4183 = vpop.f32.mrb[0].mxu0
    %4184 = vmatprep.mubr.bf16.mxu0 0
    %4185 = vmatmul.mubr.bf16.gmra.mrb[0].mxu0 %v4116
    %v4186 = vpop.f32.mrb[0].mxu0
    %v4187 = vadd.f32 0.0, %v4186
    %v4188 = vpop.f32.mrb[0].mxu0
    %v4189 = vpop.f32.mrb[0].mxu0
    %v4190 = vadd.f32 0.0, %v4189
    %v4191 = vpop.f32.mrb[0].mxu0
    %4192 = vmatprep.mubr.bf16.mxu0 0
    %4193 = vmatmul.mubr.bf16.gmra.mrb[0].mxu0 %v4119
    %v4194 = vpop.f32.mrb[0].mxu0
    %v4195 = vadd.f32 0.0, %v4194
    %v4196 = vpop.f32.mrb[0].mxu0
    %v4197 = vpop.f32.mrb[0].mxu0
    %v4198 = vadd.f32 0.0, %v4197
    %v4199 = vpop.f32.mrb[0].mxu0
    %4200 = vmatprep.mubr.bf16.mxu0 0
    %4201 = vmatmul.mubr.bf16.gmra.mrb[0].mxu0 %v4122
    %v4202 = vpop.f32.mrb[0].mxu0
    %v4203 = vadd.f32 0.0, %v4202
    %v4204 = vpop.f32.mrb[0].mxu0
    %v4205 = vpop.f32.mrb[0].mxu0
    %v4206 = vadd.f32 0.0, %v4205
    %v4207 = vpop.f32.mrb[0].mxu0
    %4208 = vmatprep.mubr.bf16.mxu0 0
    %4209 = vmatmul.mubr.bf16.gmra.mrb[0].mxu0 %v4125
    %v4210 = vpop.f32.mrb[0].mxu0
    %v4211 = vadd.f32 0.0, %v4210
    %v4212 = vpop.f32.mrb[0].mxu0
    %v4213 = vpop.f32.mrb[0].mxu0
    %v4214 = vadd.f32 0.0, %v4213
    %v4215 = vpop.f32.mrb[0].mxu0
    %4216 = vmatprep.mubr.bf16.mxu0 0
    %4217 = vmatmul.mubr.bf16.gmra.mrb[0].mxu0 %v4128
    %v4218 = vpop.f32.mrb[0].mxu0
    %v4219 = vadd.f32 0.0, %v4218
    %v4220 = vpop.f32.mrb[0].mxu0
    %v4221 = vpop.f32.mrb[0].mxu0
    %v4222 = vadd.f32 0.0, %v4221
    %v4223 = vpop.f32.mrb[0].mxu0
    %4224 = vmatprep.mubr.bf16.mxu0 0
    %4225 = vmatmul.mubr.bf16.gmra.mrb[0].mxu0 %v4131
    %v4226 = vpop.f32.mrb[0].mxu0
    %v4227 = vadd.f32 0.0, %v4226
    %v4228 = vpop.f32.mrb[0].mxu0
    %v4229 = vpop.f32.mrb[0].mxu0
    %v4230 = vadd.f32 0.0, %v4229
    %v4231 = vpop.f32.mrb[0].mxu0
    %4232 = vdwg.mxu0
    %v4249 = vunpack.c.l.b16 %v3997
    %v4250 = vunpack.c.l.b16 %v3998
    %v4251 = vunpack.c.l.b16 %v3999
    %v4252 = vunpack.c.l.b16 %v4000
    %v4253 = vunpack.c.l.b16 %v4001
    %v4254 = vunpack.c.l.b16 %v4002
    %v4255 = vunpack.c.l.b16 %v4003
    %v4256 = vunpack.c.l.b16 %v4004
    %v4257 = vunpack.c.l.b16 %v4005
    %v4258 = vunpack.c.l.b16 %v4006
    %v4259 = vunpack.c.l.b16 %v4007
    %v4260 = vunpack.c.l.b16 %v4008
    %v4261 = vunpack.c.l.b16 %v4009
    %v4262 = vunpack.c.l.b16 %v4010
    %v4263 = vunpack.c.l.b16 %v4011
    %v4264 = vunpack.c.l.b16 %v4012
    %v4265 = vpack.c.b16 %v4250, %v4249
    %v4266 = vpack.c.b16 %v4252, %v4251
    %v4267 = vpack.c.b16 %v4254, %v4253
    %v4268 = vpack.c.b16 %v4256, %v4255
    %v4269 = vpack.c.b16 %v4258, %v4257
    %v4270 = vpack.c.b16 %v4260, %v4259
    %v4271 = vpack.c.b16 %v4262, %v4261
    %v4272 = vpack.c.b16 %v4264, %v4263
    %v4274 = vsel %vm817, %v4265, 0
    %v4277 = vsel %vm817, %v4266, 0
    %v4280 = vsel %vm817, %v4267, 0
    %v4283 = vsel %vm817, %v4268, 0
    %v4286 = vsel %vm817, %v4269, 0
    %v4289 = vsel %vm817, %v4270, 0
    %v4292 = vsel %vm817, %v4271, 0
    %v4295 = vsel %vm817, %v4272, 0
    %v4298 = vsel %vm842, %v4014, 0
    %4300 = vmatprep.subr.bf16.mxu0 0
    %4301 = vmatpush1.bf16.msra.mxu0 %v4298
    %4302 = vmatprep.subr.bf16.mxu0 0
    %4303 = vmatpush1.bf16.msra.mxu0 0
    %4304 = vmatprep.subr.bf16.mxu0 0
    %4305 = vmatpush1.bf16.msra.mxu0 0
    %4306 = vmatprep.subr.bf16.mxu0 0
    %4307 = vmatpush1.bf16.msra.mxu0 0
    %4308 = vmatprep.subr.bf16.mxu0 0
    %4309 = vmatpush1.bf16.msra.mxu0 0
    %4310 = vmatprep.subr.bf16.mxu0 0
    %4311 = vmatpush1.bf16.msra.mxu0 0
    %4312 = vmatprep.subr.bf16.mxu0 0
    %4313 = vmatpush1.bf16.msra.mxu0 0
    %4314 = vmatprep.subr.bf16.mxu0 0
    %4315 = vmatpush1.bf16.msra.mxu0 0
    %4316 = vmatprep.subr.bf16.mxu0 0
    %4317 = vmatpush1.bf16.msra.mxu0 0
    %4318 = vmatprep.subr.bf16.mxu0 0
    %4319 = vmatpush1.bf16.msra.mxu0 0
    %4320 = vmatprep.subr.bf16.mxu0 0
    %4321 = vmatpush1.bf16.msra.mxu0 0
    %4322 = vmatprep.subr.bf16.mxu0 0
    %4323 = vmatpush1.bf16.msra.mxu0 0
    %4324 = vmatprep.subr.bf16.mxu0 0
    %4325 = vmatpush1.bf16.msra.mxu0 0
    %4326 = vmatprep.subr.bf16.mxu0 0
    %4327 = vmatpush1.bf16.msra.mxu0 0
    %4328 = vmatprep.subr.bf16.mxu0 0
    %4329 = vmatpush1.bf16.msra.mxu0 0
    %4330 = vmatprep.subr.bf16.mxu0 0
    %4331 = vmatpush1.bf16.msra.mxu0 0
    %4332 = vmatprep.mubr.bf16.mxu0 0
    %4333 = vmatmul.mubr.bf16.gmra.mrb[0].mxu0 %v4274
    %v4334 = vpop.f32.mrb[0].mxu0
    %v4335 = vadd.f32 %v4171, %v4334
    %v4336 = vpop.f32.mrb[0].mxu0
    %v4337 = vpop.f32.mrb[0].mxu0
    %v4338 = vadd.f32 %v4174, %v4337
    %v4339 = vpop.f32.mrb[0].mxu0
    %4340 = vmatprep.mubr.bf16.mxu0 0
    %4341 = vmatmul.mubr.bf16.gmra.mrb[0].mxu0 %v4277
    %v4342 = vpop.f32.mrb[0].mxu0
    %v4343 = vadd.f32 %v4179, %v4342
    %v4344 = vpop.f32.mrb[0].mxu0
    %v4345 = vpop.f32.mrb[0].mxu0
    %v4346 = vadd.f32 %v4182, %v4345
    %v4347 = vpop.f32.mrb[0].mxu0
    %4348 = vmatprep.mubr.bf16.mxu0 0
    %4349 = vmatmul.mubr.bf16.gmra.mrb[0].mxu0 %v4280
    %v4350 = vpop.f32.mrb[0].mxu0
    %v4351 = vadd.f32 %v4187, %v4350
    %v4352 = vpop.f32.mrb[0].mxu0
    %v4353 = vpop.f32.mrb[0].mxu0
    %v4354 = vadd.f32 %v4190, %v4353
    %v4355 = vpop.f32.mrb[0].mxu0
    %4356 = vmatprep.mubr.bf16.mxu0 0
    %4357 = vmatmul.mubr.bf16.gmra.mrb[0].mxu0 %v4283
    %v4358 = vpop.f32.mrb[0].mxu0
    %v4359 = vadd.f32 %v4195, %v4358
    %v4360 = vpop.f32.mrb[0].mxu0
    %v4361 = vpop.f32.mrb[0].mxu0
    %v4362 = vadd.f32 %v4198, %v4361
    %v4363 = vpop.f32.mrb[0].mxu0
    %4364 = vmatprep.mubr.bf16.mxu0 0
    %4365 = vmatmul.mubr.bf16.gmra.mrb[0].mxu0 %v4286
    %v4366 = vpop.f32.mrb[0].mxu0
    %v4367 = vadd.f32 %v4203, %v4366
    %v4368 = vpop.f32.mrb[0].mxu0
    %v4369 = vpop.f32.mrb[0].mxu0
    %v4370 = vadd.f32 %v4206, %v4369
    %v4371 = vpop.f32.mrb[0].mxu0
    %4372 = vmatprep.mubr.bf16.mxu0 0
    %4373 = vmatmul.mubr.bf16.gmra.mrb[0].mxu0 %v4289
    %v4374 = vpop.f32.mrb[0].mxu0
    %v4375 = vadd.f32 %v4211, %v4374
    %v4376 = vpop.f32.mrb[0].mxu0
    %v4377 = vpop.f32.mrb[0].mxu0
    %v4378 = vadd.f32 %v4214, %v4377
    %v4379 = vpop.f32.mrb[0].mxu0
    %4380 = vmatprep.mubr.bf16.mxu0 0
    %4381 = vmatmul.mubr.bf16.gmra.mrb[0].mxu0 %v4292
    %v4382 = vpop.f32.mrb[0].mxu0
    %v4383 = vadd.f32 %v4219, %v4382
    %v4384 = vpop.f32.mrb[0].mxu0
    %v4385 = vpop.f32.mrb[0].mxu0
    %v4386 = vadd.f32 %v4222, %v4385
    %v4387 = vpop.f32.mrb[0].mxu0
    %4388 = vmatprep.mubr.bf16.mxu0 0
    %4389 = vmatmul.mubr.bf16.gmra.mrb[0].mxu0 %v4295
    %v4390 = vpop.f32.mrb[0].mxu0
    %v4391 = vadd.f32 %v4227, %v4390
    %v4392 = vpop.f32.mrb[0].mxu0
    %v4393 = vpop.f32.mrb[0].mxu0
    %v4394 = vadd.f32 %v4230, %v4393
    %v4395 = vpop.f32.mrb[0].mxu0
    %4396 = vdwg.mxu0
    %s4397 = scalar_lea.vmem [#allocation9], 64
    %v4398 = vld [vmem:[%s4397] sm:$0xf]
    %v4400 = vsel %vm842, %v4398, 0
    %4402 = vmatprep.subr.bf16.mxu0 0
    %4403 = vmatpush1.bf16.msra.mxu0 %v4400
    %4404 = vmatprep.subr.bf16.mxu0 0
    %4405 = vmatpush1.bf16.msra.mxu0 0
    %4406 = vmatprep.subr.bf16.mxu0 0
    %4407 = vmatpush1.bf16.msra.mxu0 0
    %4408 = vmatprep.subr.bf16.mxu0 0
    %4409 = vmatpush1.bf16.msra.mxu0 0
    %4410 = vmatprep.subr.bf16.mxu0 0
    %4411 = vmatpush1.bf16.msra.mxu0 0
    %4412 = vmatprep.subr.bf16.mxu0 0
    %4413 = vmatpush1.bf16.msra.mxu0 0
    %4414 = vmatprep.subr.bf16.mxu0 0
    %4415 = vmatpush1.bf16.msra.mxu0 0
    %4416 = vmatprep.subr.bf16.mxu0 0
    %4417 = vmatpush1.bf16.msra.mxu0 0
    %4418 = vmatprep.subr.bf16.mxu0 0
    %4419 = vmatpush1.bf16.msra.mxu0 0
    %4420 = vmatprep.subr.bf16.mxu0 0
    %4421 = vmatpush1.bf16.msra.mxu0 0
    %4422 = vmatprep.subr.bf16.mxu0 0
    %4423 = vmatpush1.bf16.msra.mxu0 0
    %4424 = vmatprep.subr.bf16.mxu0 0
    %4425 = vmatpush1.bf16.msra.mxu0 0
    %4426 = vmatprep.subr.bf16.mxu0 0
    %4427 = vmatpush1.bf16.msra.mxu0 0
    %4428 = vmatprep.subr.bf16.mxu0 0
    %4429 = vmatpush1.bf16.msra.mxu0 0
    %4430 = vmatprep.subr.bf16.mxu0 0
    %4431 = vmatpush1.bf16.msra.mxu0 0
    %4432 = vmatprep.subr.bf16.mxu0 0
    %4433 = vmatpush1.bf16.msra.mxu0 0
    %4434 = vmatprep.mubr.bf16.mxu0 0
    %4435 = vmatmul.mubr.bf16.gmra.mrb[0].mxu0 %v2630
    %v4436 = vpop.f32.mrb[0].mxu0
    %v4437 = vadd.f32 0.0, %v4436
    %v4438 = vpop.f32.mrb[0].mxu0
    %v4439 = vpop.f32.mrb[0].mxu0
    %v4440 = vadd.f32 0.0, %v4439
    %v4441 = vpop.f32.mrb[0].mxu0
    %4442 = vmatprep.mubr.bf16.mxu0 0
    %4443 = vmatmul.mubr.bf16.gmra.mrb[0].mxu0 %v2633
    %v4444 = vpop.f32.mrb[0].mxu0
    %v4445 = vadd.f32 0.0, %v4444
    %v4446 = vpop.f32.mrb[0].mxu0
    %v4447 = vpop.f32.mrb[0].mxu0
    %v4448 = vadd.f32 0.0, %v4447
    %v4449 = vpop.f32.mrb[0].mxu0
    %4450 = vmatprep.mubr.bf16.mxu0 0
    %4451 = vmatmul.mubr.bf16.gmra.mrb[0].mxu0 %v2636
    %v4452 = vpop.f32.mrb[0].mxu0
    %v4453 = vadd.f32 0.0, %v4452
    %v4454 = vpop.f32.mrb[0].mxu0
    %v4455 = vpop.f32.mrb[0].mxu0
    %v4456 = vadd.f32 0.0, %v4455
    %v4457 = vpop.f32.mrb[0].mxu0
    %4458 = vmatprep.mubr.bf16.mxu0 0
    %4459 = vmatmul.mubr.bf16.gmra.mrb[0].mxu0 %v2639
    %v4460 = vpop.f32.mrb[0].mxu0
    %v4461 = vadd.f32 0.0, %v4460
    %v4462 = vpop.f32.mrb[0].mxu0
    %v4463 = vpop.f32.mrb[0].mxu0
    %v4464 = vadd.f32 0.0, %v4463
    %v4465 = vpop.f32.mrb[0].mxu0
    %4466 = vmatprep.mubr.bf16.mxu0 0
    %4467 = vmatmul.mubr.bf16.gmra.mrb[0].mxu0 %v2642
    %v4468 = vpop.f32.mrb[0].mxu0
    %v4469 = vadd.f32 0.0, %v4468
    %v4470 = vpop.f32.mrb[0].mxu0
    %v4471 = vpop.f32.mrb[0].mxu0
    %v4472 = vadd.f32 0.0, %v4471
    %v4473 = vpop.f32.mrb[0].mxu0
    %4474 = vmatprep.mubr.bf16.mxu0 0
    %4475 = vmatmul.mubr.bf16.gmra.mrb[0].mxu0 %v2645
    %v4476 = vpop.f32.mrb[0].mxu0
    %v4477 = vadd.f32 0.0, %v4476
    %v4478 = vpop.f32.mrb[0].mxu0
    %v4479 = vpop.f32.mrb[0].mxu0
    %v4480 = vadd.f32 0.0, %v4479
    %v4481 = vpop.f32.mrb[0].mxu0
    %4482 = vmatprep.mubr.bf16.mxu0 0
    %4483 = vmatmul.mubr.bf16.gmra.mrb[0].mxu0 %v2648
    %v4484 = vpop.f32.mrb[0].mxu0
    %v4485 = vadd.f32 0.0, %v4484
    %v4486 = vpop.f32.mrb[0].mxu0
    %v4487 = vpop.f32.mrb[0].mxu0
    %v4488 = vadd.f32 0.0, %v4487
    %v4489 = vpop.f32.mrb[0].mxu0
    %4490 = vmatprep.mubr.bf16.mxu0 0
    %4491 = vmatmul.mubr.bf16.gmra.mrb[0].mxu0 %v2651
    %v4492 = vpop.f32.mrb[0].mxu0
    %v4493 = vadd.f32 0.0, %v4492
    %v4494 = vpop.f32.mrb[0].mxu0
    %v4495 = vpop.f32.mrb[0].mxu0
    %v4496 = vadd.f32 0.0, %v4495
    %v4497 = vpop.f32.mrb[0].mxu0
    %4498 = vdwg.mxu0
    %v4499 = vadd.f32 %v4335, %v4437
    %v4500 = vadd.f32 %v4338, %v4440
    %v4501 = vadd.f32 %v4343, %v4445
    %v4502 = vadd.f32 %v4346, %v4448
    %v4503 = vadd.f32 %v4351, %v4453
    %v4504 = vadd.f32 %v4354, %v4456
    %v4505 = vadd.f32 %v4359, %v4461
    %v4506 = vadd.f32 %v4362, %v4464
    %v4507 = vadd.f32 %v4367, %v4469
    %v4508 = vadd.f32 %v4370, %v4472
    %v4509 = vadd.f32 %v4375, %v4477
    %v4510 = vadd.f32 %v4378, %v4480
    %v4511 = vadd.f32 %v4383, %v4485
    %v4512 = vadd.f32 %v4386, %v4488
    %v4513 = vadd.f32 %v4391, %v4493
    %v4514 = vadd.f32 %v4394, %v4496
    %s4515 = scalar_lea.vmem [#allocation9], 68
    %v4516 = vld [vmem:[%s4515] sm:$0xf]
    %v4518 = vsel %vm842, %v4516, 0
    %4520 = vmatprep.subr.bf16.mxu0 0
    %4521 = vmatpush1.bf16.msra.mxu0 %v4518
    %4522 = vmatprep.subr.bf16.mxu0 0
    %4523 = vmatpush1.bf16.msra.mxu0 0
    %4524 = vmatprep.subr.bf16.mxu0 0
    %4525 = vmatpush1.bf16.msra.mxu0 0
    %4526 = vmatprep.subr.bf16.mxu0 0
    %4527 = vmatpush1.bf16.msra.mxu0 0
    %4528 = vmatprep.subr.bf16.mxu0 0
    %4529 = vmatpush1.bf16.msra.mxu0 0
    %4530 = vmatprep.subr.bf16.mxu0 0
    %4531 = vmatpush1.bf16.msra.mxu0 0
    %4532 = vmatprep.subr.bf16.mxu0 0
    %4533 = vmatpush1.bf16.msra.mxu0 0
    %4534 = vmatprep.subr.bf16.mxu0 0
    %4535 = vmatpush1.bf16.msra.mxu0 0
    %4536 = vmatprep.subr.bf16.mxu0 0
    %4537 = vmatpush1.bf16.msra.mxu0 0
    %4538 = vmatprep.subr.bf16.mxu0 0
    %4539 = vmatpush1.bf16.msra.mxu0 0
    %4540 = vmatprep.subr.bf16.mxu0 0
    %4541 = vmatpush1.bf16.msra.mxu0 0
    %4542 = vmatprep.subr.bf16.mxu0 0
    %4543 = vmatpush1.bf16.msra.mxu0 0
    %4544 = vmatprep.subr.bf16.mxu0 0
    %4545 = vmatpush1.bf16.msra.mxu0 0
    %4546 = vmatprep.subr.bf16.mxu0 0
    %4547 = vmatpush1.bf16.msra.mxu0 0
    %4548 = vmatprep.subr.bf16.mxu0 0
    %4549 = vmatpush1.bf16.msra.mxu0 0
    %4550 = vmatprep.subr.bf16.mxu0 0
    %4551 = vmatpush1.bf16.msra.mxu0 0
    %4552 = vmatprep.mubr.bf16.mxu0 0
    %4553 = vmatmul.mubr.bf16.gmra.mrb[0].mxu0 %v1487
    %v4554 = vpop.f32.mrb[0].mxu0
    %v4555 = vadd.f32 0.0, %v4554
    %v4556 = vpop.f32.mrb[0].mxu0
    %v4557 = vpop.f32.mrb[0].mxu0
    %v4558 = vadd.f32 0.0, %v4557
    %v4559 = vpop.f32.mrb[0].mxu0
    %4560 = vmatprep.mubr.bf16.mxu0 0
    %4561 = vmatmul.mubr.bf16.gmra.mrb[0].mxu0 %v1490
    %v4562 = vpop.f32.mrb[0].mxu0
    %v4563 = vadd.f32 0.0, %v4562
    %v4564 = vpop.f32.mrb[0].mxu0
    %v4565 = vpop.f32.mrb[0].mxu0
    %v4566 = vadd.f32 0.0, %v4565
    %v4567 = vpop.f32.mrb[0].mxu0
    %4568 = vmatprep.mubr.bf16.mxu0 0
    %4569 = vmatmul.mubr.bf16.gmra.mrb[0].mxu0 %v1493
    %v4570 = vpop.f32.mrb[0].mxu0
    %v4571 = vadd.f32 0.0, %v4570
    %v4572 = vpop.f32.mrb[0].mxu0
    %v4573 = vpop.f32.mrb[0].mxu0
    %v4574 = vadd.f32 0.0, %v4573
    %v4575 = vpop.f32.mrb[0].mxu0
    %4576 = vmatprep.mubr.bf16.mxu0 0
    %4577 = vmatmul.mubr.bf16.gmra.mrb[0].mxu0 %v1496
    %v4578 = vpop.f32.mrb[0].mxu0
    %v4579 = vadd.f32 0.0, %v4578
    %v4580 = vpop.f32.mrb[0].mxu0
    %v4581 = vpop.f32.mrb[0].mxu0
    %v4582 = vadd.f32 0.0, %v4581
    %v4583 = vpop.f32.mrb[0].mxu0
    %4584 = vmatprep.mubr.bf16.mxu0 0
    %4585 = vmatmul.mubr.bf16.gmra.mrb[0].mxu0 %v1499
    %v4586 = vpop.f32.mrb[0].mxu0
    %v4587 = vadd.f32 0.0, %v4586
    %v4588 = vpop.f32.mrb[0].mxu0
    %v4589 = vpop.f32.mrb[0].mxu0
    %v4590 = vadd.f32 0.0, %v4589
    %v4591 = vpop.f32.mrb[0].mxu0
    %4592 = vmatprep.mubr.bf16.mxu0 0
    %4593 = vmatmul.mubr.bf16.gmra.mrb[0].mxu0 %v1502
    %v4594 = vpop.f32.mrb[0].mxu0
    %v4595 = vadd.f32 0.0, %v4594
    %v4596 = vpop.f32.mrb[0].mxu0
    %v4597 = vpop.f32.mrb[0].mxu0
    %v4598 = vadd.f32 0.0, %v4597
    %v4599 = vpop.f32.mrb[0].mxu0
    %4600 = vmatprep.mubr.bf16.mxu0 0
    %4601 = vmatmul.mubr.bf16.gmra.mrb[0].mxu0 %v1505
    %v4602 = vpop.f32.mrb[0].mxu0
    %v4603 = vadd.f32 0.0, %v4602
    %v4604 = vpop.f32.mrb[0].mxu0
    %v4605 = vpop.f32.mrb[0].mxu0
    %v4606 = vadd.f32 0.0, %v4605
    %v4607 = vpop.f32.mrb[0].mxu0
    %4608 = vmatprep.mubr.bf16.mxu0 0
    %4609 = vmatmul.mubr.bf16.gmra.mrb[0].mxu0 %v1508
    %v4610 = vpop.f32.mrb[0].mxu0
    %v4611 = vadd.f32 0.0, %v4610
    %v4612 = vpop.f32.mrb[0].mxu0
    %v4613 = vpop.f32.mrb[0].mxu0
    %v4614 = vadd.f32 0.0, %v4613
    %v4615 = vpop.f32.mrb[0].mxu0
    %4616 = vdwg.mxu0
    %v4617 = vadd.f32 %v4499, %v4555
    %v4618 = vadd.f32 %v4500, %v4558
    %v4619 = vadd.f32 %v4501, %v4563
    %v4620 = vadd.f32 %v4502, %v4566
    %v4621 = vadd.f32 %v4503, %v4571
    %v4622 = vadd.f32 %v4504, %v4574
    %v4623 = vadd.f32 %v4505, %v4579
    %v4624 = vadd.f32 %v4506, %v4582
    %v4625 = vadd.f32 %v4507, %v4587
    %v4626 = vadd.f32 %v4508, %v4590
    %v4627 = vadd.f32 %v4509, %v4595
    %v4628 = vadd.f32 %v4510, %v4598
    %v4629 = vadd.f32 %v4511, %v4603
    %v4630 = vadd.f32 %v4512, %v4606
    %v4631 = vadd.f32 %v4513, %v4611
    %v4632 = vadd.f32 %v4514, %v4614
    %s4633 = scalar_lea.vmem [#allocation9], 72
    %v4634 = vld [vmem:[%s4633] sm:$0xf]
    %v4636 = vsel %vm842, %v4634, 0
    %4638 = vmatprep.subr.bf16.mxu0 0
    %4639 = vmatpush1.bf16.msra.mxu0 %v4636
    %4640 = vmatprep.subr.bf16.mxu0 0
    %4641 = vmatpush1.bf16.msra.mxu0 0
    %4642 = vmatprep.subr.bf16.mxu0 0
    %4643 = vmatpush1.bf16.msra.mxu0 0
    %4644 = vmatprep.subr.bf16.mxu0 0
    %4645 = vmatpush1.bf16.msra.mxu0 0
    %4646 = vmatprep.subr.bf16.mxu0 0
    %4647 = vmatpush1.bf16.msra.mxu0 0
    %4648 = vmatprep.subr.bf16.mxu0 0
    %4649 = vmatpush1.bf16.msra.mxu0 0
    %4650 = vmatprep.subr.bf16.mxu0 0
    %4651 = vmatpush1.bf16.msra.mxu0 0
    %4652 = vmatprep.subr.bf16.mxu0 0
    %4653 = vmatpush1.bf16.msra.mxu0 0
    %4654 = vmatprep.subr.bf16.mxu0 0
    %4655 = vmatpush1.bf16.msra.mxu0 0
    %4656 = vmatprep.subr.bf16.mxu0 0
    %4657 = vmatpush1.bf16.msra.mxu0 0
    %4658 = vmatprep.subr.bf16.mxu0 0
    %4659 = vmatpush1.bf16.msra.mxu0 0
    %4660 = vmatprep.subr.bf16.mxu0 0
    %4661 = vmatpush1.bf16.msra.mxu0 0
    %4662 = vmatprep.subr.bf16.mxu0 0
    %4663 = vmatpush1.bf16.msra.mxu0 0
    %4664 = vmatprep.subr.bf16.mxu0 0
    %4665 = vmatpush1.bf16.msra.mxu0 0
    %4666 = vmatprep.subr.bf16.mxu0 0
    %4667 = vmatpush1.bf16.msra.mxu0 0
    %4668 = vmatprep.subr.bf16.mxu0 0
    %4669 = vmatpush1.bf16.msra.mxu0 0
    %4670 = vmatprep.mubr.bf16.mxu0 0
    %4671 = vmatmul.mubr.bf16.gmra.mrb[0].mxu0 %v3286
    %v4672 = vpop.f32.mrb[0].mxu0
    %v4673 = vadd.f32 0.0, %v4672
    %v4674 = vpop.f32.mrb[0].mxu0
    %v4675 = vpop.f32.mrb[0].mxu0
    %v4676 = vadd.f32 0.0, %v4675
    %v4677 = vpop.f32.mrb[0].mxu0
    %4678 = vmatprep.mubr.bf16.mxu0 0
    %4679 = vmatmul.mubr.bf16.gmra.mrb[0].mxu0 %v3289
    %v4680 = vpop.f32.mrb[0].mxu0
    %v4681 = vadd.f32 0.0, %v4680
    %v4682 = vpop.f32.mrb[0].mxu0
    %v4683 = vpop.f32.mrb[0].mxu0
    %v4684 = vadd.f32 0.0, %v4683
    %v4685 = vpop.f32.mrb[0].mxu0
    %4686 = vmatprep.mubr.bf16.mxu0 0
    %4687 = vmatmul.mubr.bf16.gmra.mrb[0].mxu0 %v3292
    %v4688 = vpop.f32.mrb[0].mxu0
    %v4689 = vadd.f32 0.0, %v4688
    %v4690 = vpop.f32.mrb[0].mxu0
    %v4691 = vpop.f32.mrb[0].mxu0
    %v4692 = vadd.f32 0.0, %v4691
    %v4693 = vpop.f32.mrb[0].mxu0
    %4694 = vmatprep.mubr.bf16.mxu0 0
    %4695 = vmatmul.mubr.bf16.gmra.mrb[0].mxu0 %v3295
    %v4696 = vpop.f32.mrb[0].mxu0
    %v4697 = vadd.f32 0.0, %v4696
    %v4698 = vpop.f32.mrb[0].mxu0
    %v4699 = vpop.f32.mrb[0].mxu0
    %v4700 = vadd.f32 0.0, %v4699
    %v4701 = vpop.f32.mrb[0].mxu0
    %4702 = vmatprep.mubr.bf16.mxu0 0
    %4703 = vmatmul.mubr.bf16.gmra.mrb[0].mxu0 %v3298
    %v4704 = vpop.f32.mrb[0].mxu0
    %v4705 = vadd.f32 0.0, %v4704
    %v4706 = vpop.f32.mrb[0].mxu0
    %v4707 = vpop.f32.mrb[0].mxu0
    %v4708 = vadd.f32 0.0, %v4707
    %v4709 = vpop.f32.mrb[0].mxu0
    %4710 = vmatprep.mubr.bf16.mxu0 0
    %4711 = vmatmul.mubr.bf16.gmra.mrb[0].mxu0 %v3301
    %v4712 = vpop.f32.mrb[0].mxu0
    %v4713 = vadd.f32 0.0, %v4712
    %v4714 = vpop.f32.mrb[0].mxu0
    %v4715 = vpop.f32.mrb[0].mxu0
    %v4716 = vadd.f32 0.0, %v4715
    %v4717 = vpop.f32.mrb[0].mxu0
    %4718 = vmatprep.mubr.bf16.mxu0 0
    %4719 = vmatmul.mubr.bf16.gmra.mrb[0].mxu0 %v3304
    %v4720 = vpop.f32.mrb[0].mxu0
    %v4721 = vadd.f32 0.0, %v4720
    %v4722 = vpop.f32.mrb[0].mxu0
    %v4723 = vpop.f32.mrb[0].mxu0
    %v4724 = vadd.f32 0.0, %v4723
    %v4725 = vpop.f32.mrb[0].mxu0
    %4726 = vmatprep.mubr.bf16.mxu0 0
    %4727 = vmatmul.mubr.bf16.gmra.mrb[0].mxu0 %v3307
    %v4728 = vpop.f32.mrb[0].mxu0
    %v4729 = vadd.f32 0.0, %v4728
    %v4730 = vpop.f32.mrb[0].mxu0
    %v4731 = vpop.f32.mrb[0].mxu0
    %v4732 = vadd.f32 0.0, %v4731
    %v4733 = vpop.f32.mrb[0].mxu0
    %4734 = vdwg.mxu0
    %v4735 = vadd.f32 %v4617, %v4673
    %v4736 = vadd.f32 %v4618, %v4676
    %v4737 = vadd.f32 %v4619, %v4681
    %v4738 = vadd.f32 %v4620, %v4684
    %v4739 = vadd.f32 %v4621, %v4689
    %v4740 = vadd.f32 %v4622, %v4692
    %v4741 = vadd.f32 %v4623, %v4697
    %v4742 = vadd.f32 %v4624, %v4700
    %v4743 = vadd.f32 %v4625, %v4705
    %v4744 = vadd.f32 %v4626, %v4708
    %v4745 = vadd.f32 %v4627, %v4713
    %v4746 = vadd.f32 %v4628, %v4716
    %v4747 = vadd.f32 %v4629, %v4721
    %v4748 = vadd.f32 %v4630, %v4724
    %v4749 = vadd.f32 %v4631, %v4729
    %v4750 = vadd.f32 %v4632, %v4732
    %v4751 = vld [vmem:[#allocation2 + $0x8] sm:$0xc]
    %v4752 = vld [vmem:[#allocation2 + $0x18] sm:$0x3]
    %v4753 = vld [vmem:[#allocation2 + $0x24] sm:$0xc]
    %v4754 = vld [vmem:[#allocation2 + $0x34] sm:$0x3]
    %v4755 = vld [vmem:[#allocation2 + $0x40] sm:$0xc]
    %v4756 = vld [vmem:[#allocation2 + $0x50] sm:$0x3]
    %v4757 = vld [vmem:[#allocation2 + $0x5c] sm:$0xc]
    %v4758 = vld [vmem:[#allocation2 + $0x6c] sm:$0x3]
    %v4767 = vrot.slane %v4751, 6
    %v4768 = vrot.slane %v4767, 4
    %v4769 = vrot.slane %v3426, 6
    %v4770 = vsel %vm427, %v4768, %v4769
    %v4771 = vrot.slane %v4769, 4
    %v4772 = vrot.slane %v3427, 6
    %v4773 = vsel %vm427, %v4771, %v4772
    %v4774 = vrot.slane %v4772, 4
    %v4775 = vrot.slane %v3428, 6
    %v4776 = vsel %vm427, %v4774, %v4775
    %v4777 = vrot.slane %v4775, 4
    %v4778 = vrot.slane %v4752, 6
    %v4779 = vsel %vm427, %v4777, %v4778
    %v4780 = vrot.slane %v4753, 6
    %v4781 = vrot.slane %v4780, 4
    %v4782 = vrot.slane %v3431, 6
    %v4783 = vsel %vm427, %v4781, %v4782
    %v4784 = vrot.slane %v4782, 4
    %v4785 = vrot.slane %v3432, 6
    %v4786 = vsel %vm427, %v4784, %v4785
    %v4787 = vrot.slane %v4785, 4
    %v4788 = vrot.slane %v3433, 6
    %v4789 = vsel %vm427, %v4787, %v4788
    %v4790 = vrot.slane %v4788, 4
    %v4791 = vrot.slane %v4754, 6
    %v4792 = vsel %vm427, %v4790, %v4791
    %v4793 = vrot.slane %v4755, 6
    %v4794 = vrot.slane %v4793, 4
    %v4795 = vrot.slane %v3436, 6
    %v4796 = vsel %vm427, %v4794, %v4795
    %v4797 = vrot.slane %v4795, 4
    %v4798 = vrot.slane %v3437, 6
    %v4799 = vsel %vm427, %v4797, %v4798
    %v4800 = vrot.slane %v4798, 4
    %v4801 = vrot.slane %v3438, 6
    %v4802 = vsel %vm427, %v4800, %v4801
    %v4803 = vrot.slane %v4801, 4
    %v4804 = vrot.slane %v4756, 6
    %v4805 = vsel %vm427, %v4803, %v4804
    %v4806 = vrot.slane %v4757, 6
    %v4807 = vrot.slane %v4806, 4
    %v4808 = vrot.slane %v3441, 6
    %v4809 = vsel %vm427, %v4807, %v4808
    %v4810 = vrot.slane %v4808, 4
    %v4811 = vrot.slane %v3442, 6
    %v4812 = vsel %vm427, %v4810, %v4811
    %v4813 = vrot.slane %v4811, 4
    %v4814 = vrot.slane %v3443, 6
    %v4815 = vsel %vm427, %v4813, %v4814
    %v4816 = vrot.slane %v4814, 4
    %v4817 = vrot.slane %v4758, 6
    %v4818 = vsel %vm427, %v4816, %v4817
    %s4819 = scalar_lea.vmem [#allocation9], 76
    %v4820 = vld [vmem:[%s4819] sm:$0xf]
    %v4821 = vunpack.c.l.b16 %v4770
    %v4822 = vunpack.c.l.b16 %v4773
    %v4823 = vunpack.c.l.b16 %v4776
    %v4824 = vunpack.c.l.b16 %v4779
    %v4825 = vunpack.c.l.b16 %v4783
    %v4826 = vunpack.c.l.b16 %v4786
    %v4827 = vunpack.c.l.b16 %v4789
    %v4828 = vunpack.c.l.b16 %v4792
    %v4829 = vunpack.c.l.b16 %v4796
    %v4830 = vunpack.c.l.b16 %v4799
    %v4831 = vunpack.c.l.b16 %v4802
    %v4832 = vunpack.c.l.b16 %v4805
    %v4833 = vunpack.c.l.b16 %v4809
    %v4834 = vunpack.c.l.b16 %v4812
    %v4835 = vunpack.c.l.b16 %v4815
    %v4836 = vunpack.c.l.b16 %v4818
    %v4837 = vpack.c.b16 %v4822, %v4821
    %v4838 = vpack.c.b16 %v4824, %v4823
    %v4839 = vpack.c.b16 %v4826, %v4825
    %v4840 = vpack.c.b16 %v4828, %v4827
    %v4841 = vpack.c.b16 %v4830, %v4829
    %v4842 = vpack.c.b16 %v4832, %v4831
    %v4843 = vpack.c.b16 %v4834, %v4833
    %v4844 = vpack.c.b16 %v4836, %v4835
    %v4846 = vsel %vm817, %v4837, 0
    %v4849 = vsel %vm817, %v4838, 0
    %v4852 = vsel %vm817, %v4839, 0
    %v4855 = vsel %vm817, %v4840, 0
    %v4858 = vsel %vm817, %v4841, 0
    %v4861 = vsel %vm817, %v4842, 0
    %v4864 = vsel %vm817, %v4843, 0
    %v4867 = vsel %vm817, %v4844, 0
    %v4870 = vsel %vm842, %v4820, 0
    %4872 = vmatprep.subr.bf16.mxu0 0
    %4873 = vmatpush1.bf16.msra.mxu0 %v4870
    %4874 = vmatprep.subr.bf16.mxu0 0
    %4875 = vmatpush1.bf16.msra.mxu0 0
    %4876 = vmatprep.subr.bf16.mxu0 0
    %4877 = vmatpush1.bf16.msra.mxu0 0
    %4878 = vmatprep.subr.bf16.mxu0 0
    %4879 = vmatpush1.bf16.msra.mxu0 0
    %4880 = vmatprep.subr.bf16.mxu0 0
    %4881 = vmatpush1.bf16.msra.mxu0 0
    %4882 = vmatprep.subr.bf16.mxu0 0
    %4883 = vmatpush1.bf16.msra.mxu0 0
    %4884 = vmatprep.subr.bf16.mxu0 0
    %4885 = vmatpush1.bf16.msra.mxu0 0
    %4886 = vmatprep.subr.bf16.mxu0 0
    %4887 = vmatpush1.bf16.msra.mxu0 0
    %4888 = vmatprep.subr.bf16.mxu0 0
    %4889 = vmatpush1.bf16.msra.mxu0 0
    %4890 = vmatprep.subr.bf16.mxu0 0
    %4891 = vmatpush1.bf16.msra.mxu0 0
    %4892 = vmatprep.subr.bf16.mxu0 0
    %4893 = vmatpush1.bf16.msra.mxu0 0
    %4894 = vmatprep.subr.bf16.mxu0 0
    %4895 = vmatpush1.bf16.msra.mxu0 0
    %4896 = vmatprep.subr.bf16.mxu0 0
    %4897 = vmatpush1.bf16.msra.mxu0 0
    %4898 = vmatprep.subr.bf16.mxu0 0
    %4899 = vmatpush1.bf16.msra.mxu0 0
    %4900 = vmatprep.subr.bf16.mxu0 0
    %4901 = vmatpush1.bf16.msra.mxu0 0
    %4902 = vmatprep.subr.bf16.mxu0 0
    %4903 = vmatpush1.bf16.msra.mxu0 0
    %4904 = vmatprep.mubr.bf16.mxu0 0
    %4905 = vmatmul.mubr.bf16.gmra.mrb[0].mxu0 %v4846
    %v4906 = vpop.f32.mrb[0].mxu0
    %v4907 = vadd.f32 0.0, %v4906
    %v4908 = vpop.f32.mrb[0].mxu0
    %v4909 = vpop.f32.mrb[0].mxu0
    %v4910 = vadd.f32 0.0, %v4909
    %v4911 = vpop.f32.mrb[0].mxu0
    %4912 = vmatprep.mubr.bf16.mxu0 0
    %4913 = vmatmul.mubr.bf16.gmra.mrb[0].mxu0 %v4849
    %v4914 = vpop.f32.mrb[0].mxu0
    %v4915 = vadd.f32 0.0, %v4914
    %v4916 = vpop.f32.mrb[0].mxu0
    %v4917 = vpop.f32.mrb[0].mxu0
    %v4918 = vadd.f32 0.0, %v4917
    %v4919 = vpop.f32.mrb[0].mxu0
    %4920 = vmatprep.mubr.bf16.mxu0 0
    %4921 = vmatmul.mubr.bf16.gmra.mrb[0].mxu0 %v4852
    %v4922 = vpop.f32.mrb[0].mxu0
    %v4923 = vadd.f32 0.0, %v4922
    %v4924 = vpop.f32.mrb[0].mxu0
    %v4925 = vpop.f32.mrb[0].mxu0
    %v4926 = vadd.f32 0.0, %v4925
    %v4927 = vpop.f32.mrb[0].mxu0
    %4928 = vmatprep.mubr.bf16.mxu0 0
    %4929 = vmatmul.mubr.bf16.gmra.mrb[0].mxu0 %v4855
    %v4930 = vpop.f32.mrb[0].mxu0
    %v4931 = vadd.f32 0.0, %v4930
    %v4932 = vpop.f32.mrb[0].mxu0
    %v4933 = vpop.f32.mrb[0].mxu0
    %v4934 = vadd.f32 0.0, %v4933
    %v4935 = vpop.f32.mrb[0].mxu0
    %4936 = vmatprep.mubr.bf16.mxu0 0
    %4937 = vmatmul.mubr.bf16.gmra.mrb[0].mxu0 %v4858
    %v4938 = vpop.f32.mrb[0].mxu0
    %v4939 = vadd.f32 0.0, %v4938
    %v4940 = vpop.f32.mrb[0].mxu0
    %v4941 = vpop.f32.mrb[0].mxu0
    %v4942 = vadd.f32 0.0, %v4941
    %v4943 = vpop.f32.mrb[0].mxu0
    %4944 = vmatprep.mubr.bf16.mxu0 0
    %4945 = vmatmul.mubr.bf16.gmra.mrb[0].mxu0 %v4861
    %v4946 = vpop.f32.mrb[0].mxu0
    %v4947 = vadd.f32 0.0, %v4946
    %v4948 = vpop.f32.mrb[0].mxu0
    %v4949 = vpop.f32.mrb[0].mxu0
    %v4950 = vadd.f32 0.0, %v4949
    %v4951 = vpop.f32.mrb[0].mxu0
    %4952 = vmatprep.mubr.bf16.mxu0 0
    %4953 = vmatmul.mubr.bf16.gmra.mrb[0].mxu0 %v4864
    %v4954 = vpop.f32.mrb[0].mxu0
    %v4955 = vadd.f32 0.0, %v4954
    %v4956 = vpop.f32.mrb[0].mxu0
    %v4957 = vpop.f32.mrb[0].mxu0
    %v4958 = vadd.f32 0.0, %v4957
    %v4959 = vpop.f32.mrb[0].mxu0
    %4960 = vmatprep.mubr.bf16.mxu0 0
    %4961 = vmatmul.mubr.bf16.gmra.mrb[0].mxu0 %v4867
    %v4962 = vpop.f32.mrb[0].mxu0
    %v4963 = vadd.f32 0.0, %v4962
    %v4964 = vpop.f32.mrb[0].mxu0
    %v4965 = vpop.f32.mrb[0].mxu0
    %v4966 = vadd.f32 0.0, %v4965
    %v4967 = vpop.f32.mrb[0].mxu0
    %4968 = vdwg.mxu0
    %v4969 = vadd.f32 %v4735, %v4907
    %v4970 = vadd.f32 %v4736, %v4910
    %v4971 = vadd.f32 %v4737, %v4915
    %v4972 = vadd.f32 %v4738, %v4918
    %v4973 = vadd.f32 %v4739, %v4923
    %v4974 = vadd.f32 %v4740, %v4926
    %v4975 = vadd.f32 %v4741, %v4931
    %v4976 = vadd.f32 %v4742, %v4934
    %v4977 = vadd.f32 %v4743, %v4939
    %v4978 = vadd.f32 %v4744, %v4942
    %v4979 = vadd.f32 %v4745, %v4947
    %v4980 = vadd.f32 %v4746, %v4950
    %v4981 = vadd.f32 %v4747, %v4955
    %v4982 = vadd.f32 %v4748, %v4958
    %v4983 = vadd.f32 %v4749, %v4963
    %v4984 = vadd.f32 %v4750, %v4966
    %v4985 = vld [vmem:[#allocation2 + $0x18] sm:$0xf]
    %v4986 = vld [vmem:[#allocation2 + $0x34] sm:$0xf]
    %v4987 = vld [vmem:[#allocation2 + $0x50] sm:$0xf]
    %v4988 = vld [vmem:[#allocation2 + $0x6c] sm:$0xf]
    %s4989 = scalar_lea.vmem [#allocation9], 80
    %v4990 = vld [vmem:[%s4989] sm:$0xf]
    %v4995 = vunpack.c.l.b16 %v3426
    %v4996 = vunpack.c.l.b16 %v3427
    %v4997 = vunpack.c.l.b16 %v3428
    %v4998 = vunpack.c.l.b16 %v4985
    %v4999 = vunpack.c.l.b16 %v3431
    %v5000 = vunpack.c.l.b16 %v3432
    %v5001 = vunpack.c.l.b16 %v3433
    %v5002 = vunpack.c.l.b16 %v4986
    %v5003 = vunpack.c.l.b16 %v3436
    %v5004 = vunpack.c.l.b16 %v3437
    %v5005 = vunpack.c.l.b16 %v3438
    %v5006 = vunpack.c.l.b16 %v4987
    %v5007 = vunpack.c.l.b16 %v3441
    %v5008 = vunpack.c.l.b16 %v3442
    %v5009 = vunpack.c.l.b16 %v3443
    %v5010 = vunpack.c.l.b16 %v4988
    %v5011 = vpack.c.b16 %v4996, %v4995
    %v5012 = vpack.c.b16 %v4998, %v4997
    %v5013 = vpack.c.b16 %v5000, %v4999
    %v5014 = vpack.c.b16 %v5002, %v5001
    %v5015 = vpack.c.b16 %v5004, %v5003
    %v5016 = vpack.c.b16 %v5006, %v5005
    %v5017 = vpack.c.b16 %v5008, %v5007
    %v5018 = vpack.c.b16 %v5010, %v5009
    %v5020 = vsel %vm817, %v5011, 0
    %v5023 = vsel %vm817, %v5012, 0
    %v5026 = vsel %vm817, %v5013, 0
    %v5029 = vsel %vm817, %v5014, 0
    %v5032 = vsel %vm817, %v5015, 0
    %v5035 = vsel %vm817, %v5016, 0
    %v5038 = vsel %vm817, %v5017, 0
    %v5041 = vsel %vm817, %v5018, 0
    %v5044 = vsel %vm842, %v4990, 0
    %5046 = vmatprep.subr.bf16.mxu0 0
    %5047 = vmatpush1.bf16.msra.mxu0 %v5044
    %5048 = vmatprep.subr.bf16.mxu0 0
    %5049 = vmatpush1.bf16.msra.mxu0 0
    %5050 = vmatprep.subr.bf16.mxu0 0
    %5051 = vmatpush1.bf16.msra.mxu0 0
    %5052 = vmatprep.subr.bf16.mxu0 0
    %5053 = vmatpush1.bf16.msra.mxu0 0
    %5054 = vmatprep.subr.bf16.mxu0 0
    %5055 = vmatpush1.bf16.msra.mxu0 0
    %5056 = vmatprep.subr.bf16.mxu0 0
    %5057 = vmatpush1.bf16.msra.mxu0 0
    %5058 = vmatprep.subr.bf16.mxu0 0
    %5059 = vmatpush1.bf16.msra.mxu0 0
    %5060 = vmatprep.subr.bf16.mxu0 0
    %5061 = vmatpush1.bf16.msra.mxu0 0
    %5062 = vmatprep.subr.bf16.mxu0 0
    %5063 = vmatpush1.bf16.msra.mxu0 0
    %5064 = vmatprep.subr.bf16.mxu0 0
    %5065 = vmatpush1.bf16.msra.mxu0 0
    %5066 = vmatprep.subr.bf16.mxu0 0
    %5067 = vmatpush1.bf16.msra.mxu0 0
    %5068 = vmatprep.subr.bf16.mxu0 0
    %5069 = vmatpush1.bf16.msra.mxu0 0
    %5070 = vmatprep.subr.bf16.mxu0 0
    %5071 = vmatpush1.bf16.msra.mxu0 0
    %5072 = vmatprep.subr.bf16.mxu0 0
    %5073 = vmatpush1.bf16.msra.mxu0 0
    %5074 = vmatprep.subr.bf16.mxu0 0
    %5075 = vmatpush1.bf16.msra.mxu0 0
    %5076 = vmatprep.subr.bf16.mxu0 0
    %5077 = vmatpush1.bf16.msra.mxu0 0
    %5078 = vmatprep.mubr.bf16.mxu0 0
    %5079 = vmatmul.mubr.bf16.gmra.mrb[0].mxu0 %v5020
    %v5080 = vpop.f32.mrb[0].mxu0
    %v5081 = vadd.f32 0.0, %v5080
    %v5082 = vpop.f32.mrb[0].mxu0
    %v5083 = vpop.f32.mrb[0].mxu0
    %v5084 = vadd.f32 0.0, %v5083
    %v5085 = vpop.f32.mrb[0].mxu0
    %5086 = vmatprep.mubr.bf16.mxu0 0
    %5087 = vmatmul.mubr.bf16.gmra.mrb[0].mxu0 %v5023
    %v5088 = vpop.f32.mrb[0].mxu0
    %v5089 = vadd.f32 0.0, %v5088
    %v5090 = vpop.f32.mrb[0].mxu0
    %v5091 = vpop.f32.mrb[0].mxu0
    %v5092 = vadd.f32 0.0, %v5091
    %v5093 = vpop.f32.mrb[0].mxu0
    %5094 = vmatprep.mubr.bf16.mxu0 0
    %5095 = vmatmul.mubr.bf16.gmra.mrb[0].mxu0 %v5026
    %v5096 = vpop.f32.mrb[0].mxu0
    %v5097 = vadd.f32 0.0, %v5096
    %v5098 = vpop.f32.mrb[0].mxu0
    %v5099 = vpop.f32.mrb[0].mxu0
    %v5100 = vadd.f32 0.0, %v5099
    %v5101 = vpop.f32.mrb[0].mxu0
    %5102 = vmatprep.mubr.bf16.mxu0 0
    %5103 = vmatmul.mubr.bf16.gmra.mrb[0].mxu0 %v5029
    %v5104 = vpop.f32.mrb[0].mxu0
    %v5105 = vadd.f32 0.0, %v5104
    %v5106 = vpop.f32.mrb[0].mxu0
    %v5107 = vpop.f32.mrb[0].mxu0
    %v5108 = vadd.f32 0.0, %v5107
    %v5109 = vpop.f32.mrb[0].mxu0
    %5110 = vmatprep.mubr.bf16.mxu0 0
    %5111 = vmatmul.mubr.bf16.gmra.mrb[0].mxu0 %v5032
    %v5112 = vpop.f32.mrb[0].mxu0
    %v5113 = vadd.f32 0.0, %v5112
    %v5114 = vpop.f32.mrb[0].mxu0
    %v5115 = vpop.f32.mrb[0].mxu0
    %v5116 = vadd.f32 0.0, %v5115
    %v5117 = vpop.f32.mrb[0].mxu0
    %5118 = vmatprep.mubr.bf16.mxu0 0
    %5119 = vmatmul.mubr.bf16.gmra.mrb[0].mxu0 %v5035
    %v5120 = vpop.f32.mrb[0].mxu0
    %v5121 = vadd.f32 0.0, %v5120
    %v5122 = vpop.f32.mrb[0].mxu0
    %v5123 = vpop.f32.mrb[0].mxu0
    %v5124 = vadd.f32 0.0, %v5123
    %v5125 = vpop.f32.mrb[0].mxu0
    %5126 = vmatprep.mubr.bf16.mxu0 0
    %5127 = vmatmul.mubr.bf16.gmra.mrb[0].mxu0 %v5038
    %v5128 = vpop.f32.mrb[0].mxu0
    %v5129 = vadd.f32 0.0, %v5128
    %v5130 = vpop.f32.mrb[0].mxu0
    %v5131 = vpop.f32.mrb[0].mxu0
    %v5132 = vadd.f32 0.0, %v5131
    %v5133 = vpop.f32.mrb[0].mxu0
    %5134 = vmatprep.mubr.bf16.mxu0 0
    %5135 = vmatmul.mubr.bf16.gmra.mrb[0].mxu0 %v5041
    %v5136 = vpop.f32.mrb[0].mxu0
    %v5137 = vadd.f32 0.0, %v5136
    %v5138 = vpop.f32.mrb[0].mxu0
    %v5139 = vpop.f32.mrb[0].mxu0
    %v5140 = vadd.f32 0.0, %v5139
    %v5141 = vpop.f32.mrb[0].mxu0
    %5142 = vdwg.mxu0
    %v5143 = vadd.f32 %v4969, %v5081
    %v5144 = vadd.f32 %v4970, %v5084
    %v5145 = vadd.f32 %v4971, %v5089
    %v5146 = vadd.f32 %v4972, %v5092
    %v5147 = vadd.f32 %v4973, %v5097
    %v5148 = vadd.f32 %v4974, %v5100
    %v5149 = vadd.f32 %v4975, %v5105
    %v5150 = vadd.f32 %v4976, %v5108
    %v5151 = vadd.f32 %v4977, %v5113
    %v5152 = vadd.f32 %v4978, %v5116
    %v5153 = vadd.f32 %v4979, %v5121
    %v5154 = vadd.f32 %v4980, %v5124
    %v5155 = vadd.f32 %v4981, %v5129
    %v5156 = vadd.f32 %v4982, %v5132
    %v5157 = vadd.f32 %v4983, %v5137
    %v5158 = vadd.f32 %v4984, %v5140
    %s5159 = scalar_lea.vmem [#allocation11], 2
    %v5160 = vld [vmem:[%s5159] sm:$0x1]
    %v5162 = vlaneseq
    %v5163 = vshrl.u32 %v5162, 7
    %v5164 = vsub.s32 0, %v5163
    %v5165 = vrot.slane %v5160, %v5164
    %v5167 = vadd.f32 %v5143, %v5165
    %v5168 = vadd.f32 %v5144, %v5165
    %v5169 = vadd.f32 %v5145, %v5165
    %v5170 = vadd.f32 %v5146, %v5165
    %v5171 = vadd.f32 %v5147, %v5165
    %v5172 = vadd.f32 %v5148, %v5165
    %v5173 = vadd.f32 %v5149, %v5165
    %v5174 = vadd.f32 %v5150, %v5165
    %v5175 = vadd.f32 %v5151, %v5165
    %v5176 = vadd.f32 %v5152, %v5165
    %v5177 = vadd.f32 %v5153, %v5165
    %v5178 = vadd.f32 %v5154, %v5165
    %v5179 = vadd.f32 %v5155, %v5165
    %v5180 = vadd.f32 %v5156, %v5165
    %v5181 = vadd.f32 %v5157, %v5165
    %v5182 = vadd.f32 %v5158, %v5165
    %v5183 = vmax.f32 %v5167, 0.0
    %v5184 = vmax.f32 %v5168, 0.0
    %v5185 = vmax.f32 %v5169, 0.0
    %v5186 = vmax.f32 %v5170, 0.0
    %v5187 = vmax.f32 %v5171, 0.0
    %v5188 = vmax.f32 %v5172, 0.0
    %v5189 = vmax.f32 %v5173, 0.0
    %v5190 = vmax.f32 %v5174, 0.0
    %v5191 = vmax.f32 %v5175, 0.0
    %v5192 = vmax.f32 %v5176, 0.0
    %v5193 = vmax.f32 %v5177, 0.0
    %v5194 = vmax.f32 %v5178, 0.0
    %v5195 = vmax.f32 %v5179, 0.0
    %v5196 = vmax.f32 %v5180, 0.0
    %v5197 = vmax.f32 %v5181, 0.0
    %v5198 = vmax.f32 %v5182, 0.0
    %v5199 = vadd.f32 %v5183, %v296
    %v5200 = vadd.f32 %v5184, %v299
    %v5201 = vadd.f32 %v5185, %v304
    %v5202 = vadd.f32 %v5186, %v307
    %v5203 = vadd.f32 %v5187, %v312
    %v5204 = vadd.f32 %v5188, %v315
    %v5205 = vadd.f32 %v5189, %v320
    %v5206 = vadd.f32 %v5190, %v323
    %v5207 = vadd.f32 %v5191, %v328
    %v5208 = vadd.f32 %v5192, %v331
    %v5209 = vadd.f32 %v5193, %v336
    %v5210 = vadd.f32 %v5194, %v339
    %v5211 = vadd.f32 %v5195, %v344
    %v5212 = vadd.f32 %v5196, %v347
    %v5213 = vadd.f32 %v5197, %v352
    %v5214 = vadd.f32 %v5198, %v355
    %v5215 = vpack.c.bf16 %v5200, %v5199
    %v5216 = vpack.c.bf16 %v5202, %v5201
    %v5217 = vpack.c.bf16 %v5204, %v5203
    %v5218 = vpack.c.bf16 %v5206, %v5205
    %v5219 = vpack.c.bf16 %v5208, %v5207
    %v5220 = vpack.c.bf16 %v5210, %v5209
    %v5221 = vpack.c.bf16 %v5212, %v5211
    %v5222 = vpack.c.bf16 %v5214, %v5213
    %s5223 = scalar_lea.vmem [#allocation12], 8
    %v5224 = vld [vmem:[%s5223] sm:$0xf]
    %v5226 = vsel %vm817, %v5215, 0
    %v5229 = vsel %vm817, %v5216, 0
    %v5232 = vsel %vm817, %v5217, 0
    %v5235 = vsel %vm817, %v5218, 0
    %v5238 = vsel %vm817, %v5219, 0
    %v5241 = vsel %vm817, %v5220, 0
    %v5244 = vsel %vm817, %v5221, 0
    %v5247 = vsel %vm817, %v5222, 0
    %v5250 = vsel %vm842, %v5224, 0
    %5252 = vmatprep.subr.bf16.mxu0 0
    %5253 = vmatpush1.bf16.msra.mxu0 %v5250
    %5254 = vmatprep.subr.bf16.mxu0 0
    %5255 = vmatpush1.bf16.msra.mxu0 0
    %5256 = vmatprep.subr.bf16.mxu0 0
    %5257 = vmatpush1.bf16.msra.mxu0 0
    %5258 = vmatprep.subr.bf16.mxu0 0
    %5259 = vmatpush1.bf16.msra.mxu0 0
    %5260 = vmatprep.subr.bf16.mxu0 0
    %5261 = vmatpush1.bf16.msra.mxu0 0
    %5262 = vmatprep.subr.bf16.mxu0 0
    %5263 = vmatpush1.bf16.msra.mxu0 0
    %5264 = vmatprep.subr.bf16.mxu0 0
    %5265 = vmatpush1.bf16.msra.mxu0 0
    %5266 = vmatprep.subr.bf16.mxu0 0
    %5267 = vmatpush1.bf16.msra.mxu0 0
    %5268 = vmatprep.subr.bf16.mxu0 0
    %5269 = vmatpush1.bf16.msra.mxu0 0
    %5270 = vmatprep.subr.bf16.mxu0 0
    %5271 = vmatpush1.bf16.msra.mxu0 0
    %5272 = vmatprep.subr.bf16.mxu0 0
    %5273 = vmatpush1.bf16.msra.mxu0 0
    %5274 = vmatprep.subr.bf16.mxu0 0
    %5275 = vmatpush1.bf16.msra.mxu0 0
    %5276 = vmatprep.subr.bf16.mxu0 0
    %5277 = vmatpush1.bf16.msra.mxu0 0
    %5278 = vmatprep.subr.bf16.mxu0 0
    %5279 = vmatpush1.bf16.msra.mxu0 0
    %5280 = vmatprep.subr.bf16.mxu0 0
    %5281 = vmatpush1.bf16.msra.mxu0 0
    %5282 = vmatprep.subr.bf16.mxu0 0
    %5283 = vmatpush1.bf16.msra.mxu0 0
    %5284 = vmatprep.mubr.bf16.mxu0 0
    %5285 = vmatmul.mubr.bf16.gmra.mrb[0].mxu0 %v5226
    %v5286 = vpop.f32.mrb[0].mxu0
    %v5287 = vadd.f32 0.0, %v5286
    %v5288 = vpop.f32.mrb[0].mxu0
    %v5289 = vpop.f32.mrb[0].mxu0
    %v5290 = vadd.f32 0.0, %v5289
    %v5291 = vpop.f32.mrb[0].mxu0
    %5292 = vmatprep.mubr.bf16.mxu0 0
    %5293 = vmatmul.mubr.bf16.gmra.mrb[0].mxu0 %v5229
    %v5294 = vpop.f32.mrb[0].mxu0
    %v5295 = vadd.f32 0.0, %v5294
    %v5296 = vpop.f32.mrb[0].mxu0
    %v5297 = vpop.f32.mrb[0].mxu0
    %v5298 = vadd.f32 0.0, %v5297
    %v5299 = vpop.f32.mrb[0].mxu0
    %5300 = vmatprep.mubr.bf16.mxu0 0
    %5301 = vmatmul.mubr.bf16.gmra.mrb[0].mxu0 %v5232
    %v5302 = vpop.f32.mrb[0].mxu0
    %v5303 = vadd.f32 0.0, %v5302
    %v5304 = vpop.f32.mrb[0].mxu0
    %v5305 = vpop.f32.mrb[0].mxu0
    %v5306 = vadd.f32 0.0, %v5305
    %v5307 = vpop.f32.mrb[0].mxu0
    %5308 = vmatprep.mubr.bf16.mxu0 0
    %5309 = vmatmul.mubr.bf16.gmra.mrb[0].mxu0 %v5235
    %v5310 = vpop.f32.mrb[0].mxu0
    %v5311 = vadd.f32 0.0, %v5310
    %v5312 = vpop.f32.mrb[0].mxu0
    %v5313 = vpop.f32.mrb[0].mxu0
    %v5314 = vadd.f32 0.0, %v5313
    %v5315 = vpop.f32.mrb[0].mxu0
    %5316 = vmatprep.mubr.bf16.mxu0 0
    %5317 = vmatmul.mubr.bf16.gmra.mrb[0].mxu0 %v5238
    %v5318 = vpop.f32.mrb[0].mxu0
    %v5319 = vadd.f32 0.0, %v5318
    %v5320 = vpop.f32.mrb[0].mxu0
    %v5321 = vpop.f32.mrb[0].mxu0
    %v5322 = vadd.f32 0.0, %v5321
    %v5323 = vpop.f32.mrb[0].mxu0
    %5324 = vmatprep.mubr.bf16.mxu0 0
    %5325 = vmatmul.mubr.bf16.gmra.mrb[0].mxu0 %v5241
    %v5326 = vpop.f32.mrb[0].mxu0
    %v5327 = vadd.f32 0.0, %v5326
    %v5328 = vpop.f32.mrb[0].mxu0
    %v5329 = vpop.f32.mrb[0].mxu0
    %v5330 = vadd.f32 0.0, %v5329
    %v5331 = vpop.f32.mrb[0].mxu0
    %5332 = vmatprep.mubr.bf16.mxu0 0
    %5333 = vmatmul.mubr.bf16.gmra.mrb[0].mxu0 %v5244
    %v5334 = vpop.f32.mrb[0].mxu0
    %v5335 = vadd.f32 0.0, %v5334
    %v5336 = vpop.f32.mrb[0].mxu0
    %v5337 = vpop.f32.mrb[0].mxu0
    %v5338 = vadd.f32 0.0, %v5337
    %v5339 = vpop.f32.mrb[0].mxu0
    %5340 = vmatprep.mubr.bf16.mxu0 0
    %5341 = vmatmul.mubr.bf16.gmra.mrb[0].mxu0 %v5247
    %v5342 = vpop.f32.mrb[0].mxu0
    %v5343 = vadd.f32 0.0, %v5342
    %v5344 = vpop.f32.mrb[0].mxu0
    %v5345 = vpop.f32.mrb[0].mxu0
    %v5346 = vadd.f32 0.0, %v5345
    %v5347 = vpop.f32.mrb[0].mxu0
    %5348 = vdwg.mxu0
    %v5349 = vadd.f32 %v3935, %v5287
    %v5350 = vadd.f32 %v3938, %v5290
    %v5351 = vadd.f32 %v3943, %v5295
    %v5352 = vadd.f32 %v3946, %v5298
    %v5353 = vadd.f32 %v3951, %v5303
    %v5354 = vadd.f32 %v3954, %v5306
    %v5355 = vadd.f32 %v3959, %v5311
    %v5356 = vadd.f32 %v3962, %v5314
    %v5357 = vadd.f32 %v3967, %v5319
    %v5358 = vadd.f32 %v3970, %v5322
    %v5359 = vadd.f32 %v3975, %v5327
    %v5360 = vadd.f32 %v3978, %v5330
    %v5361 = vadd.f32 %v3983, %v5335
    %v5362 = vadd.f32 %v3986, %v5338
    %v5363 = vadd.f32 %v3991, %v5343
    %v5364 = vadd.f32 %v3994, %v5346
    %v5365 = vsel %vm817, %v5349, 0.0
    %v5366 = vsel %vm817, %v5350, 0.0
    %v5367 = vadd.f32 %v5365, %v5366
    %v5368 = vsel %vm817, %v5351, 0.0
    %v5369 = vadd.f32 %v5367, %v5368
    %v5370 = vsel %vm817, %v5352, 0.0
    %v5371 = vadd.f32 %v5369, %v5370
    %v5372 = vrot.slane %v5371, 4
    %v5373 = vadd.f32 %v5371, %v5372
    %v5374 = vrot.slane %v5373, 2
    %v5375 = vadd.f32 %v5373, %v5374
    %v5376 = vrot.slane %v5375, 1
    %v5377 = vadd.f32 %v5375, %v5376
    %v5378 = vsel %vm817, %v5353, 0.0
    %v5379 = vsel %vm817, %v5354, 0.0
    %v5380 = vadd.f32 %v5378, %v5379
    %v5381 = vsel %vm817, %v5355, 0.0
    %v5382 = vadd.f32 %v5380, %v5381
    %v5383 = vsel %vm817, %v5356, 0.0
    %v5384 = vadd.f32 %v5382, %v5383
    %v5385 = vrot.slane %v5384, 4
    %v5386 = vadd.f32 %v5384, %v5385
    %v5387 = vrot.slane %v5386, 2
    %v5388 = vadd.f32 %v5386, %v5387
    %v5389 = vrot.slane %v5388, 1
    %v5390 = vadd.f32 %v5388, %v5389
    %v5391 = vsel %vm817, %v5357, 0.0
    %v5392 = vsel %vm817, %v5358, 0.0
    %v5393 = vadd.f32 %v5391, %v5392
    %v5394 = vsel %vm817, %v5359, 0.0
    %v5395 = vadd.f32 %v5393, %v5394
    %v5396 = vsel %vm817, %v5360, 0.0
    %v5397 = vadd.f32 %v5395, %v5396
    %v5398 = vrot.slane %v5397, 4
    %v5399 = vadd.f32 %v5397, %v5398
    %v5400 = vrot.slane %v5399, 2
    %v5401 = vadd.f32 %v5399, %v5400
    %v5402 = vrot.slane %v5401, 1
    %v5403 = vadd.f32 %v5401, %v5402
    %v5404 = vsel %vm817, %v5361, 0.0
    %v5405 = vsel %vm817, %v5362, 0.0
    %v5406 = vadd.f32 %v5404, %v5405
    %v5407 = vsel %vm817, %v5363, 0.0
    %v5408 = vadd.f32 %v5406, %v5407
    %v5409 = vsel %vm817, %v5364, 0.0
    %v5410 = vadd.f32 %v5408, %v5409
    %v5411 = vrot.slane %v5410, 4
    %v5412 = vadd.f32 %v5410, %v5411
    %v5413 = vrot.slane %v5412, 2
    %v5414 = vadd.f32 %v5412, %v5413
    %v5415 = vrot.slane %v5414, 1
    %v5416 = vadd.f32 %v5414, %v5415
    %v5417 = vpack.c.bf16 %v5377, %v5377
    %v5418 = vpack.c.bf16 %v5390, %v5390
    %v5419 = vpack.c.bf16 %v5403, %v5403
    %v5420 = vpack.c.bf16 %v5416, %v5416
    %v5421 = vld [vmem:[#allocation14] sm:$0xf]
    %v5422 = vld [vmem:[#allocation15] sm:$0x1]
    %v5424 = vlaneseq
    %v5425 = vshrl.u32 %v5424, 7
    %v5426 = vsub.s32 0, %v5425
    %v5427 = vrot.slane %v5422, %v5426
    %v5433 = vunpack.c.l.b16 %v5417
    %v5434 = vunpack.c.l.b16 %v5418
    %v5435 = vunpack.c.l.b16 %v5419
    %v5436 = vunpack.c.l.b16 %v5420
    %vm5437 = vcmask 1041409
    %v5438 = vsel %vm5437, %v5434, %v5433
    %vm5439 = vcmask 1042434
    %v5440 = vsel %vm5439, %v5435, %v5438
    %vm5441 = vcmask 1043459
    %v5442 = vsel %vm5441, %v5436, %v5440
    %v5443 = vpack.c.b16 %v5442, %v5442
    %v5445 = vsel %vm817, %v5443, 0
    %v5448 = vsel %vm842, %v5421, 0
    %5450 = vmatprep.subr.bf16.mxu0 0
    %5451 = vmatpush1.bf16.msra.mxu0 %v5448
    %5452 = vmatprep.subr.bf16.mxu0 0
    %5453 = vmatpush1.bf16.msra.mxu0 0
    %5454 = vmatprep.subr.bf16.mxu0 0
    %5455 = vmatpush1.bf16.msra.mxu0 0
    %5456 = vmatprep.subr.bf16.mxu0 0
    %5457 = vmatpush1.bf16.msra.mxu0 0
    %5458 = vmatprep.subr.bf16.mxu0 0
    %5459 = vmatpush1.bf16.msra.mxu0 0
    %5460 = vmatprep.subr.bf16.mxu0 0
    %5461 = vmatpush1.bf16.msra.mxu0 0
    %5462 = vmatprep.subr.bf16.mxu0 0
    %5463 = vmatpush1.bf16.msra.mxu0 0
    %5464 = vmatprep.subr.bf16.mxu0 0
    %5465 = vmatpush1.bf16.msra.mxu0 0
    %5466 = vmatprep.subr.bf16.mxu0 0
    %5467 = vmatpush1.bf16.msra.mxu0 0
    %5468 = vmatprep.subr.bf16.mxu0 0
    %5469 = vmatpush1.bf16.msra.mxu0 0
    %5470 = vmatprep.subr.bf16.mxu0 0
    %5471 = vmatpush1.bf16.msra.mxu0 0
    %5472 = vmatprep.subr.bf16.mxu0 0
    %5473 = vmatpush1.bf16.msra.mxu0 0
    %5474 = vmatprep.subr.bf16.mxu0 0
    %5475 = vmatpush1.bf16.msra.mxu0 0
    %5476 = vmatprep.subr.bf16.mxu0 0
    %5477 = vmatpush1.bf16.msra.mxu0 0
    %5478 = vmatprep.subr.bf16.mxu0 0
    %5479 = vmatpush1.bf16.msra.mxu0 0
    %5480 = vmatprep.subr.bf16.mxu0 0
    %5481 = vmatpush1.bf16.msra.mxu0 0
    %5482 = vmatprep.mubr.bf16.mxu0 0
    %5483 = vmatmul.mubr.bf16.gmra.mrb[0].mxu0 %v5445
    %v5484 = vpop.f32.mrb[0].mxu0
    %v5485 = vadd.f32 %v5427, %v5484
    %v5486 = vpop.f32.mrb[0].mxu0
    %v5487 = vpop.f32.mrb[0].mxu0
    %v5488 = vpop.f32.mrb[0].mxu0
    %5489 = vdwg.mxu0
    %v5490 = vmax.f32 %v5485, 0.0
    %v5491 = vpack.c.bf16 %v5490, %v5490
    %v5492 = vld [vmem:[#allocation17] sm:$0xf]
    %v5493 = vld [vmem:[#allocation17 + $0x4] sm:$0xf]
    %v5494 = vld [vmem:[#allocation18] sm:$0x1]
    %v5496 = vlaneseq
    %v5497 = vshrl.u32 %v5496, 7
    %v5498 = vsub.s32 0, %v5497
    %v5499 = vrot.slane %v5494, %v5498
    %v5503 = vunpack.c.l.b16 %v5492
    %v5504 = vunpack.c.l.b16 %v5493
    %v5505 = vpack.c.b16 %v5504, %v5503
    %v5508 = vsel %vm236, %v5491, 0
    %5510 = vmatprep.subr.bf16.mxu0 0
    %5511 = vmatpush1.bf16.msra.mxu0 %v5505
    %5512 = vmatprep.subr.bf16.mxu0 0
    %5513 = vmatpush1.bf16.msra.mxu0 0
    %5514 = vmatprep.subr.bf16.mxu0 0
    %5515 = vmatpush1.bf16.msra.mxu0 0
    %5516 = vmatprep.subr.bf16.mxu0 0
    %5517 = vmatpush1.bf16.msra.mxu0 0
    %5518 = vmatprep.subr.bf16.mxu0 0
    %5519 = vmatpush1.bf16.msra.mxu0 0
    %5520 = vmatprep.subr.bf16.mxu0 0
    %5521 = vmatpush1.bf16.msra.mxu0 0
    %5522 = vmatprep.subr.bf16.mxu0 0
    %5523 = vmatpush1.bf16.msra.mxu0 0
    %5524 = vmatprep.subr.bf16.mxu0 0
    %5525 = vmatpush1.bf16.msra.mxu0 0
    %5526 = vmatprep.subr.bf16.mxu0 0
    %5527 = vmatpush1.bf16.msra.mxu0 0
    %5528 = vmatprep.subr.bf16.mxu0 0
    %5529 = vmatpush1.bf16.msra.mxu0 0
    %5530 = vmatprep.subr.bf16.mxu0 0
    %5531 = vmatpush1.bf16.msra.mxu0 0
    %5532 = vmatprep.subr.bf16.mxu0 0
    %5533 = vmatpush1.bf16.msra.mxu0 0
    %5534 = vmatprep.subr.bf16.mxu0 0
    %5535 = vmatpush1.bf16.msra.mxu0 0
    %5536 = vmatprep.subr.bf16.mxu0 0
    %5537 = vmatpush1.bf16.msra.mxu0 0
    %5538 = vmatprep.subr.bf16.mxu0 0
    %5539 = vmatpush1.bf16.msra.mxu0 0
    %5540 = vmatprep.subr.bf16.mxu0 0
    %5541 = vmatpush1.bf16.msra.mxu0 0
    %5542 = vmatprep.mubr.bf16.mxu0 0
    %5543 = vmatmul.mubr.bf16.gmra.mrb[0].mxu0 %v5508
    %v5544 = vpop.f32.mrb[0].mxu0
    %v5545 = vadd.f32 %v5499, %v5544
    %v5546 = vpop.f32.mrb[0].mxu0
    %v5547 = vpop.f32.mrb[0].mxu0
    %v5548 = vpop.f32.mrb[0].mxu0
    %5549 = vdwg.mxu0
    %5550 = vst [vmem:[#allocation20] sm:$0xf] %v5545
    // Predicated region
    $region82: #{dilated_cnn_forward.1} parent=1 // pred_check
      _
    $region83: #{dilated_cnn_forward.1} parent=1 // pred_check_branch
      %5552 = sbr.rel (0) target = $region85
    $region84: #{dilated_cnn_forward.1} parent=1 // pred_region
      %s5554 = ssub.s32 64, 64
      %5555 = vsyncadd [#allocation5], %s5554
      %s5557 = sshll.u32 [#allocation20], 4
      %s5558 = int_to_ptr.vmem [resolvable:$true] %s5557
      %5560 = dma.vmem_to_hbm [thread:$0]  %s5558, 64, %s10, [#allocation5]
    $region85: #{dilated_cnn_forward.1} parent=1 // pred_fallthru
      _
    // Predicated region
    $region86: #{dilated_cnn_forward.1} parent=1 // pred_check
      _
    $region87: #{dilated_cnn_forward.1} parent=1 // pred_check_branch
      %5562 = sbr.rel (0) target = $region89
    $region88: #{dilated_cnn_forward.1} parent=1 // pred_region
      %5563 = dma.done [#allocation5], 64
    $region89: #{dilated_cnn_forward.1} parent=1 // pred_fallthru
      _
    %5564 = vsyncpa [#allocation4], 1
    %5565 = vsyncpa [#allocation7], 1
    %5566 = vsyncpa [#allocation10], 1
    %5567 = vsyncpa [#allocation13], 1
    %5568 = vsyncpa [#allocation16], 1
    %5569 = vsyncpa [#allocation19], 1
    %5570 = vsyncpa [#allocation5], 1

</llo_original>
